<compile_context>
chip_gen: v5e
topology: v5e:2x2
jax: 0.10.0
libtpu: 0.0.40
codegen_flags: <defaults>
</compile_context>

<pallas_src>
import functools

import jax
import jax.numpy as jnp
from jax import lax
from jax.experimental import pallas as pl
from jax.experimental.pallas import tpu as pltpu

LOGITS_LANES = 128  # lane-dense logits slab (labels padded up to this, sliced back)


# ---------------------------------------------------------------------------
# Fused ViT forward kernel: one (batch_tile, layer) grid step per invocation
# ---------------------------------------------------------------------------

def _vit_fused_kernel(
    # inputs
    patches_ref, base_ref, pw_ref,
    ln1g_ref, ln1b_ref, qkvw_ref, qkvb_ref, aow_ref, aob_ref,
    ln2g_ref, ln2b_ref, fc1w_ref, fc1b_ref, fc2w_ref, fc2b_ref,
    flng_ref, flnb_ref, clsw_ref, clsb_ref,
    # outputs
    logits_ref,
    # scratch
    x_scr,
    *, b_tile, heads, head_dim, seq_pad, seq_real, eps):
    layer = pl.program_id(1)
    n_layers = pl.num_programs(1)
    hidden = heads * head_dim
    m_rows = b_tile * seq_pad

    def layernorm(z, g, b):
        mu = jnp.mean(z, axis=-1, keepdims=True)
        zc = z - mu
        var = jnp.mean(zc * zc, axis=-1, keepdims=True)
        return zc * lax.rsqrt(var + eps) * g + b

    # --- layer 0: patch embedding + CLS/pos (base already folds cls, pos, bias)
    # TODO(synk): at production dims (hidden=768), hoist the patch-embed inputs
    # out of the per-layer pipeline (pl.ANY + manual DMA or a separate call) so
    # they are not held double-buffered in VMEM for every layer step.
    @pl.when(layer == 0)
    def _():
        emb = jnp.dot(patches_ref[...].astype(jnp.bfloat16), pw_ref[...],
                      preferred_element_type=jnp.float32)
        x_scr[...] = emb + base_ref[...]

    x = x_scr[...]                                            # (M, hidden) f32

    # --- attention block (pre-LN) --------------------------------------------
    h1 = layernorm(x, ln1g_ref[0], ln1b_ref[0]).astype(jnp.bfloat16)
    scale = 1.0 / (head_dim ** 0.5)
    key_ids = lax.broadcasted_iota(jnp.int32, (seq_pad, seq_pad), 1)
    key_mask = (key_ids < seq_real)[None]                     # (1, S, S)

    ctx_heads = []
    for hh in range(heads):                                   # static unroll
        # per-head Q/K/V matmuls; weights live on a leading axis -> lane-0 aligned
        q = jnp.dot(h1, qkvw_ref[hh],
                    preferred_element_type=jnp.float32) + qkvb_ref[hh]
        k = jnp.dot(h1, qkvw_ref[heads + hh],
                    preferred_element_type=jnp.float32) + qkvb_ref[heads + hh]
        v = jnp.dot(h1, qkvw_ref[2 * heads + hh],
                    preferred_element_type=jnp.float32) + qkvb_ref[2 * heads + hh]
        q3 = q.reshape(b_tile, seq_pad, head_dim).astype(jnp.bfloat16)
        k3 = k.reshape(b_tile, seq_pad, head_dim).astype(jnp.bfloat16)
        v3 = v.reshape(b_tile, seq_pad, head_dim).astype(jnp.bfloat16)
        # per-image attention, batched over the batch tile
        s = jnp.einsum('bqd,bkd->bqk', q3, k3,
                       preferred_element_type=jnp.float32) * scale
        s = jnp.where(key_mask, s, -1e30)                     # mask padded keys
        s = s - jnp.max(s, axis=-1, keepdims=True)
        p = jnp.exp(s)
        p = p * pl.reciprocal(jnp.sum(p, axis=-1, keepdims=True), approx=True)
        ctx = jnp.einsum('bqk,bkd->bqd', p.astype(jnp.bfloat16), v3,
                         preferred_element_type=jnp.float32)  # (B_TILE, S, Dh)
        ctx_heads.append(ctx.reshape(m_rows, head_dim))

    # assemble all heads, then a single (M, hidden) @ (hidden, hidden) projection
    ctx_full = jnp.concatenate(ctx_heads, axis=-1)            # (M, hidden)
    attn_out = jnp.dot(ctx_full.astype(jnp.bfloat16), aow_ref[0],
                       preferred_element_type=jnp.float32) + aob_ref[0]
    x = x + attn_out                                          # residual 1

    # --- MLP block (pre-LN) ----------------------------------------------------
    h2 = layernorm(x, ln2g_ref[0], ln2b_ref[0]).astype(jnp.bfloat16)
    inter = jnp.dot(h2, fc1w_ref[0],
                    preferred_element_type=jnp.float32) + fc1b_ref[0]
    inter = jax.nn.gelu(inter, approximate=True)              # tanh GELU (EUP path)
    mlp_out = jnp.dot(inter.astype(jnp.bfloat16), fc2w_ref[0],
                      preferred_element_type=jnp.float32) + fc2b_ref[0]
    x = x + mlp_out                                           # residual 2

    x_scr[...] = x                                            # carry to next layer

    # --- final layernorm + classifier on the CLS rows only (last layer) -------
    @pl.when(layer == n_layers - 1)
    def _():
        # gather CLS rows (row 0 of each image; offsets are sublane-aligned)
        cls = jnp.concatenate(
            [x[i * seq_pad:i * seq_pad + 1, :] for i in range(b_tile)], axis=0)
        cls = layernorm(cls, flng_ref[...], flnb_ref[...])    # (B_TILE, hidden)
        logits = jnp.dot(cls.astype(jnp.bfloat16), clsw_ref[...],
                         preferred_element_type=jnp.float32) + clsb_ref[...]
        logits_ref[0] = logits.astype(logits_ref.dtype)       # (B_TILE, 128) lane-dense


# ---------------------------------------------------------------------------
# Parameter construction (deterministic, synthetic; per-layer weights stacked)
# ---------------------------------------------------------------------------

def init_params(key, *, hidden, layers, heads, channels, patch, num_patches, labels):
    inter = 4 * hidden
    head_dim = hidden // heads
    patch_dim = channels * patch * patch

    def normal(k, shape, scale=0.02):
        return (scale * jax.random.normal(k, shape)).astype(jnp.float32)

    ks = jax.random.split(key, 8)
    return {
        # matmul weights stored in bf16 (MXU-native); biases & LN params in f32.
        "patch_w": normal(ks[0], (patch_dim, hidden)).astype(jnp.bfloat16),
        "patch_b": jnp.zeros((1, hidden), jnp.float32),
        "cls_token": normal(ks[1], (1, 1, hidden)),
        "pos_embed": normal(ks[2], (1, num_patches + 1, hidden)),
        "ln1_g": jnp.ones((layers, 1, hidden), jnp.float32),
        "ln1_b": jnp.zeros((layers, 1, hidden), jnp.float32),
        # per-head Q|K|V weights stacked on a leading axis:
        #   layer-major blocks of [q_h0..q_hH-1, k_h0.., v_h0..], each (hidden, head_dim)
        "qkv_w": normal(ks[3], (layers * 3 * heads, hidden, head_dim)).astype(jnp.bfloat16),
        "qkv_b": jnp.zeros((layers * 3 * heads, 1, head_dim), jnp.float32),
        "ao_w": normal(ks[4], (layers, hidden, hidden)).astype(jnp.bfloat16),
        "ao_b": jnp.zeros((layers, 1, hidden), jnp.float32),
        "ln2_g": jnp.ones((layers, 1, hidden), jnp.float32),
        "ln2_b": jnp.zeros((layers, 1, hidden), jnp.float32),
        "fc1_w": normal(ks[5], (layers, hidden, inter)).astype(jnp.bfloat16),
        "fc1_b": jnp.zeros((layers, 1, inter), jnp.float32),
        "fc2_w": normal(ks[6], (layers, inter, hidden)).astype(jnp.bfloat16),
        "fc2_b": jnp.zeros((layers, 1, hidden), jnp.float32),
        "final_ln_g": jnp.ones((1, hidden), jnp.float32),
        "final_ln_b": jnp.zeros((1, hidden), jnp.float32),
        "cls_w": normal(ks[7], (hidden, labels)).astype(jnp.bfloat16),
        "cls_b": jnp.zeros((1, labels), jnp.float32),
    }


# ---------------------------------------------------------------------------
# Forward pass (ViTForImageClassification semantics, eval mode / dropout = 0)
# ---------------------------------------------------------------------------

def vit_forward(params, pixel_values, *, patch, heads, seq_pad, b_tile):
    B, C, H, W = pixel_values.shape
    layers = params["ln1_g"].shape[0]
    hidden = params["ln1_g"].shape[-1]
    inter = params["fc1_w"].shape[-1]
    labels = params["cls_b"].shape[-1]
    head_dim = hidden // heads
    gh, gw = H // patch, W // patch
    num_patches = gh * gw
    seq = num_patches + 1
    patch_dim = C * patch * patch
    m_rows = b_tile * seq_pad

    num_tiles = -(-B // b_tile)          # pad batch to a multiple of the tile
    b_pad = num_tiles * b_tile

    # --- patch extraction (layout glue only; conv-as-matmul runs in-kernel).
    # Patch vectors flattened in (c, ph, pw) order to match PyTorch conv weights.
    x = pixel_values.reshape(B, C, gh, patch, gw, patch)
    x = jnp.transpose(x, (0, 2, 4, 1, 3, 5)).reshape(B, num_patches, patch_dim)
    # Row 0 of each image reserved for CLS; tail rows / tail images are zero
    # padding (masked as attention keys in-kernel; padded images sliced away).
    x = jnp.pad(x, ((0, b_pad - B), (1, seq_pad - seq), (0, 0)))
    patches_flat = x.reshape(b_pad * seq_pad, patch_dim)

    # --- additive base: row 0 = cls+pos[0]; patch rows = pos + patch bias; pad = 0.
    cls_row = params["cls_token"][0] + params["pos_embed"][0, :1]     # (1, hidden)
    patch_rows = params["pos_embed"][0, 1:] + params["patch_b"]       # (P, hidden)
    base = jnp.concatenate([cls_row, patch_rows], axis=0)
    base = jnp.pad(base, ((0, seq_pad - seq), (0, 0)))                # (seq_pad, hidden)
    base_tiled = jnp.tile(base, (b_tile, 1))                          # (m_rows, hidden)

    # --- lane-dense classifier head (labels padded to 128 lanes).
    cls_w_pad = jnp.pad(params["cls_w"], ((0, 0), (0, LOGITS_LANES - labels)))
    cls_b_pad = jnp.pad(params["cls_b"], ((0, 0), (0, LOGITS_LANES - labels)))

    kernel = functools.partial(
        _vit_fused_kernel, b_tile=b_tile, heads=heads, head_dim=head_dim,
        seq_pad=seq_pad, seq_real=seq, eps=1e-12)

    per_layer_3d = lambda b, l: (l, 0, 0)
    const_2d = lambda b, l: (0, 0)

    in_specs = [
        pl.BlockSpec((m_rows, patch_dim), lambda b, l: (b, 0)),          # patches
        pl.BlockSpec((m_rows, hidden), const_2d),                        # base (tiled)
        pl.BlockSpec((patch_dim, hidden), const_2d),                     # patch_w
        pl.BlockSpec((1, 1, hidden), per_layer_3d),                      # ln1_g
        pl.BlockSpec((1, 1, hidden), per_layer_3d),                      # ln1_b
        pl.BlockSpec((3 * heads, hidden, head_dim), per_layer_3d),       # qkv_w
        pl.BlockSpec((3 * heads, 1, head_dim), per_layer_3d),            # qkv_b
        pl.BlockSpec((1, hidden, hidden), per_layer_3d),                 # ao_w
        pl.BlockSpec((1, 1, hidden), per_layer_3d),                      # ao_b
        pl.BlockSpec((1, 1, hidden), per_layer_3d),                      # ln2_g
        pl.BlockSpec((1, 1, hidden), per_layer_3d),                      # ln2_b
        pl.BlockSpec((1, hidden, inter), per_layer_3d),                  # fc1_w
        pl.BlockSpec((1, 1, inter), per_layer_3d),                       # fc1_b
        pl.BlockSpec((1, inter, hidden), per_layer_3d),                  # fc2_w
        pl.BlockSpec((1, 1, hidden), per_layer_3d),                      # fc2_b
        pl.BlockSpec((1, hidden), const_2d),                             # final_ln_g
        pl.BlockSpec((1, hidden), const_2d),                             # final_ln_b
        pl.BlockSpec((hidden, LOGITS_LANES), const_2d),                  # cls_w (padded)
        pl.BlockSpec((1, LOGITS_LANES), const_2d),                       # cls_b (padded)
    ]
    out_spec = pl.BlockSpec((1, b_tile, LOGITS_LANES), lambda b, l: (b, 0, 0))

    logits_pad = pl.pallas_call(
        kernel,
        out_shape=jax.ShapeDtypeStruct((num_tiles, b_tile, LOGITS_LANES), jnp.float32),
        grid_spec=pltpu.PrefetchScalarGridSpec(
            num_scalar_prefetch=0,
            grid=(num_tiles, layers),
            in_specs=in_specs,
            out_specs=out_spec,
            scratch_shapes=[pltpu.VMEM((m_rows, hidden), jnp.float32)],
        ),
        compiler_params=pltpu.CompilerParams(
            dimension_semantics=("parallel", "arbitrary"),
            vmem_limit_bytes=32 * 1024 * 1024),
    )(patches_flat, base_tiled, params["patch_w"],
      params["ln1_g"], params["ln1_b"], params["qkv_w"], params["qkv_b"],
      params["ao_w"], params["ao_b"], params["ln2_g"], params["ln2_b"],
      params["fc1_w"], params["fc1_b"], params["fc2_w"], params["fc2_b"],
      params["final_ln_g"], params["final_ln_b"], cls_w_pad, cls_b_pad)

    return logits_pad.reshape(b_pad, LOGITS_LANES)[:B, :labels]


# ---------------------------------------------------------------------------
# Main
# ---------------------------------------------------------------------------

if __name__ == "__main__":
    B, C, IMG, PATCH = 8, 3, 16, 4
    HIDDEN, LAYERS, HEADS, LABELS = 32, 2, 2, 8
    NUM_PATCHES = (IMG // PATCH) ** 2        # 16
    SEQ = NUM_PATCHES + 1                    # 17 (CLS + patches)
    SEQ_PAD = ((SEQ + 15) // 16) * 16        # 17 -> 32 (bf16 sublane-packed)
    B_TILE = 4                               # M = B_TILE*SEQ_PAD = 128 rows / MXU feed
                                             # (2 batch tiles -> both TCs on v7x)

    key = jax.random.PRNGKey(0)
    k_img, k_par = jax.random.split(key)
    pixel_values = jax.random.normal(k_img, (B, C, IMG, IMG), dtype=jnp.float32)

    params = init_params(k_par, hidden=HIDDEN, layers=LAYERS, heads=HEADS,
                         channels=C, patch=PATCH, num_patches=NUM_PATCHES,
                         labels=LABELS)

    fwd = jax.jit(functools.partial(vit_forward, patch=PATCH, heads=HEADS,
                                    seq_pad=SEQ_PAD, b_tile=B_TILE))
    logits = fwd(params, pixel_values)
    jax.block_until_ready(logits)

    assert logits.shape == (B, LABELS), logits.shape
    assert bool(jnp.all(jnp.isfinite(logits)))
    print("KERNEL_OK")
</pallas_src>

<mosaic_0001>
module attributes {stable_mosaic.version = 11 : i64} {
  func.func @_vit_fused_kernel(%arg0: i32, %arg1: i32, %arg2: memref<128x48xf32, #tpu.memory_space<vmem>>, %arg3: memref<128x32xf32, #tpu.memory_space<vmem>>, %arg4: memref<48x32xbf16, #tpu.memory_space<vmem>>, %arg5: memref<1x1x32xf32, #tpu.memory_space<vmem>>, %arg6: memref<1x1x32xf32, #tpu.memory_space<vmem>>, %arg7: memref<6x32x16xbf16, #tpu.memory_space<vmem>>, %arg8: memref<6x1x16xf32, #tpu.memory_space<vmem>>, %arg9: memref<1x32x32xbf16, #tpu.memory_space<vmem>>, %arg10: memref<1x1x32xf32, #tpu.memory_space<vmem>>, %arg11: memref<1x1x32xf32, #tpu.memory_space<vmem>>, %arg12: memref<1x1x32xf32, #tpu.memory_space<vmem>>, %arg13: memref<1x32x128xbf16, #tpu.memory_space<vmem>>, %arg14: memref<1x1x128xf32, #tpu.memory_space<vmem>>, %arg15: memref<1x128x32xbf16, #tpu.memory_space<vmem>>, %arg16: memref<1x1x32xf32, #tpu.memory_space<vmem>>, %arg17: memref<1x32xf32, #tpu.memory_space<vmem>>, %arg18: memref<1x32xf32, #tpu.memory_space<vmem>>, %arg19: memref<32x128xbf16, #tpu.memory_space<vmem>>, %arg20: memref<1x128xf32, #tpu.memory_space<vmem>>, %arg21: memref<1x4x128xf32, #tpu.memory_space<vmem>>, %arg22: memref<128x32xf32, #tpu.memory_space<vmem>>) attributes {dimension_semantics = [#tpu.dimension_semantics<parallel>, #tpu.dimension_semantics<arbitrary>], iteration_bounds = array<i64: 2, 2>, scalar_prefetch = 0 : i64, scratch_operands = 1 : i64, tpu.core_type = #tpu.core_type<tc>, window_params = [{transform_indices = @transform_0, window_bounds = array<i64: 128, 48>}, {pipeline_mode = #tpu.pipeline_mode<synchronous>, transform_indices = @transform_1, window_bounds = array<i64: 128, 32>}, {pipeline_mode = #tpu.pipeline_mode<synchronous>, transform_indices = @transform_2, window_bounds = array<i64: 48, 32>}, {transform_indices = @transform_3, window_bounds = array<i64: 1, 1, 32>}, {transform_indices = @transform_4, window_bounds = array<i64: 1, 1, 32>}, {transform_indices = @transform_5, window_bounds = array<i64: 6, 32, 16>}, {transform_indices = @transform_6, window_bounds = array<i64: 6, 1, 16>}, {transform_indices = @transform_7, window_bounds = array<i64: 1, 32, 32>}, {transform_indices = @transform_8, window_bounds = array<i64: 1, 1, 32>}, {transform_indices = @transform_9, window_bounds = array<i64: 1, 1, 32>}, {transform_indices = @transform_10, window_bounds = array<i64: 1, 1, 32>}, {transform_indices = @transform_11, window_bounds = array<i64: 1, 32, 128>}, {transform_indices = @transform_12, window_bounds = array<i64: 1, 1, 128>}, {transform_indices = @transform_13, window_bounds = array<i64: 1, 128, 32>}, {transform_indices = @transform_14, window_bounds = array<i64: 1, 1, 32>}, {pipeline_mode = #tpu.pipeline_mode<synchronous>, transform_indices = @transform_15, window_bounds = array<i64: 1, 32>}, {pipeline_mode = #tpu.pipeline_mode<synchronous>, transform_indices = @transform_16, window_bounds = array<i64: 1, 32>}, {pipeline_mode = #tpu.pipeline_mode<synchronous>, transform_indices = @transform_17, window_bounds = array<i64: 32, 128>}, {pipeline_mode = #tpu.pipeline_mode<synchronous>, transform_indices = @transform_18, window_bounds = array<i64: 1, 128>}, {transform_indices = @transform_19, window_bounds = array<i64: 1, 4, 128>}]} {
    %c0_i32 = arith.constant 0 : i32
    %0 = arith.cmpi eq, %arg1, %c0_i32 : i32
    %1 = arith.extui %0 : i1 to i32
    %c0_i32_0 = arith.constant 0 : i32
    %2 = arith.cmpi ne, %1, %c0_i32_0 : i32
    scf.if %2 {
      %c0_100 = arith.constant 0 : index
      %c0_101 = arith.constant 0 : index
      %195 = vector.load %arg2[%c0_100, %c0_101] : memref<128x48xf32, #tpu.memory_space<vmem>>, vector<128x48xf32>
      %196 = arith.truncf %195 : vector<128x48xf32> to vector<128x48xbf16>
      %c0_102 = arith.constant 0 : index
      %c0_103 = arith.constant 0 : index
      %197 = vector.load %arg4[%c0_102, %c0_103] : memref<48x32xbf16, #tpu.memory_space<vmem>>, vector<48x32xbf16>
      %cst_104 = arith.constant dense<0.000000e+00> : vector<128x32xf32>
      %198 = tpu.matmul %196, %197, %cst_104 {dimension_numbers = #tpu.dot_dimension_numbers<[1], [0], [0], [1], [0, 0, 1, 1], [], []>} : vector<128x48xbf16>, vector<48x32xbf16>, vector<128x32xf32> -> vector<128x32xf32>
      %c0_105 = arith.constant 0 : index
      %c0_106 = arith.constant 0 : index
      %199 = vector.load %arg3[%c0_105, %c0_106] : memref<128x32xf32, #tpu.memory_space<vmem>>, vector<128x32xf32>
      %200 = arith.addf %198, %199 : vector<128x32xf32>
      %c0_107 = arith.constant 0 : index
      %c0_108 = arith.constant 0 : index
      %201 = vector.load %arg22[%c0_107, %c0_108] : memref<128x32xf32, #tpu.memory_space<vmem>>, vector<128x32xf32>
      tpu.vector_store %arg22[%c0_107, %c0_108], %200 {strides = array<i32>} : memref<128x32xf32, #tpu.memory_space<vmem>>, vector<128x32xf32>,
    } else {
    }
    %c0 = arith.constant 0 : index
    %c0_1 = arith.constant 0 : index
    %3 = vector.load %arg22[%c0, %c0_1] : memref<128x32xf32, #tpu.memory_space<vmem>>, vector<128x32xf32>
    %c0_2 = arith.constant 0 : index
    %c0_3 = arith.constant 0 : index
    %c0_4 = arith.constant 0 : index
    %4 = vector.load %arg5[%c0_2, %c0_3, %c0_4] : memref<1x1x32xf32, #tpu.memory_space<vmem>>, vector<1x1x32xf32>
    %5 = vector.shape_cast %4 : vector<1x1x32xf32> to vector<1x32xf32>
    %c0_5 = arith.constant 0 : index
    %c0_6 = arith.constant 0 : index
    %c0_7 = arith.constant 0 : index
    %6 = vector.load %arg6[%c0_5, %c0_6, %c0_7] : memref<1x1x32xf32, #tpu.memory_space<vmem>>, vector<1x1x32xf32>
    %7 = vector.shape_cast %6 : vector<1x1x32xf32> to vector<1x32xf32>
    %cst = arith.constant dense<0.000000e+00> : vector<128xf32>
    %8 = vector.multi_reduction <add>, %3, %cst [1] : vector<128x32xf32> to vector<128xf32>
    %9 = vector.shape_cast %8 : vector<128xf32> to vector<128x1xf32>
    %cst_8 = arith.constant 3.200000e+01 : f32
    %10 = vector.broadcast %cst_8 : f32 to vector<128x1xf32>
    %11 = arith.divf %9, %10 : vector<128x1xf32>
    %12 = vector.broadcast %11 : vector<128x1xf32> to vector<128x32xf32>
    %13 = arith.subf %3, %12 : vector<128x32xf32>
    %14 = arith.mulf %13, %13 : vector<128x32xf32>
    %cst_9 = arith.constant dense<0.000000e+00> : vector<128xf32>
    %15 = vector.multi_reduction <add>, %14, %cst_9 [1] : vector<128x32xf32> to vector<128xf32>
    %16 = vector.shape_cast %15 : vector<128xf32> to vector<128x1xf32>
    %cst_10 = arith.constant 3.200000e+01 : f32
    %17 = vector.broadcast %cst_10 : f32 to vector<128x1xf32>
    %18 = arith.divf %16, %17 : vector<128x1xf32>
    %cst_11 = arith.constant 9.99999996E-13 : f32
    %19 = vector.broadcast %cst_11 : f32 to vector<128x1xf32>
    %20 = arith.addf %18, %19 : vector<128x1xf32>
    %21 = math.rsqrt %20 : vector<128x1xf32>
    %22 = vector.broadcast %21 : vector<128x1xf32> to vector<128x32xf32>
    %23 = arith.mulf %13, %22 : vector<128x32xf32>
    %24 = vector.broadcast %5 : vector<1x32xf32> to vector<128x32xf32>
    %25 = arith.mulf %23, %24 : vector<128x32xf32>
    %26 = vector.broadcast %7 : vector<1x32xf32> to vector<128x32xf32>
    %27 = arith.addf %25, %26 : vector<128x32xf32>
    %28 = arith.truncf %27 : vector<128x32xf32> to vector<128x32xbf16>
    %29 = tpu.iota {dimensions = array<i32: 1>} : vector<32x32xi32>
    %c17_i32 = arith.constant 17 : i32
    %30 = vector.broadcast %c17_i32 : i32 to vector<32x32xi32>
    %31 = arith.cmpi slt, %29, %30 : vector<32x32xi32>
    %32 = vector.shape_cast %31 : vector<32x32xi1> to vector<1x32x32xi1>
    %c0_12 = arith.constant 0 : index
    %c0_13 = arith.constant 0 : index
    %c0_14 = arith.constant 0 : index
    %33 = vector.load %arg7[%c0_12, %c0_13, %c0_14] : memref<6x32x16xbf16, #tpu.memory_space<vmem>>, vector<1x32x16xbf16>
    %34 = vector.shape_cast %33 : vector<1x32x16xbf16> to vector<32x16xbf16>
    %cst_15 = arith.constant dense<0.000000e+00> : vector<128x16xf32>
    %35 = tpu.matmul %28, %34, %cst_15 {dimension_numbers = #tpu.dot_dimension_numbers<[1], [0], [0], [1], [0, 0, 1, 1], [], []>} : vector<128x32xbf16>, vector<32x16xbf16>, vector<128x16xf32> -> vector<128x16xf32>
    %c0_16 = arith.constant 0 : index
    %c0_17 = arith.constant 0 : index
    %c0_18 = arith.constant 0 : index
    %36 = vector.load %arg8[%c0_16, %c0_17, %c0_18] : memref<6x1x16xf32, #tpu.memory_space<vmem>>, vector<1x1x16xf32>
    %37 = vector.shape_cast %36 : vector<1x1x16xf32> to vector<1x16xf32>
    %38 = vector.broadcast %37 : vector<1x16xf32> to vector<128x16xf32>
    %39 = arith.addf %35, %38 : vector<128x16xf32>
    %c2 = arith.constant 2 : index
    %c0_19 = arith.constant 0 : index
    %c0_20 = arith.constant 0 : index
    %40 = vector.load %arg7[%c2, %c0_19, %c0_20] : memref<6x32x16xbf16, #tpu.memory_space<vmem>>, vector<1x32x16xbf16>
    %41 = vector.shape_cast %40 : vector<1x32x16xbf16> to vector<32x16xbf16>
    %cst_21 = arith.constant dense<0.000000e+00> : vector<128x16xf32>
    %42 = tpu.matmul %28, %41, %cst_21 {dimension_numbers = #tpu.dot_dimension_numbers<[1], [0], [0], [1], [0, 0, 1, 1], [], []>} : vector<128x32xbf16>, vector<32x16xbf16>, vector<128x16xf32> -> vector<128x16xf32>
    %c2_22 = arith.constant 2 : index
    %c0_23 = arith.constant 0 : index
    %c0_24 = arith.constant 0 : index
    %43 = vector.load %arg8[%c2_22, %c0_23, %c0_24] : memref<6x1x16xf32, #tpu.memory_space<vmem>>, vector<1x1x16xf32>
    %44 = vector.shape_cast %43 : vector<1x1x16xf32> to vector<1x16xf32>
    %45 = vector.broadcast %44 : vector<1x16xf32> to vector<128x16xf32>
    %46 = arith.addf %42, %45 : vector<128x16xf32>
    %c4 = arith.constant 4 : index
    %c0_25 = arith.constant 0 : index
    %c0_26 = arith.constant 0 : index
    %47 = vector.load %arg7[%c4, %c0_25, %c0_26] : memref<6x32x16xbf16, #tpu.memory_space<vmem>>, vector<1x32x16xbf16>
    %48 = vector.shape_cast %47 : vector<1x32x16xbf16> to vector<32x16xbf16>
    %cst_27 = arith.constant dense<0.000000e+00> : vector<128x16xf32>
    %49 = tpu.matmul %28, %48, %cst_27 {dimension_numbers = #tpu.dot_dimension_numbers<[1], [0], [0], [1], [0, 0, 1, 1], [], []>} : vector<128x32xbf16>, vector<32x16xbf16>, vector<128x16xf32> -> vector<128x16xf32>
    %c4_28 = arith.constant 4 : index
    %c0_29 = arith.constant 0 : index
    %c0_30 = arith.constant 0 : index
    %50 = vector.load %arg8[%c4_28, %c0_29, %c0_30] : memref<6x1x16xf32, #tpu.memory_space<vmem>>, vector<1x1x16xf32>
    %51 = vector.shape_cast %50 : vector<1x1x16xf32> to vector<1x16xf32>
    %52 = vector.broadcast %51 : vector<1x16xf32> to vector<128x16xf32>
    %53 = arith.addf %49, %52 : vector<128x16xf32>
    %54 = vector.shape_cast %39 : vector<128x16xf32> to vector<4x32x16xf32>
    %55 = arith.truncf %54 : vector<4x32x16xf32> to vector<4x32x16xbf16>
    %56 = vector.shape_cast %46 : vector<128x16xf32> to vector<4x32x16xf32>
    %57 = arith.truncf %56 : vector<4x32x16xf32> to vector<4x32x16xbf16>
    %58 = vector.shape_cast %53 : vector<128x16xf32> to vector<4x32x16xf32>
    %59 = arith.truncf %58 : vector<4x32x16xf32> to vector<4x32x16xbf16>
    "tpu.trace_start"() <{level = 10 : i32, message = "bqd,bkd->bqk"}> : () -> ()
    %cst_31 = arith.constant dense<0.000000e+00> : vector<4x32x32xf32>
    %60 = tpu.matmul %55, %57, %cst_31 {dimension_numbers = #tpu.dot_dimension_numbers<[2], [2], [1], [1], [0, 0, 0, 1, 1, 1], [0], [0]>} : vector<4x32x16xbf16>, vector<4x32x16xbf16>, vector<4x32x32xf32> -> vector<4x32x32xf32>
    "tpu.trace_stop"() : () -> ()
    %cst_32 = arith.constant 2.500000e-01 : f32
    %61 = vector.broadcast %cst_32 : f32 to vector<4x32x32xf32>
    %62 = arith.mulf %60, %61 : vector<4x32x32xf32>
    %cst_33 = arith.constant -1.000000e+30 : f32
    %63 = vector.shape_cast %32 : vector<1x32x32xi1> to vector<1x32x32xi1>
    %64 = vector.broadcast %63 : vector<1x32x32xi1> to vector<4x32x32xi1>
    %65 = vector.broadcast %cst_33 : f32 to vector<4x32x32xf32>
    %66 = arith.select %64, %62, %65 : vector<4x32x32xi1>, vector<4x32x32xf32>
    %cst_34 = arith.constant dense<0xFF800000> : vector<4x32xf32>
    %67 = vector.multi_reduction <maximumf>, %66, %cst_34 [2] : vector<4x32x32xf32> to vector<4x32xf32>
    %68 = vector.shape_cast %67 : vector<4x32xf32> to vector<4x32x1xf32>
    %69 = vector.broadcast %68 : vector<4x32x1xf32> to vector<4x32x32xf32>
    %70 = arith.subf %66, %69 : vector<4x32x32xf32>
    %71 = math.exp %70 : vector<4x32x32xf32>
    %cst_35 = arith.constant dense<0.000000e+00> : vector<4x32xf32>
    %72 = vector.multi_reduction <add>, %71, %cst_35 [2] : vector<4x32x32xf32> to vector<4x32xf32>
    %73 = vector.shape_cast %72 : vector<4x32xf32> to vector<4x32x1xf32>
    %74 = tpu.reciprocal %73 {approx = true} : vector<4x32x1xf32> -> vector<4x32x1xf32>
    %75 = vector.broadcast %74 : vector<4x32x1xf32> to vector<4x32x32xf32>
    %76 = arith.mulf %71, %75 : vector<4x32x32xf32>
    %77 = arith.truncf %76 : vector<4x32x32xf32> to vector<4x32x32xbf16>
    "tpu.trace_start"() <{level = 10 : i32, message = "bqk,bkd->bqd"}> : () -> ()
    %cst_36 = arith.constant dense<0.000000e+00> : vector<4x32x16xf32>
    %78 = tpu.matmul %77, %59, %cst_36 {dimension_numbers = #tpu.dot_dimension_numbers<[2], [1], [1], [2], [0, 0, 0, 1, 1, 2], [0], [0]>} : vector<4x32x32xbf16>, vector<4x32x16xbf16>, vector<4x32x16xf32> -> vector<4x32x16xf32>
    "tpu.trace_stop"() : () -> ()
    %79 = vector.shape_cast %78 : vector<4x32x16xf32> to vector<128x16xf32>
    %c1 = arith.constant 1 : index
    %c0_37 = arith.constant 0 : index
    %c0_38 = arith.constant 0 : index
    %80 = vector.load %arg7[%c1, %c0_37, %c0_38] : memref<6x32x16xbf16, #tpu.memory_space<vmem>>, vector<1x32x16xbf16>
    %81 = vector.shape_cast %80 : vector<1x32x16xbf16> to vector<32x16xbf16>
    %cst_39 = arith.constant dense<0.000000e+00> : vector<128x16xf32>
    %82 = tpu.matmul %28, %81, %cst_39 {dimension_numbers = #tpu.dot_dimension_numbers<[1], [0], [0], [1], [0, 0, 1, 1], [], []>} : vector<128x32xbf16>, vector<32x16xbf16>, vector<128x16xf32> -> vector<128x16xf32>
    %c1_40 = arith.constant 1 : index
    %c0_41 = arith.constant 0 : index
    %c0_42 = arith.constant 0 : index
    %83 = vector.load %arg8[%c1_40, %c0_41, %c0_42] : memref<6x1x16xf32, #tpu.memory_space<vmem>>, vector<1x1x16xf32>
    %84 = vector.shape_cast %83 : vector<1x1x16xf32> to vector<1x16xf32>
    %85 = vector.broadcast %84 : vector<1x16xf32> to vector<128x16xf32>
    %86 = arith.addf %82, %85 : vector<128x16xf32>
    %c3 = arith.constant 3 : index
    %c0_43 = arith.constant 0 : index
    %c0_44 = arith.constant 0 : index
    %87 = vector.load %arg7[%c3, %c0_43, %c0_44] : memref<6x32x16xbf16, #tpu.memory_space<vmem>>, vector<1x32x16xbf16>
    %88 = vector.shape_cast %87 : vector<1x32x16xbf16> to vector<32x16xbf16>
    %cst_45 = arith.constant dense<0.000000e+00> : vector<128x16xf32>
    %89 = tpu.matmul %28, %88, %cst_45 {dimension_numbers = #tpu.dot_dimension_numbers<[1], [0], [0], [1], [0, 0, 1, 1], [], []>} : vector<128x32xbf16>, vector<32x16xbf16>, vector<128x16xf32> -> vector<128x16xf32>
    %c3_46 = arith.constant 3 : index
    %c0_47 = arith.constant 0 : index
    %c0_48 = arith.constant 0 : index
    %90 = vector.load %arg8[%c3_46, %c0_47, %c0_48] : memref<6x1x16xf32, #tpu.memory_space<vmem>>, vector<1x1x16xf32>
    %91 = vector.shape_cast %90 : vector<1x1x16xf32> to vector<1x16xf32>
    %92 = vector.broadcast %91 : vector<1x16xf32> to vector<128x16xf32>
    %93 = arith.addf %89, %92 : vector<128x16xf32>
    %c5 = arith.constant 5 : index
    %c0_49 = arith.constant 0 : index
    %c0_50 = arith.constant 0 : index
    %94 = vector.load %arg7[%c5, %c0_49, %c0_50] : memref<6x32x16xbf16, #tpu.memory_space<vmem>>, vector<1x32x16xbf16>
    %95 = vector.shape_cast %94 : vector<1x32x16xbf16> to vector<32x16xbf16>
    %cst_51 = arith.constant dense<0.000000e+00> : vector<128x16xf32>
    %96 = tpu.matmul %28, %95, %cst_51 {dimension_numbers = #tpu.dot_dimension_numbers<[1], [0], [0], [1], [0, 0, 1, 1], [], []>} : vector<128x32xbf16>, vector<32x16xbf16>, vector<128x16xf32> -> vector<128x16xf32>
    %c5_52 = arith.constant 5 : index
    %c0_53 = arith.constant 0 : index
    %c0_54 = arith.constant 0 : index
    %97 = vector.load %arg8[%c5_52, %c0_53, %c0_54] : memref<6x1x16xf32, #tpu.memory_space<vmem>>, vector<1x1x16xf32>
    %98 = vector.shape_cast %97 : vector<1x1x16xf32> to vector<1x16xf32>
    %99 = vector.broadcast %98 : vector<1x16xf32> to vector<128x16xf32>
    %100 = arith.addf %96, %99 : vector<128x16xf32>
    %101 = vector.shape_cast %86 : vector<128x16xf32> to vector<4x32x16xf32>
    %102 = arith.truncf %101 : vector<4x32x16xf32> to vector<4x32x16xbf16>
    %103 = vector.shape_cast %93 : vector<128x16xf32> to vector<4x32x16xf32>
    %104 = arith.truncf %103 : vector<4x32x16xf32> to vector<4x32x16xbf16>
    %105 = vector.shape_cast %100 : vector<128x16xf32> to vector<4x32x16xf32>
    %106 = arith.truncf %105 : vector<4x32x16xf32> to vector<4x32x16xbf16>
    "tpu.trace_start"() <{level = 10 : i32, message = "bqd,bkd->bqk"}> : () -> ()
    %cst_55 = arith.constant dense<0.000000e+00> : vector<4x32x32xf32>
    %107 = tpu.matmul %102, %104, %cst_55 {dimension_numbers = #tpu.dot_dimension_numbers<[2], [2], [1], [1], [0, 0, 0, 1, 1, 1], [0], [0]>} : vector<4x32x16xbf16>, vector<4x32x16xbf16>, vector<4x32x32xf32> -> vector<4x32x32xf32>
    "tpu.trace_stop"() : () -> ()
    %cst_56 = arith.constant 2.500000e-01 : f32
    %108 = vector.broadcast %cst_56 : f32 to vector<4x32x32xf32>
    %109 = arith.mulf %107, %108 : vector<4x32x32xf32>
    %cst_57 = arith.constant -1.000000e+30 : f32
    %110 = vector.shape_cast %32 : vector<1x32x32xi1> to vector<1x32x32xi1>
    %111 = vector.broadcast %110 : vector<1x32x32xi1> to vector<4x32x32xi1>
    %112 = vector.broadcast %cst_57 : f32 to vector<4x32x32xf32>
    %113 = arith.select %111, %109, %112 : vector<4x32x32xi1>, vector<4x32x32xf32>
    %cst_58 = arith.constant dense<0xFF800000> : vector<4x32xf32>
    %114 = vector.multi_reduction <maximumf>, %113, %cst_58 [2] : vector<4x32x32xf32> to vector<4x32xf32>
    %115 = vector.shape_cast %114 : vector<4x32xf32> to vector<4x32x1xf32>
    %116 = vector.broadcast %115 : vector<4x32x1xf32> to vector<4x32x32xf32>
    %117 = arith.subf %113, %116 : vector<4x32x32xf32>
    %118 = math.exp %117 : vector<4x32x32xf32>
    %cst_59 = arith.constant dense<0.000000e+00> : vector<4x32xf32>
    %119 = vector.multi_reduction <add>, %118, %cst_59 [2] : vector<4x32x32xf32> to vector<4x32xf32>
    %120 = vector.shape_cast %119 : vector<4x32xf32> to vector<4x32x1xf32>
    %121 = tpu.reciprocal %120 {approx = true} : vector<4x32x1xf32> -> vector<4x32x1xf32>
    %122 = vector.broadcast %121 : vector<4x32x1xf32> to vector<4x32x32xf32>
    %123 = arith.mulf %118, %122 : vector<4x32x32xf32>
    %124 = arith.truncf %123 : vector<4x32x32xf32> to vector<4x32x32xbf16>
    "tpu.trace_start"() <{level = 10 : i32, message = "bqk,bkd->bqd"}> : () -> ()
    %cst_60 = arith.constant dense<0.000000e+00> : vector<4x32x16xf32>
    %125 = tpu.matmul %124, %106, %cst_60 {dimension_numbers = #tpu.dot_dimension_numbers<[2], [1], [1], [2], [0, 0, 0, 1, 1, 2], [0], [0]>} : vector<4x32x32xbf16>, vector<4x32x16xbf16>, vector<4x32x16xf32> -> vector<4x32x16xf32>
    "tpu.trace_stop"() : () -> ()
    %126 = vector.shape_cast %125 : vector<4x32x16xf32> to vector<128x16xf32>
    %127 = tpu.concatenate %79, %126 in 1 : vector<128x16xf32>, vector<128x16xf32> -> vector<128x32xf32>
    %128 = arith.truncf %127 : vector<128x32xf32> to vector<128x32xbf16>
    %c0_61 = arith.constant 0 : index
    %c0_62 = arith.constant 0 : index
    %c0_63 = arith.constant 0 : index
    %129 = vector.load %arg9[%c0_61, %c0_62, %c0_63] : memref<1x32x32xbf16, #tpu.memory_space<vmem>>, vector<1x32x32xbf16>
    %130 = vector.shape_cast %129 : vector<1x32x32xbf16> to vector<32x32xbf16>
    %cst_64 = arith.constant dense<0.000000e+00> : vector<128x32xf32>
    %131 = tpu.matmul %128, %130, %cst_64 {dimension_numbers = #tpu.dot_dimension_numbers<[1], [0], [0], [1], [0, 0, 1, 1], [], []>} : vector<128x32xbf16>, vector<32x32xbf16>, vector<128x32xf32> -> vector<128x32xf32>
    %c0_65 = arith.constant 0 : index
    %c0_66 = arith.constant 0 : index
    %c0_67 = arith.constant 0 : index
    %132 = vector.load %arg10[%c0_65, %c0_66, %c0_67] : memref<1x1x32xf32, #tpu.memory_space<vmem>>, vector<1x1x32xf32>
    %133 = vector.shape_cast %132 : vector<1x1x32xf32> to vector<1x32xf32>
    %134 = vector.broadcast %133 : vector<1x32xf32> to vector<128x32xf32>
    %135 = arith.addf %131, %134 : vector<128x32xf32>
    %136 = arith.addf %3, %135 : vector<128x32xf32>
    %c0_68 = arith.constant 0 : index
    %c0_69 = arith.constant 0 : index
    %c0_70 = arith.constant 0 : index
    %137 = vector.load %arg11[%c0_68, %c0_69, %c0_70] : memref<1x1x32xf32, #tpu.memory_space<vmem>>, vector<1x1x32xf32>
    %138 = vector.shape_cast %137 : vector<1x1x32xf32> to vector<1x32xf32>
    %c0_71 = arith.constant 0 : index
    %c0_72 = arith.constant 0 : index
    %c0_73 = arith.constant 0 : index
    %139 = vector.load %arg12[%c0_71, %c0_72, %c0_73] : memref<1x1x32xf32, #tpu.memory_space<vmem>>, vector<1x1x32xf32>
    %140 = vector.shape_cast %139 : vector<1x1x32xf32> to vector<1x32xf32>
    %cst_74 = arith.constant dense<0.000000e+00> : vector<128xf32>
    %141 = vector.multi_reduction <add>, %136, %cst_74 [1] : vector<128x32xf32> to vector<128xf32>
    %142 = vector.shape_cast %141 : vector<128xf32> to vector<128x1xf32>
    %cst_75 = arith.constant 3.200000e+01 : f32
    %143 = vector.broadcast %cst_75 : f32 to vector<128x1xf32>
    %144 = arith.divf %142, %143 : vector<128x1xf32>
    %145 = vector.broadcast %144 : vector<128x1xf32> to vector<128x32xf32>
    %146 = arith.subf %136, %145 : vector<128x32xf32>
    %147 = arith.mulf %146, %146 : vector<128x32xf32>
    %cst_76 = arith.constant dense<0.000000e+00> : vector<128xf32>
    %148 = vector.multi_reduction <add>, %147, %cst_76 [1] : vector<128x32xf32> to vector<128xf32>
    %149 = vector.shape_cast %148 : vector<128xf32> to vector<128x1xf32>
    %cst_77 = arith.constant 3.200000e+01 : f32
    %150 = vector.broadcast %cst_77 : f32 to vector<128x1xf32>
    %151 = arith.divf %149, %150 : vector<128x1xf32>
    %cst_78 = arith.constant 9.99999996E-13 : f32
    %152 = vector.broadcast %cst_78 : f32 to vector<128x1xf32>
    %153 = arith.addf %151, %152 : vector<128x1xf32>
    %154 = math.rsqrt %153 : vector<128x1xf32>
    %155 = vector.broadcast %154 : vector<128x1xf32> to vector<128x32xf32>
    %156 = arith.mulf %146, %155 : vector<128x32xf32>
    %157 = vector.broadcast %138 : vector<1x32xf32> to vector<128x32xf32>
    %158 = arith.mulf %156, %157 : vector<128x32xf32>
    %159 = vector.broadcast %140 : vector<1x32xf32> to vector<128x32xf32>
    %160 = arith.addf %158, %159 : vector<128x32xf32>
    %161 = arith.truncf %160 : vector<128x32xf32> to vector<128x32xbf16>
    %c0_79 = arith.constant 0 : index
    %c0_80 = arith.constant 0 : index
    %c0_81 = arith.constant 0 : index
    %162 = vector.load %arg13[%c0_79, %c0_80, %c0_81] : memref<1x32x128xbf16, #tpu.memory_space<vmem>>, vector<1x32x128xbf16>
    %163 = vector.shape_cast %162 : vector<1x32x128xbf16> to vector<32x128xbf16>
    %cst_82 = arith.constant dense<0.000000e+00> : vector<128x128xf32>
    %164 = tpu.matmul %161, %163, %cst_82 {dimension_numbers = #tpu.dot_dimension_numbers<[1], [0], [0], [1], [0, 0, 1, 1], [], []>} : vector<128x32xbf16>, vector<32x128xbf16>, vector<128x128xf32> -> vector<128x128xf32>
    %c0_83 = arith.constant 0 : index
    %c0_84 = arith.constant 0 : index
    %c0_85 = arith.constant 0 : index
    %165 = vector.load %arg14[%c0_83, %c0_84, %c0_85] : memref<1x1x128xf32, #tpu.memory_space<vmem>>, vector<1x1x128xf32>
    %166 = vector.shape_cast %165 : vector<1x1x128xf32> to vector<1x128xf32>
    %167 = vector.broadcast %166 : vector<1x128xf32> to vector<128x128xf32>
    %168 = arith.addf %164, %167 : vector<128x128xf32>
    %169 = arith.mulf %168, %168 : vector<128x128xf32>
    %170 = arith.mulf %168, %169 : vector<128x128xf32>
    %cst_86 = arith.constant 4.471500e-02 : f32
    %171 = vector.broadcast %cst_86 : f32 to vector<128x128xf32>
    %172 = arith.mulf %171, %170 : vector<128x128xf32>
    %173 = arith.addf %168, %172 : vector<128x128xf32>
    %cst_87 = arith.constant 0.797884583 : f32
    %174 = vector.broadcast %cst_87 : f32 to vector<128x128xf32>
    %175 = arith.mulf %174, %173 : vector<128x128xf32>
    %176 = math.tanh %175 : vector<128x128xf32>
    %cst_88 = arith.constant 1.000000e+00 : f32
    %177 = vector.broadcast %cst_88 : f32 to vector<128x128xf32>
    %178 = arith.addf %177, %176 : vector<128x128xf32>
    %cst_89 = arith.constant 5.000000e-01 : f32
    %179 = vector.broadcast %cst_89 : f32 to vector<128x128xf32>
    %180 = arith.mulf %179, %178 : vector<128x128xf32>
    %181 = arith.mulf %168, %180 : vector<128x128xf32>
    %182 = arith.truncf %181 : vector<128x128xf32> to vector<128x128xbf16>
    %c0_90 = arith.constant 0 : index
    %c0_91 = arith.constant 0 : index
    %c0_92 = arith.constant 0 : index
    %183 = vector.load %arg15[%c0_90, %c0_91, %c0_92] : memref<1x128x32xbf16, #tpu.memory_space<vmem>>, vector<1x128x32xbf16>
    %184 = vector.shape_cast %183 : vector<1x128x32xbf16> to vector<128x32xbf16>
    %cst_93 = arith.constant dense<0.000000e+00> : vector<128x32xf32>
    %185 = tpu.matmul %182, %184, %cst_93 {dimension_numbers = #tpu.dot_dimension_numbers<[1], [0], [0], [1], [0, 0, 1, 1], [], []>} : vector<128x128xbf16>, vector<128x32xbf16>, vector<128x32xf32> -> vector<128x32xf32>
    %c0_94 = arith.constant 0 : index
    %c0_95 = arith.constant 0 : index
    %c0_96 = arith.constant 0 : index
    %186 = vector.load %arg16[%c0_94, %c0_95, %c0_96] : memref<1x1x32xf32, #tpu.memory_space<vmem>>, vector<1x1x32xf32>
    %187 = vector.shape_cast %186 : vector<1x1x32xf32> to vector<1x32xf32>
    %188 = vector.broadcast %187 : vector<1x32xf32> to vector<128x32xf32>
    %189 = arith.addf %185, %188 : vector<128x32xf32>
    %190 = arith.addf %136, %189 : vector<128x32xf32>
    %c0_97 = arith.constant 0 : index
    %c0_98 = arith.constant 0 : index
    %191 = vector.load %arg22[%c0_97, %c0_98] : memref<128x32xf32, #tpu.memory_space<vmem>>, vector<128x32xf32>
    tpu.vector_store %arg22[%c0_97, %c0_98], %190 {strides = array<i32>} : memref<128x32xf32, #tpu.memory_space<vmem>>, vector<128x32xf32>,
    %c1_i32 = arith.constant 1 : i32
    %192 = arith.cmpi eq, %arg1, %c1_i32 : i32
    %193 = arith.extui %192 : i1 to i32
    %c0_i32_99 = arith.constant 0 : i32
    %194 = arith.cmpi ne, %193, %c0_i32_99 : i32
    scf.if %194 {
      %195 = vector.extract_strided_slice %190 {offsets = [0, 0], sizes = [1, 32], strides = [1, 1]} : vector<128x32xf32> to vector<1x32xf32>
      %196 = vector.extract_strided_slice %190 {offsets = [32, 0], sizes = [1, 32], strides = [1, 1]} : vector<128x32xf32> to vector<1x32xf32>
      %197 = vector.extract_strided_slice %190 {offsets = [64, 0], sizes = [1, 32], strides = [1, 1]} : vector<128x32xf32> to vector<1x32xf32>
      %198 = vector.extract_strided_slice %190 {offsets = [96, 0], sizes = [1, 32], strides = [1, 1]} : vector<128x32xf32> to vector<1x32xf32>
      %199 = tpu.concatenate %195, %196, %197, %198 in 0 : vector<1x32xf32>, vector<1x32xf32>, vector<1x32xf32>, vector<1x32xf32> -> vector<4x32xf32>
      %c0_100 = arith.constant 0 : index
      %c0_101 = arith.constant 0 : index
      %200 = vector.load %arg17[%c0_100, %c0_101] : memref<1x32xf32, #tpu.memory_space<vmem>>, vector<1x32xf32>
      %c0_102 = arith.constant 0 : index
      %c0_103 = arith.constant 0 : index
      %201 = vector.load %arg18[%c0_102, %c0_103] : memref<1x32xf32, #tpu.memory_space<vmem>>, vector<1x32xf32>
      %cst_104 = arith.constant dense<0.000000e+00> : vector<4xf32>
      %202 = vector.multi_reduction <add>, %199, %cst_104 [1] : vector<4x32xf32> to vector<4xf32>
      %203 = vector.shape_cast %202 : vector<4xf32> to vector<4x1xf32>
      %cst_105 = arith.constant 3.200000e+01 : f32
      %204 = vector.broadcast %cst_105 : f32 to vector<4x1xf32>
      %205 = arith.divf %203, %204 : vector<4x1xf32>
      %206 = vector.broadcast %205 : vector<4x1xf32> to vector<4x32xf32>
      %207 = arith.subf %199, %206 : vector<4x32xf32>
      %208 = arith.mulf %207, %207 : vector<4x32xf32>
      %cst_106 = arith.constant dense<0.000000e+00> : vector<4xf32>
      %209 = vector.multi_reduction <add>, %208, %cst_106 [1] : vector<4x32xf32> to vector<4xf32>
      %210 = vector.shape_cast %209 : vector<4xf32> to vector<4x1xf32>
      %cst_107 = arith.constant 3.200000e+01 : f32
      %211 = vector.broadcast %cst_107 : f32 to vector<4x1xf32>
      %212 = arith.divf %210, %211 : vector<4x1xf32>
      %cst_108 = arith.constant 9.99999996E-13 : f32
      %213 = vector.broadcast %cst_108 : f32 to vector<4x1xf32>
      %214 = arith.addf %212, %213 : vector<4x1xf32>
      %215 = math.rsqrt %214 : vector<4x1xf32>
      %216 = vector.broadcast %215 : vector<4x1xf32> to vector<4x32xf32>
      %217 = arith.mulf %207, %216 : vector<4x32xf32>
      %218 = vector.broadcast %200 : vector<1x32xf32> to vector<4x32xf32>
      %219 = arith.mulf %217, %218 : vector<4x32xf32>
      %220 = vector.broadcast %201 : vector<1x32xf32> to vector<4x32xf32>
      %221 = arith.addf %219, %220 : vector<4x32xf32>
      %222 = arith.truncf %221 : vector<4x32xf32> to vector<4x32xbf16>
      %c0_109 = arith.constant 0 : index
      %c0_110 = arith.constant 0 : index
      %223 = vector.load %arg19[%c0_109, %c0_110] : memref<32x128xbf16, #tpu.memory_space<vmem>>, vector<32x128xbf16>
      %cst_111 = arith.constant dense<0.000000e+00> : vector<4x128xf32>
      %224 = tpu.matmul %222, %223, %cst_111 {dimension_numbers = #tpu.dot_dimension_numbers<[1], [0], [0], [1], [0, 0, 1, 1], [], []>} : vector<4x32xbf16>, vector<32x128xbf16>, vector<4x128xf32> -> vector<4x128xf32>
      %c0_112 = arith.constant 0 : index
      %c0_113 = arith.constant 0 : index
      %225 = vector.load %arg20[%c0_112, %c0_113] : memref<1x128xf32, #tpu.memory_space<vmem>>, vector<1x128xf32>
      %226 = vector.broadcast %225 : vector<1x128xf32> to vector<4x128xf32>
      %227 = arith.addf %224, %226 : vector<4x128xf32>
      %c0_114 = arith.constant 0 : index
      %c0_115 = arith.constant 0 : index
      %c0_116 = arith.constant 0 : index
      %228 = vector.load %arg21[%c0_114, %c0_115, %c0_116] : memref<1x4x128xf32, #tpu.memory_space<vmem>>, vector<1x4x128xf32>
      %229 = vector.shape_cast %228 : vector<1x4x128xf32> to vector<4x128xf32>
      %230 = vector.shape_cast %227 : vector<4x128xf32> to vector<1x4x128xf32>
      tpu.vector_store %arg21[%c0_114, %c0_115, %c0_116], %230 {strides = array<i32>} : memref<1x4x128xf32, #tpu.memory_space<vmem>>, vector<1x4x128xf32>,
    } else {
    }
    return
  }
  func.func @transform_0(%arg0: i32, %arg1: i32) -> (i32, i32) {
    %c0_i32 = arith.constant 0 : i32
    %c0_i32_0 = arith.constant 0 : i32
    return %arg0, %c0_i32 : i32, i32
  }
  func.func @transform_1(%arg0: i32, %arg1: i32) -> (i32, i32) {
    %c0_i32 = arith.constant 0 : i32
    %c0_i32_0 = arith.constant 0 : i32
    %c0_i32_1 = arith.constant 0 : i32
    return %c0_i32, %c0_i32_0 : i32, i32
  }
  func.func @transform_2(%arg0: i32, %arg1: i32) -> (i32, i32) {
    %c0_i32 = arith.constant 0 : i32
    %c0_i32_0 = arith.constant 0 : i32
    %c0_i32_1 = arith.constant 0 : i32
    return %c0_i32, %c0_i32_0 : i32, i32
  }
  func.func @transform_3(%arg0: i32, %arg1: i32) -> (i32, i32, i32) {
    %c0_i32 = arith.constant 0 : i32
    %c0_i32_0 = arith.constant 0 : i32
    %c0_i32_1 = arith.constant 0 : i32
    return %arg1, %c0_i32, %c0_i32_0 : i32, i32, i32
  }
  func.func @transform_4(%arg0: i32, %arg1: i32) -> (i32, i32, i32) {
    %c0_i32 = arith.constant 0 : i32
    %c0_i32_0 = arith.constant 0 : i32
    %c0_i32_1 = arith.constant 0 : i32
    return %arg1, %c0_i32, %c0_i32_0 : i32, i32, i32
  }
  func.func @transform_5(%arg0: i32, %arg1: i32) -> (i32, i32, i32) {
    %c0_i32 = arith.constant 0 : i32
    %c0_i32_0 = arith.constant 0 : i32
    %c0_i32_1 = arith.constant 0 : i32
    return %arg1, %c0_i32, %c0_i32_0 : i32, i32, i32
  }
  func.func @transform_6(%arg0: i32, %arg1: i32) -> (i32, i32, i32) {
    %c0_i32 = arith.constant 0 : i32
    %c0_i32_0 = arith.constant 0 : i32
    %c0_i32_1 = arith.constant 0 : i32
    return %arg1, %c0_i32, %c0_i32_0 : i32, i32, i32
  }
  func.func @transform_7(%arg0: i32, %arg1: i32) -> (i32, i32, i32) {
    %c0_i32 = arith.constant 0 : i32
    %c0_i32_0 = arith.constant 0 : i32
    %c0_i32_1 = arith.constant 0 : i32
    return %arg1, %c0_i32, %c0_i32_0 : i32, i32, i32
  }
  func.func @transform_8(%arg0: i32, %arg1: i32) -> (i32, i32, i32) {
    %c0_i32 = arith.constant 0 : i32
    %c0_i32_0 = arith.constant 0 : i32
    %c0_i32_1 = arith.constant 0 : i32
    return %arg1, %c0_i32, %c0_i32_0 : i32, i32, i32
  }
  func.func @transform_9(%arg0: i32, %arg1: i32) -> (i32, i32, i32) {
    %c0_i32 = arith.constant 0 : i32
    %c0_i32_0 = arith.constant 0 : i32
    %c0_i32_1 = arith.constant 0 : i32
    return %arg1, %c0_i32, %c0_i32_0 : i32, i32, i32
  }
  func.func @transform_10(%arg0: i32, %arg1: i32) -> (i32, i32, i32) {
    %c0_i32 = arith.constant 0 : i32
    %c0_i32_0 = arith.constant 0 : i32
    %c0_i32_1 = arith.constant 0 : i32
    return %arg1, %c0_i32, %c0_i32_0 : i32, i32, i32
  }
  func.func @transform_11(%arg0: i32, %arg1: i32) -> (i32, i32, i32) {
    %c0_i32 = arith.constant 0 : i32
    %c0_i32_0 = arith.constant 0 : i32
    %c0_i32_1 = arith.constant 0 : i32
    return %arg1, %c0_i32, %c0_i32_0 : i32, i32, i32
  }
  func.func @transform_12(%arg0: i32, %arg1: i32) -> (i32, i32, i32) {
    %c0_i32 = arith.constant 0 : i32
    %c0_i32_0 = arith.constant 0 : i32
    %c0_i32_1 = arith.constant 0 : i32
    return %arg1, %c0_i32, %c0_i32_0 : i32, i32, i32
  }
  func.func @transform_13(%arg0: i32, %arg1: i32) -> (i32, i32, i32) {
    %c0_i32 = arith.constant 0 : i32
    %c0_i32_0 = arith.constant 0 : i32
    %c0_i32_1 = arith.constant 0 : i32
    return %arg1, %c0_i32, %c0_i32_0 : i32, i32, i32
  }
  func.func @transform_14(%arg0: i32, %arg1: i32) -> (i32, i32, i32) {
    %c0_i32 = arith.constant 0 : i32
    %c0_i32_0 = arith.constant 0 : i32
    %c0_i32_1 = arith.constant 0 : i32
    return %arg1, %c0_i32, %c0_i32_0 : i32, i32, i32
  }
  func.func @transform_15(%arg0: i32, %arg1: i32) -> (i32, i32) {
    %c0_i32 = arith.constant 0 : i32
    %c0_i32_0 = arith.constant 0 : i32
    %c0_i32_1 = arith.constant 0 : i32
    return %c0_i32, %c0_i32_0 : i32, i32
  }
  func.func @transform_16(%arg0: i32, %arg1: i32) -> (i32, i32) {
    %c0_i32 = arith.constant 0 : i32
    %c0_i32_0 = arith.constant 0 : i32
    %c0_i32_1 = arith.constant 0 : i32
    return %c0_i32, %c0_i32_0 : i32, i32
  }
  func.func @transform_17(%arg0: i32, %arg1: i32) -> (i32, i32) {
    %c0_i32 = arith.constant 0 : i32
    %c0_i32_0 = arith.constant 0 : i32
    %c0_i32_1 = arith.constant 0 : i32
    return %c0_i32, %c0_i32_0 : i32, i32
  }
  func.func @transform_18(%arg0: i32, %arg1: i32) -> (i32, i32) {
    %c0_i32 = arith.constant 0 : i32
    %c0_i32_0 = arith.constant 0 : i32
    %c0_i32_1 = arith.constant 0 : i32
    return %c0_i32, %c0_i32_0 : i32, i32
  }
  func.func @transform_19(%arg0: i32, %arg1: i32) -> (i32, i32, i32) {
    %c0_i32 = arith.constant 0 : i32
    %c0_i32_0 = arith.constant 0 : i32
    %c0_i32_1 = arith.constant 0 : i32
    return %arg0, %c0_i32, %c0_i32_0 : i32, i32, i32
  }
}

</mosaic_0001>

<llo_original>
// kernel: vit_forward.1
$region0: #{vit_forward.1}
  #allocation0 [shape = 'u32[]', space=smem, size = 0x4, offset = 0x4, fixed_abs, tag = 'smem constant byte address 0x4 - core index']
  #allocation1 [shape = 'u32[72,128]{1,0:T(1,128)}', space=vmem, size = 0x9000, scoped, tag = 'internal scratch']
  #allocation2 [shape = 'f32[128,32]{1,0:T(8,128)}', space=vmem, size = 0x10000, scoped, tag = 'scratch operand']
  %s0 = inlined_call_operand.vmem [shape: f32[256,48], index: 0, kind: input, shape index: {}]
  %s1 = inlined_call_operand.vmem [shape: f32[128,32], index: 1, kind: input, shape index: {}]
  %s2 = inlined_call_operand.vmem [shape: bf16[48,32], index: 2, kind: input, shape index: {}]
  %s3 = inlined_call_operand.vmem [shape: f32[2,1,32], index: 3, kind: input, shape index: {}]
  %s4 = inlined_call_operand.vmem [shape: f32[2,1,32], index: 4, kind: input, shape index: {}]
  %s5 = inlined_call_operand.vmem [shape: bf16[12,32,16], index: 5, kind: input, shape index: {}]
  %s6 = inlined_call_operand.vmem [shape: f32[12,1,16], index: 6, kind: input, shape index: {}]
  %s7 = inlined_call_operand.vmem [shape: bf16[2,32,32], index: 7, kind: input, shape index: {}]
  %s8 = inlined_call_operand.vmem [shape: f32[2,1,32], index: 8, kind: input, shape index: {}]
  %s9 = inlined_call_operand.vmem [shape: f32[2,1,32], index: 9, kind: input, shape index: {}]
  %s10 = inlined_call_operand.vmem [shape: f32[2,1,32], index: 10, kind: input, shape index: {}]
  %s11 = inlined_call_operand.vmem [shape: bf16[2,32,128], index: 11, kind: input, shape index: {}]
  %s12 = inlined_call_operand.vmem [shape: f32[2,1,128], index: 12, kind: input, shape index: {}]
  %s13 = inlined_call_operand.vmem [shape: bf16[2,128,32], index: 13, kind: input, shape index: {}]
  %s14 = inlined_call_operand.vmem [shape: f32[2,1,32], index: 14, kind: input, shape index: {}]
  %s15 = inlined_call_operand.vmem [shape: f32[1,32], index: 15, kind: input, shape index: {}]
  %s16 = inlined_call_operand.vmem [shape: f32[1,32], index: 16, kind: input, shape index: {}]
  %s17 = inlined_call_operand.vmem [shape: bf16[32,128], index: 17, kind: input, shape index: {}]
  %s18 = inlined_call_operand.vmem [shape: f32[1,128], index: 18, kind: input, shape index: {}]
  %s19 = inlined_call_operand.hbm [shape: f32[2,4,128], index: 19, kind: output, shape index: {}]
  %s20 = sld [smem:[#allocation0]]
  $region117: #{vit_forward.1} parent=0
    _
  %s22 = ssub.s32 1, %s20
  %s23 = scalar_select 0, %s22, %s20
  $region1: #{vit_forward.1} parent=0
    #allocation3 [shape = 'u8[4096]{0}', space=vmem, size = 0x1000, scoped, tag = 'output window, operand 0']
    #allocation4 [shape = 's32[2]{0}', space=sflag, size = 0x8, scoped, tag = 'scoped memory for vit_forward.1']
    %24 = vsyncpa [#allocation4], 0
    %s25 = scalar_lea.sflag [#allocation4], 1
    %26 = vsyncpa %s25, 0
    loop: start=0, step=1, limit=6
    $region2: #{vit_forward.1} parent=1 // loop_pre_header
      _
    $region3: #{vit_forward.1} parent=1 // loop_header
      %s28 = sphi 0, %s32
      %p29 = scmp.ge.s32.totalorder %s28, 6
      %s35 = sphi 0, %s47
      %s36 = sphi 0, %s43
      %s37 = sphi 0, %s35
      %s38 = sphi 0, %s36
      %s39 = sphi 0, %s37
      %s40 = sphi 0, %s38
      %s50 = sphi 0, %s52
      %s53 = sphi 0, %s50
      %s54 = sphi 0, %s53
      %s70 = sphi 0, %s54
      %s74 = sphi 0, %s74
      %s76 = sphi 0, %s74
      %s77 = sphi 0, %s76
      %s91 = sphi 0, %s77
      %s95 = sphi 0, %s95
      %s97 = sphi 0, %s95
      %s98 = sphi 0, %s97
      %s112 = sphi 0, %s98
      %s118 = sphi 0, %s120
      %s121 = sphi 0, %s118
      %s122 = sphi 0, %s121
      %s138 = sphi 0, %s122
      %s144 = sphi 0, %s146
      %s147 = sphi 0, %s144
      %s148 = sphi 0, %s147
      %s164 = sphi 0, %s148
      %s170 = sphi 0, %s172
      %s173 = sphi 0, %s170
      %s174 = sphi 0, %s173
      %s190 = sphi 0, %s174
      %s196 = sphi 0, %s198
      %s199 = sphi 0, %s196
      %s200 = sphi 0, %s199
      %s216 = sphi 0, %s200
      %s222 = sphi 0, %s224
      %s225 = sphi 0, %s222
      %s226 = sphi 0, %s225
      %s242 = sphi 0, %s226
      %s248 = sphi 0, %s250
      %s251 = sphi 0, %s248
      %s252 = sphi 0, %s251
      %s268 = sphi 0, %s252
      %s274 = sphi 0, %s276
      %s277 = sphi 0, %s274
      %s278 = sphi 0, %s277
      %s294 = sphi 0, %s278
      %s300 = sphi 0, %s302
      %s303 = sphi 0, %s300
      %s304 = sphi 0, %s303
      %s320 = sphi 0, %s304
      %s326 = sphi 0, %s328
      %s329 = sphi 0, %s326
      %s330 = sphi 0, %s329
      %s346 = sphi 0, %s330
      %s352 = sphi 0, %s354
      %s355 = sphi 0, %s352
      %s356 = sphi 0, %s355
      %s372 = sphi 0, %s356
      %s378 = sphi 0, %s380
      %s381 = sphi 0, %s378
      %s382 = sphi 0, %s381
      %s398 = sphi 0, %s382
      %s404 = sphi 0, %s406
      %s407 = sphi 0, %s404
      %s408 = sphi 0, %s407
      %s424 = sphi 0, %s408
      %s428 = sphi 0, %s428
      %s430 = sphi 0, %s428
      %s431 = sphi 0, %s430
      %s445 = sphi 0, %s431
      %s449 = sphi 0, %s449
      %s451 = sphi 0, %s449
      %s452 = sphi 0, %s451
      %s466 = sphi 0, %s452
      %s470 = sphi 0, %s470
      %s472 = sphi 0, %s470
      %s473 = sphi 0, %s472
      %s487 = sphi 0, %s473
      %s491 = sphi 0, %s491
      %s493 = sphi 0, %s491
      %s494 = sphi 0, %s493
      %s508 = sphi 0, %s494
      %s514 = sphi 0, %s516
      %s517 = sphi 0, %s514
      %s518 = sphi 0, %s517
      %s534 = sphi 0, %s518
    $region4: #{vit_forward.1} parent=1 // loop_header_branch
      %31 = sbr.rel (%p29) target = $region8
    $region5: #{vit_forward.1} parent=1 // loop_body
      %s33 = ssub.s32 %s28, 1
      %s34 = ssub.s32 %s28, 2
      %s41 = sadd.s32 1, %s36
      %p42 = scmp.ge.s32.totalorder %s41, 2
      %s43 = scalar_select %p42, 0, %s41
      %s44 = sadd.s32 1, %s35
      %s45 = scalar_select %p42, %s44, %s35
      %p46 = scmp.ge.s32.totalorder %s45, 2
      %s47 = scalar_select %p46, 0, %s45
      %s48 = ssub.s32 %s35, %s47
      %p49 = scmp.eq.s32.totalorder %s48, 0
      %s51 = sadd.s32 %s50, 1
      %s52 = scalar_select %p49, %s50, %s51
      %p55 = pneg %p49
      %p56 = scmp.eq.s32.totalorder %s28, 3
      %p57 = por %p55, %p56
      %p58 = scmp.ne.s32.totalorder %s50, %s53
      %p59 = scmp.eq.s32.totalorder %s28, 0
      %p60 = por %p58, %p59
      %p61 = scmp.ne.s32.totalorder %s50, %s53
      %p62 = scmp.eq.s32.totalorder %s33, 3
      %p63 = por %p61, %p62
      %p64 = scmp.ne.s32.totalorder %s53, %s54
      %p65 = scmp.eq.s32.totalorder %s33, 0
      %p66 = por %p64, %p65
      %p67 = scmp.ne.s32.totalorder %s53, %s54
      %p68 = scmp.eq.s32.totalorder %s34, 3
      %p69 = por %p67, %p68
      %p71 = scmp.ne.s32.totalorder %s54, %s70
      %p72 = scmp.eq.s32.totalorder %s34, 0
      %p73 = por %p71, %p72
      %s75 = sadd.s32 %s74, 1
      %p78 = scmp.eq.s32.totalorder %s28, 3
      %p79 = scmp.ne.s32.totalorder %s74, %s76
      %p80 = scmp.eq.s32.totalorder %s28, 0
      %p81 = por %p79, %p80
      %p82 = scmp.ne.s32.totalorder %s74, %s76
      %p83 = scmp.eq.s32.totalorder %s33, 3
      %p84 = por %p82, %p83
      %p85 = scmp.ne.s32.totalorder %s76, %s77
      %p86 = scmp.eq.s32.totalorder %s33, 0
      %p87 = por %p85, %p86
      %p88 = scmp.ne.s32.totalorder %s76, %s77
      %p89 = scmp.eq.s32.totalorder %s34, 3
      %p90 = por %p88, %p89
      %p92 = scmp.ne.s32.totalorder %s77, %s91
      %p93 = scmp.eq.s32.totalorder %s34, 0
      %p94 = por %p92, %p93
      %s96 = sadd.s32 %s95, 1
      %p99 = scmp.eq.s32.totalorder %s28, 3
      %p100 = scmp.ne.s32.totalorder %s95, %s97
      %p101 = scmp.eq.s32.totalorder %s28, 0
      %p102 = por %p100, %p101
      %p103 = scmp.ne.s32.totalorder %s95, %s97
      %p104 = scmp.eq.s32.totalorder %s33, 3
      %p105 = por %p103, %p104
      %p106 = scmp.ne.s32.totalorder %s97, %s98
      %p107 = scmp.eq.s32.totalorder %s33, 0
      %p108 = por %p106, %p107
      %p109 = scmp.ne.s32.totalorder %s97, %s98
      %p110 = scmp.eq.s32.totalorder %s34, 3
      %p111 = por %p109, %p110
      %p113 = scmp.ne.s32.totalorder %s98, %s112
      %p114 = scmp.eq.s32.totalorder %s34, 0
      %p115 = por %p113, %p114
      %s116 = ssub.s32 %s36, %s43
      %p117 = scmp.eq.s32.totalorder %s116, 0
      %s119 = sadd.s32 %s118, 1
      %s120 = scalar_select %p117, %s118, %s119
      %p123 = pneg %p117
      %p124 = scmp.eq.s32.totalorder %s28, 3
      %p125 = por %p123, %p124
      %p126 = scmp.ne.s32.totalorder %s118, %s121
      %p127 = scmp.eq.s32.totalorder %s28, 0
      %p128 = por %p126, %p127
      %p129 = scmp.ne.s32.totalorder %s118, %s121
      %p130 = scmp.eq.s32.totalorder %s33, 3
      %p131 = por %p129, %p130
      %p132 = scmp.ne.s32.totalorder %s121, %s122
      %p133 = scmp.eq.s32.totalorder %s33, 0
      %p134 = por %p132, %p133
      %p135 = scmp.ne.s32.totalorder %s121, %s122
      %p136 = scmp.eq.s32.totalorder %s34, 3
      %p137 = por %p135, %p136
      %p139 = scmp.ne.s32.totalorder %s122, %s138
      %p140 = scmp.eq.s32.totalorder %s34, 0
      %p141 = por %p139, %p140
      %s142 = ssub.s32 %s36, %s43
      %p143 = scmp.eq.s32.totalorder %s142, 0
      %s145 = sadd.s32 %s144, 1
      %s146 = scalar_select %p143, %s144, %s145
      %p149 = pneg %p143
      %p150 = scmp.eq.s32.totalorder %s28, 3
      %p151 = por %p149, %p150
      %p152 = scmp.ne.s32.totalorder %s144, %s147
      %p153 = scmp.eq.s32.totalorder %s28, 0
      %p154 = por %p152, %p153
      %p155 = scmp.ne.s32.totalorder %s144, %s147
      %p156 = scmp.eq.s32.totalorder %s33, 3
      %p157 = por %p155, %p156
      %p158 = scmp.ne.s32.totalorder %s147, %s148
      %p159 = scmp.eq.s32.totalorder %s33, 0
      %p160 = por %p158, %p159
      %p161 = scmp.ne.s32.totalorder %s147, %s148
      %p162 = scmp.eq.s32.totalorder %s34, 3
      %p163 = por %p161, %p162
      %p165 = scmp.ne.s32.totalorder %s148, %s164
      %p166 = scmp.eq.s32.totalorder %s34, 0
      %p167 = por %p165, %p166
      %s168 = ssub.s32 %s36, %s43
      %p169 = scmp.eq.s32.totalorder %s168, 0
      %s171 = sadd.s32 %s170, 1
      %s172 = scalar_select %p169, %s170, %s171
      %p175 = pneg %p169
      %p176 = scmp.eq.s32.totalorder %s28, 3
      %p177 = por %p175, %p176
      %p178 = scmp.ne.s32.totalorder %s170, %s173
      %p179 = scmp.eq.s32.totalorder %s28, 0
      %p180 = por %p178, %p179
      %p181 = scmp.ne.s32.totalorder %s170, %s173
      %p182 = scmp.eq.s32.totalorder %s33, 3
      %p183 = por %p181, %p182
      %p184 = scmp.ne.s32.totalorder %s173, %s174
      %p185 = scmp.eq.s32.totalorder %s33, 0
      %p186 = por %p184, %p185
      %p187 = scmp.ne.s32.totalorder %s173, %s174
      %p188 = scmp.eq.s32.totalorder %s34, 3
      %p189 = por %p187, %p188
      %p191 = scmp.ne.s32.totalorder %s174, %s190
      %p192 = scmp.eq.s32.totalorder %s34, 0
      %p193 = por %p191, %p192
      %s194 = ssub.s32 %s36, %s43
      %p195 = scmp.eq.s32.totalorder %s194, 0
      %s197 = sadd.s32 %s196, 1
      %s198 = scalar_select %p195, %s196, %s197
      %p201 = pneg %p195
      %p202 = scmp.eq.s32.totalorder %s28, 3
      %p203 = por %p201, %p202
      %p204 = scmp.ne.s32.totalorder %s196, %s199
      %p205 = scmp.eq.s32.totalorder %s28, 0
      %p206 = por %p204, %p205
      %p207 = scmp.ne.s32.totalorder %s196, %s199
      %p208 = scmp.eq.s32.totalorder %s33, 3
      %p209 = por %p207, %p208
      %p210 = scmp.ne.s32.totalorder %s199, %s200
      %p211 = scmp.eq.s32.totalorder %s33, 0
      %p212 = por %p210, %p211
      %p213 = scmp.ne.s32.totalorder %s199, %s200
      %p214 = scmp.eq.s32.totalorder %s34, 3
      %p215 = por %p213, %p214
      %p217 = scmp.ne.s32.totalorder %s200, %s216
      %p218 = scmp.eq.s32.totalorder %s34, 0
      %p219 = por %p217, %p218
      %s220 = ssub.s32 %s36, %s43
      %p221 = scmp.eq.s32.totalorder %s220, 0
      %s223 = sadd.s32 %s222, 1
      %s224 = scalar_select %p221, %s222, %s223
      %p227 = pneg %p221
      %p228 = scmp.eq.s32.totalorder %s28, 3
      %p229 = por %p227, %p228
      %p230 = scmp.ne.s32.totalorder %s222, %s225
      %p231 = scmp.eq.s32.totalorder %s28, 0
      %p232 = por %p230, %p231
      %p233 = scmp.ne.s32.totalorder %s222, %s225
      %p234 = scmp.eq.s32.totalorder %s33, 3
      %p235 = por %p233, %p234
      %p236 = scmp.ne.s32.totalorder %s225, %s226
      %p237 = scmp.eq.s32.totalorder %s33, 0
      %p238 = por %p236, %p237
      %p239 = scmp.ne.s32.totalorder %s225, %s226
      %p240 = scmp.eq.s32.totalorder %s34, 3
      %p241 = por %p239, %p240
      %p243 = scmp.ne.s32.totalorder %s226, %s242
      %p244 = scmp.eq.s32.totalorder %s34, 0
      %p245 = por %p243, %p244
      %s246 = ssub.s32 %s36, %s43
      %p247 = scmp.eq.s32.totalorder %s246, 0
      %s249 = sadd.s32 %s248, 1
      %s250 = scalar_select %p247, %s248, %s249
      %p253 = pneg %p247
      %p254 = scmp.eq.s32.totalorder %s28, 3
      %p255 = por %p253, %p254
      %p256 = scmp.ne.s32.totalorder %s248, %s251
      %p257 = scmp.eq.s32.totalorder %s28, 0
      %p258 = por %p256, %p257
      %p259 = scmp.ne.s32.totalorder %s248, %s251
      %p260 = scmp.eq.s32.totalorder %s33, 3
      %p261 = por %p259, %p260
      %p262 = scmp.ne.s32.totalorder %s251, %s252
      %p263 = scmp.eq.s32.totalorder %s33, 0
      %p264 = por %p262, %p263
      %p265 = scmp.ne.s32.totalorder %s251, %s252
      %p266 = scmp.eq.s32.totalorder %s34, 3
      %p267 = por %p265, %p266
      %p269 = scmp.ne.s32.totalorder %s252, %s268
      %p270 = scmp.eq.s32.totalorder %s34, 0
      %p271 = por %p269, %p270
      %s272 = ssub.s32 %s36, %s43
      %p273 = scmp.eq.s32.totalorder %s272, 0
      %s275 = sadd.s32 %s274, 1
      %s276 = scalar_select %p273, %s274, %s275
      %p279 = pneg %p273
      %p280 = scmp.eq.s32.totalorder %s28, 3
      %p281 = por %p279, %p280
      %p282 = scmp.ne.s32.totalorder %s274, %s277
      %p283 = scmp.eq.s32.totalorder %s28, 0
      %p284 = por %p282, %p283
      %p285 = scmp.ne.s32.totalorder %s274, %s277
      %p286 = scmp.eq.s32.totalorder %s33, 3
      %p287 = por %p285, %p286
      %p288 = scmp.ne.s32.totalorder %s277, %s278
      %p289 = scmp.eq.s32.totalorder %s33, 0
      %p290 = por %p288, %p289
      %p291 = scmp.ne.s32.totalorder %s277, %s278
      %p292 = scmp.eq.s32.totalorder %s34, 3
      %p293 = por %p291, %p292
      %p295 = scmp.ne.s32.totalorder %s278, %s294
      %p296 = scmp.eq.s32.totalorder %s34, 0
      %p297 = por %p295, %p296
      %s298 = ssub.s32 %s36, %s43
      %p299 = scmp.eq.s32.totalorder %s298, 0
      %s301 = sadd.s32 %s300, 1
      %s302 = scalar_select %p299, %s300, %s301
      %p305 = pneg %p299
      %p306 = scmp.eq.s32.totalorder %s28, 3
      %p307 = por %p305, %p306
      %p308 = scmp.ne.s32.totalorder %s300, %s303
      %p309 = scmp.eq.s32.totalorder %s28, 0
      %p310 = por %p308, %p309
      %p311 = scmp.ne.s32.totalorder %s300, %s303
      %p312 = scmp.eq.s32.totalorder %s33, 3
      %p313 = por %p311, %p312
      %p314 = scmp.ne.s32.totalorder %s303, %s304
      %p315 = scmp.eq.s32.totalorder %s33, 0
      %p316 = por %p314, %p315
      %p317 = scmp.ne.s32.totalorder %s303, %s304
      %p318 = scmp.eq.s32.totalorder %s34, 3
      %p319 = por %p317, %p318
      %p321 = scmp.ne.s32.totalorder %s304, %s320
      %p322 = scmp.eq.s32.totalorder %s34, 0
      %p323 = por %p321, %p322
      %s324 = ssub.s32 %s36, %s43
      %p325 = scmp.eq.s32.totalorder %s324, 0
      %s327 = sadd.s32 %s326, 1
      %s328 = scalar_select %p325, %s326, %s327
      %p331 = pneg %p325
      %p332 = scmp.eq.s32.totalorder %s28, 3
      %p333 = por %p331, %p332
      %p334 = scmp.ne.s32.totalorder %s326, %s329
      %p335 = scmp.eq.s32.totalorder %s28, 0
      %p336 = por %p334, %p335
      %p337 = scmp.ne.s32.totalorder %s326, %s329
      %p338 = scmp.eq.s32.totalorder %s33, 3
      %p339 = por %p337, %p338
      %p340 = scmp.ne.s32.totalorder %s329, %s330
      %p341 = scmp.eq.s32.totalorder %s33, 0
      %p342 = por %p340, %p341
      %p343 = scmp.ne.s32.totalorder %s329, %s330
      %p344 = scmp.eq.s32.totalorder %s34, 3
      %p345 = por %p343, %p344
      %p347 = scmp.ne.s32.totalorder %s330, %s346
      %p348 = scmp.eq.s32.totalorder %s34, 0
      %p349 = por %p347, %p348
      %s350 = ssub.s32 %s36, %s43
      %p351 = scmp.eq.s32.totalorder %s350, 0
      %s353 = sadd.s32 %s352, 1
      %s354 = scalar_select %p351, %s352, %s353
      %p357 = pneg %p351
      %p358 = scmp.eq.s32.totalorder %s28, 3
      %p359 = por %p357, %p358
      %p360 = scmp.ne.s32.totalorder %s352, %s355
      %p361 = scmp.eq.s32.totalorder %s28, 0
      %p362 = por %p360, %p361
      %p363 = scmp.ne.s32.totalorder %s352, %s355
      %p364 = scmp.eq.s32.totalorder %s33, 3
      %p365 = por %p363, %p364
      %p366 = scmp.ne.s32.totalorder %s355, %s356
      %p367 = scmp.eq.s32.totalorder %s33, 0
      %p368 = por %p366, %p367
      %p369 = scmp.ne.s32.totalorder %s355, %s356
      %p370 = scmp.eq.s32.totalorder %s34, 3
      %p371 = por %p369, %p370
      %p373 = scmp.ne.s32.totalorder %s356, %s372
      %p374 = scmp.eq.s32.totalorder %s34, 0
      %p375 = por %p373, %p374
      %s376 = ssub.s32 %s36, %s43
      %p377 = scmp.eq.s32.totalorder %s376, 0
      %s379 = sadd.s32 %s378, 1
      %s380 = scalar_select %p377, %s378, %s379
      %p383 = pneg %p377
      %p384 = scmp.eq.s32.totalorder %s28, 3
      %p385 = por %p383, %p384
      %p386 = scmp.ne.s32.totalorder %s378, %s381
      %p387 = scmp.eq.s32.totalorder %s28, 0
      %p388 = por %p386, %p387
      %p389 = scmp.ne.s32.totalorder %s378, %s381
      %p390 = scmp.eq.s32.totalorder %s33, 3
      %p391 = por %p389, %p390
      %p392 = scmp.ne.s32.totalorder %s381, %s382
      %p393 = scmp.eq.s32.totalorder %s33, 0
      %p394 = por %p392, %p393
      %p395 = scmp.ne.s32.totalorder %s381, %s382
      %p396 = scmp.eq.s32.totalorder %s34, 3
      %p397 = por %p395, %p396
      %p399 = scmp.ne.s32.totalorder %s382, %s398
      %p400 = scmp.eq.s32.totalorder %s34, 0
      %p401 = por %p399, %p400
      %s402 = ssub.s32 %s36, %s43
      %p403 = scmp.eq.s32.totalorder %s402, 0
      %s405 = sadd.s32 %s404, 1
      %s406 = scalar_select %p403, %s404, %s405
      %p409 = pneg %p403
      %p410 = scmp.eq.s32.totalorder %s28, 3
      %p411 = por %p409, %p410
      %p412 = scmp.ne.s32.totalorder %s404, %s407
      %p413 = scmp.eq.s32.totalorder %s28, 0
      %p414 = por %p412, %p413
      %p415 = scmp.ne.s32.totalorder %s404, %s407
      %p416 = scmp.eq.s32.totalorder %s33, 3
      %p417 = por %p415, %p416
      %p418 = scmp.ne.s32.totalorder %s407, %s408
      %p419 = scmp.eq.s32.totalorder %s33, 0
      %p420 = por %p418, %p419
      %p421 = scmp.ne.s32.totalorder %s407, %s408
      %p422 = scmp.eq.s32.totalorder %s34, 3
      %p423 = por %p421, %p422
      %p425 = scmp.ne.s32.totalorder %s408, %s424
      %p426 = scmp.eq.s32.totalorder %s34, 0
      %p427 = por %p425, %p426
      %s429 = sadd.s32 %s428, 1
      %p432 = scmp.eq.s32.totalorder %s28, 3
      %p433 = scmp.ne.s32.totalorder %s428, %s430
      %p434 = scmp.eq.s32.totalorder %s28, 0
      %p435 = por %p433, %p434
      %p436 = scmp.ne.s32.totalorder %s428, %s430
      %p437 = scmp.eq.s32.totalorder %s33, 3
      %p438 = por %p436, %p437
      %p439 = scmp.ne.s32.totalorder %s430, %s431
      %p440 = scmp.eq.s32.totalorder %s33, 0
      %p441 = por %p439, %p440
      %p442 = scmp.ne.s32.totalorder %s430, %s431
      %p443 = scmp.eq.s32.totalorder %s34, 3
      %p444 = por %p442, %p443
      %p446 = scmp.ne.s32.totalorder %s431, %s445
      %p447 = scmp.eq.s32.totalorder %s34, 0
      %p448 = por %p446, %p447
      %s450 = sadd.s32 %s449, 1
      %p453 = scmp.eq.s32.totalorder %s28, 3
      %p454 = scmp.ne.s32.totalorder %s449, %s451
      %p455 = scmp.eq.s32.totalorder %s28, 0
      %p456 = por %p454, %p455
      %p457 = scmp.ne.s32.totalorder %s449, %s451
      %p458 = scmp.eq.s32.totalorder %s33, 3
      %p459 = por %p457, %p458
      %p460 = scmp.ne.s32.totalorder %s451, %s452
      %p461 = scmp.eq.s32.totalorder %s33, 0
      %p462 = por %p460, %p461
      %p463 = scmp.ne.s32.totalorder %s451, %s452
      %p464 = scmp.eq.s32.totalorder %s34, 3
      %p465 = por %p463, %p464
      %p467 = scmp.ne.s32.totalorder %s452, %s466
      %p468 = scmp.eq.s32.totalorder %s34, 0
      %p469 = por %p467, %p468
      %s471 = sadd.s32 %s470, 1
      %p474 = scmp.eq.s32.totalorder %s28, 3
      %p475 = scmp.ne.s32.totalorder %s470, %s472
      %p476 = scmp.eq.s32.totalorder %s28, 0
      %p477 = por %p475, %p476
      %p478 = scmp.ne.s32.totalorder %s470, %s472
      %p479 = scmp.eq.s32.totalorder %s33, 3
      %p480 = por %p478, %p479
      %p481 = scmp.ne.s32.totalorder %s472, %s473
      %p482 = scmp.eq.s32.totalorder %s33, 0
      %p483 = por %p481, %p482
      %p484 = scmp.ne.s32.totalorder %s472, %s473
      %p485 = scmp.eq.s32.totalorder %s34, 3
      %p486 = por %p484, %p485
      %p488 = scmp.ne.s32.totalorder %s473, %s487
      %p489 = scmp.eq.s32.totalorder %s34, 0
      %p490 = por %p488, %p489
      %s492 = sadd.s32 %s491, 1
      %p495 = scmp.eq.s32.totalorder %s28, 3
      %p496 = scmp.ne.s32.totalorder %s491, %s493
      %p497 = scmp.eq.s32.totalorder %s28, 0
      %p498 = por %p496, %p497
      %p499 = scmp.ne.s32.totalorder %s491, %s493
      %p500 = scmp.eq.s32.totalorder %s33, 3
      %p501 = por %p499, %p500
      %p502 = scmp.ne.s32.totalorder %s493, %s494
      %p503 = scmp.eq.s32.totalorder %s33, 0
      %p504 = por %p502, %p503
      %p505 = scmp.ne.s32.totalorder %s493, %s494
      %p506 = scmp.eq.s32.totalorder %s34, 3
      %p507 = por %p505, %p506
      %p509 = scmp.ne.s32.totalorder %s494, %s508
      %p510 = scmp.eq.s32.totalorder %s34, 0
      %p511 = por %p509, %p510
      %s512 = ssub.s32 %s35, %s47
      %p513 = scmp.eq.s32.totalorder %s512, 0
      %s515 = sadd.s32 %s514, 1
      %s516 = scalar_select %p513, %s514, %s515
      %p519 = pneg %p513
      %p520 = scmp.eq.s32.totalorder %s28, 3
      %p521 = por %p519, %p520
      %p522 = scmp.ne.s32.totalorder %s514, %s517
      %p523 = scmp.eq.s32.totalorder %s28, 0
      %p524 = por %p522, %p523
      %p525 = scmp.ne.s32.totalorder %s514, %s517
      %p526 = scmp.eq.s32.totalorder %s33, 3
      %p527 = por %p525, %p526
      %p528 = scmp.ne.s32.totalorder %s517, %s518
      %p529 = scmp.eq.s32.totalorder %s33, 0
      %p530 = por %p528, %p529
      %p531 = scmp.ne.s32.totalorder %s517, %s518
      %p532 = scmp.eq.s32.totalorder %s34, 3
      %p533 = por %p531, %p532
      %p535 = scmp.ne.s32.totalorder %s518, %s534
      %p536 = scmp.eq.s32.totalorder %s34, 0
      %p537 = por %p535, %p536
      %p538 = scmp.le.s32.totalorder 1, %s28
      %p539 = scmp.lt.s32.totalorder %s28, 5
      %p540 = pnand %p538, %p539
      %p541 = pneg %p540
      // Predicated region
      $region9: #{vit_forward.1} parent=5 // pred_check
        _
      $region10: #{vit_forward.1} parent=5 // pred_check_branch
        %543 = sbr.rel (%p540) target = $region12
      $region11: #{vit_forward.1} parent=5 // pred_region
        %s544 = ssub.s32 %s28, 1
        // Predicated region
        $region13: #{vit_forward.1} parent=11 // pred_check
          %p545 = pneg %p87
        $region14: #{vit_forward.1} parent=11 // pred_check_branch
          %547 = sbr.rel (%p545) target = $region16
        $region15: #{vit_forward.1} parent=11 // pred_region
          _
        $region16: #{vit_forward.1} parent=11 // pred_fallthru
          _
        // Predicated region
        $region17: #{vit_forward.1} parent=11 // pred_check
          %p548 = pneg %p108
        $region18: #{vit_forward.1} parent=11 // pred_check_branch
          %550 = sbr.rel (%p548) target = $region20
        $region19: #{vit_forward.1} parent=11 // pred_region
          _
        $region20: #{vit_forward.1} parent=11 // pred_fallthru
          _
        // Predicated region
        $region21: #{vit_forward.1} parent=11 // pred_check
          %p551 = pneg %p441
        $region22: #{vit_forward.1} parent=11 // pred_check_branch
          %553 = sbr.rel (%p551) target = $region24
        $region23: #{vit_forward.1} parent=11 // pred_region
          _
        $region24: #{vit_forward.1} parent=11 // pred_fallthru
          _
        // Predicated region
        $region25: #{vit_forward.1} parent=11 // pred_check
          %p554 = pneg %p462
        $region26: #{vit_forward.1} parent=11 // pred_check_branch
          %556 = sbr.rel (%p554) target = $region28
        $region27: #{vit_forward.1} parent=11 // pred_region
          _
        $region28: #{vit_forward.1} parent=11 // pred_fallthru
          _
        // Predicated region
        $region29: #{vit_forward.1} parent=11 // pred_check
          %p557 = pneg %p483
        $region30: #{vit_forward.1} parent=11 // pred_check_branch
          %559 = sbr.rel (%p557) target = $region32
        $region31: #{vit_forward.1} parent=11 // pred_region
          _
        $region32: #{vit_forward.1} parent=11 // pred_fallthru
          _
        // Predicated region
        $region33: #{vit_forward.1} parent=11 // pred_check
          %p560 = pneg %p504
        $region34: #{vit_forward.1} parent=11 // pred_check_branch
          %562 = sbr.rel (%p560) target = $region36
        $region35: #{vit_forward.1} parent=11 // pred_region
          _
        $region36: #{vit_forward.1} parent=11 // pred_fallthru
          _
      $region12: #{vit_forward.1} parent=5 // pred_fallthru
        _
      %p563 = scmp.lt.s32.totalorder %s28, 4
      // Predicated region
      $region37: #{vit_forward.1} parent=5 // pred_check
        %p564 = pneg %p563
      $region38: #{vit_forward.1} parent=5 // pred_check_branch
        %566 = sbr.rel (%p564) target = $region40
      $region39: #{vit_forward.1} parent=5 // pred_region
        // Predicated region
        $region41: #{vit_forward.1} parent=39 // pred_check
          %p567 = pneg %p60
        $region42: #{vit_forward.1} parent=39 // pred_check_branch
          %569 = sbr.rel (%p567) target = $region44
        $region43: #{vit_forward.1} parent=39 // pred_region
          %s570 = smul.u32 16, %s35
          %p571 = scmp.lt.s32.totalorder %s570, 31
          %s572 = scalar_select %p571, %s570, 31
          %s573 = smul.addr %s572, 8
          %s574 = scalar_lea.vmem %s0, %s573
          %s575 = smul.u32 16, %s35
        $region44: #{vit_forward.1} parent=39 // pred_fallthru
          _
        // Predicated region
        $region45: #{vit_forward.1} parent=39 // pred_check
          %p576 = pneg %p128
        $region46: #{vit_forward.1} parent=39 // pred_check_branch
          %578 = sbr.rel (%p576) target = $region48
        $region47: #{vit_forward.1} parent=39 // pred_region
          %p579 = scmp.lt.s32.totalorder %s36, 1
          %s580 = scalar_select %p579, %s36, 1
          %s581 = scalar_lea.vmem %s3, %s580
        $region48: #{vit_forward.1} parent=39 // pred_fallthru
          _
        // Predicated region
        $region49: #{vit_forward.1} parent=39 // pred_check
          %p582 = pneg %p154
        $region50: #{vit_forward.1} parent=39 // pred_check_branch
          %584 = sbr.rel (%p582) target = $region52
        $region51: #{vit_forward.1} parent=39 // pred_region
          %p585 = scmp.lt.s32.totalorder %s36, 1
          %s586 = scalar_select %p585, %s36, 1
          %s587 = scalar_lea.vmem %s4, %s586
        $region52: #{vit_forward.1} parent=39 // pred_fallthru
          _
        // Predicated region
        $region53: #{vit_forward.1} parent=39 // pred_check
          %p588 = pneg %p180
        $region54: #{vit_forward.1} parent=39 // pred_check_branch
          %590 = sbr.rel (%p588) target = $region56
        $region55: #{vit_forward.1} parent=39 // pred_region
          %s591 = smul.u32 6, %s36
          %p592 = scmp.lt.s32.totalorder %s591, 11
          %s593 = scalar_select %p592, %s591, 11
          %s594 = smul.addr %s593, 4
          %s595 = smul.addr %s594, 4
          %s596 = scalar_lea.vmem %s5, %s595
          %s597 = smul.u32 6, %s36
        $region56: #{vit_forward.1} parent=39 // pred_fallthru
          _
        // Predicated region
        $region57: #{vit_forward.1} parent=39 // pred_check
          %p598 = pneg %p206
        $region58: #{vit_forward.1} parent=39 // pred_check_branch
          %600 = sbr.rel (%p598) target = $region60
        $region59: #{vit_forward.1} parent=39 // pred_region
          %s601 = smul.u32 6, %s36
          %p602 = scmp.lt.s32.totalorder %s601, 11
          %s603 = scalar_select %p602, %s601, 11
          %s604 = scalar_lea.vmem %s6, %s603
          %s605 = smul.u32 6, %s36
        $region60: #{vit_forward.1} parent=39 // pred_fallthru
          _
        // Predicated region
        $region61: #{vit_forward.1} parent=39 // pred_check
          %p606 = pneg %p232
        $region62: #{vit_forward.1} parent=39 // pred_check_branch
          %608 = sbr.rel (%p606) target = $region64
        $region63: #{vit_forward.1} parent=39 // pred_region
          %p609 = scmp.lt.s32.totalorder %s36, 1
          %s610 = scalar_select %p609, %s36, 1
          %s611 = smul.addr %s610, 4
          %s612 = smul.addr %s611, 4
          %s613 = scalar_lea.vmem %s7, %s612
        $region64: #{vit_forward.1} parent=39 // pred_fallthru
          _
        // Predicated region
        $region65: #{vit_forward.1} parent=39 // pred_check
          %p614 = pneg %p258
        $region66: #{vit_forward.1} parent=39 // pred_check_branch
          %616 = sbr.rel (%p614) target = $region68
        $region67: #{vit_forward.1} parent=39 // pred_region
          %p617 = scmp.lt.s32.totalorder %s36, 1
          %s618 = scalar_select %p617, %s36, 1
          %s619 = scalar_lea.vmem %s8, %s618
        $region68: #{vit_forward.1} parent=39 // pred_fallthru
          _
        // Predicated region
        $region69: #{vit_forward.1} parent=39 // pred_check
          %p620 = pneg %p284
        $region70: #{vit_forward.1} parent=39 // pred_check_branch
          %622 = sbr.rel (%p620) target = $region72
        $region71: #{vit_forward.1} parent=39 // pred_region
          %p623 = scmp.lt.s32.totalorder %s36, 1
          %s624 = scalar_select %p623, %s36, 1
          %s625 = scalar_lea.vmem %s9, %s624
        $region72: #{vit_forward.1} parent=39 // pred_fallthru
          _
        // Predicated region
        $region73: #{vit_forward.1} parent=39 // pred_check
          %p626 = pneg %p310
        $region74: #{vit_forward.1} parent=39 // pred_check_branch
          %628 = sbr.rel (%p626) target = $region76
        $region75: #{vit_forward.1} parent=39 // pred_region
          %p629 = scmp.lt.s32.totalorder %s36, 1
          %s630 = scalar_select %p629, %s36, 1
          %s631 = scalar_lea.vmem %s10, %s630
        $region76: #{vit_forward.1} parent=39 // pred_fallthru
          _
        // Predicated region
        $region77: #{vit_forward.1} parent=39 // pred_check
          %p632 = pneg %p336
        $region78: #{vit_forward.1} parent=39 // pred_check_branch
          %634 = sbr.rel (%p632) target = $region80
        $region79: #{vit_forward.1} parent=39 // pred_region
          %p635 = scmp.lt.s32.totalorder %s36, 1
          %s636 = scalar_select %p635, %s36, 1
          %s637 = smul.addr %s636, 4
          %s638 = smul.addr %s637, 4
          %s639 = scalar_lea.vmem %s11, %s638
        $region80: #{vit_forward.1} parent=39 // pred_fallthru
          _
        // Predicated region
        $region81: #{vit_forward.1} parent=39 // pred_check
          %p640 = pneg %p362
        $region82: #{vit_forward.1} parent=39 // pred_check_branch
          %642 = sbr.rel (%p640) target = $region84
        $region83: #{vit_forward.1} parent=39 // pred_region
          %p643 = scmp.lt.s32.totalorder %s36, 1
          %s644 = scalar_select %p643, %s36, 1
          %s645 = scalar_lea.vmem %s12, %s644
        $region84: #{vit_forward.1} parent=39 // pred_fallthru
          _
        // Predicated region
        $region85: #{vit_forward.1} parent=39 // pred_check
          %p646 = pneg %p388
        $region86: #{vit_forward.1} parent=39 // pred_check_branch
          %648 = sbr.rel (%p646) target = $region88
        $region87: #{vit_forward.1} parent=39 // pred_region
          %p649 = scmp.lt.s32.totalorder %s36, 1
          %s650 = scalar_select %p649, %s36, 1
          %s651 = smul.addr %s650, 16
          %s652 = smul.addr %s651, 4
          %s653 = scalar_lea.vmem %s13, %s652
        $region88: #{vit_forward.1} parent=39 // pred_fallthru
          _
        // Predicated region
        $region89: #{vit_forward.1} parent=39 // pred_check
          %p654 = pneg %p414
        $region90: #{vit_forward.1} parent=39 // pred_check_branch
          %656 = sbr.rel (%p654) target = $region92
        $region91: #{vit_forward.1} parent=39 // pred_region
          %p657 = scmp.lt.s32.totalorder %s36, 1
          %s658 = scalar_select %p657, %s36, 1
          %s659 = scalar_lea.vmem %s14, %s658
        $region92: #{vit_forward.1} parent=39 // pred_fallthru
          _
      $region40: #{vit_forward.1} parent=5 // pred_fallthru
        _
      %p660 = scmp.le.s32.totalorder 1, %s28
      %p661 = scmp.lt.s32.totalorder %s28, 5
      %p662 = pnand %p660, %p661
      %p663 = pneg %p662
      // Predicated region
      $region93: #{vit_forward.1} parent=5 // pred_check
        _
      $region94: #{vit_forward.1} parent=5 // pred_check_branch
        %665 = sbr.rel (%p662) target = $region96
      $region95: #{vit_forward.1} parent=5 // pred_region
        %s666 = ssub.s32 %s28, 1
        %s667 = smul.u32 16, %s37
        %p668 = scmp.lt.s32.totalorder %s667, 31
        %s669 = scalar_select %p668, %s667, 31
        %s670 = smul.addr %s669, 8
        %s671 = scalar_lea.vmem %s0, %s670
        %p672 = pneg %p66
        %p673 = pneg %p63
        %p674 = pneg %p87
        %p675 = pneg %p84
        %p676 = pneg %p108
        %p677 = pneg %p105
        %p678 = scmp.lt.s32.totalorder %s38, 1
        %s679 = scalar_select %p678, %s38, 1
        %s680 = scalar_lea.vmem %s3, %s679
        %p681 = pneg %p134
        %p682 = pneg %p131
        %p683 = scmp.lt.s32.totalorder %s38, 1
        %s684 = scalar_select %p683, %s38, 1
        %s685 = scalar_lea.vmem %s4, %s684
        %p686 = pneg %p160
        %p687 = pneg %p157
        %s688 = smul.u32 6, %s38
        %p689 = scmp.lt.s32.totalorder %s688, 11
        %s690 = scalar_select %p689, %s688, 11
        %s691 = smul.addr %s690, 4
        %s692 = smul.addr %s691, 4
        %s693 = scalar_lea.vmem %s5, %s692
        %p694 = pneg %p186
        %p695 = pneg %p183
        %s696 = smul.u32 6, %s38
        %p697 = scmp.lt.s32.totalorder %s696, 11
        %s698 = scalar_select %p697, %s696, 11
        %s699 = scalar_lea.vmem %s6, %s698
        %p700 = pneg %p212
        %p701 = pneg %p209
        %p702 = scmp.lt.s32.totalorder %s38, 1
        %s703 = scalar_select %p702, %s38, 1
        %s704 = smul.addr %s703, 4
        %s705 = smul.addr %s704, 4
        %s706 = scalar_lea.vmem %s7, %s705
        %p707 = pneg %p238
        %p708 = pneg %p235
        %p709 = scmp.lt.s32.totalorder %s38, 1
        %s710 = scalar_select %p709, %s38, 1
        %s711 = scalar_lea.vmem %s8, %s710
        %p712 = pneg %p264
        %p713 = pneg %p261
        %p714 = scmp.lt.s32.totalorder %s38, 1
        %s715 = scalar_select %p714, %s38, 1
        %s716 = scalar_lea.vmem %s9, %s715
        %p717 = pneg %p290
        %p718 = pneg %p287
        %p719 = scmp.lt.s32.totalorder %s38, 1
        %s720 = scalar_select %p719, %s38, 1
        %s721 = scalar_lea.vmem %s10, %s720
        %p722 = pneg %p316
        %p723 = pneg %p313
        %p724 = scmp.lt.s32.totalorder %s38, 1
        %s725 = scalar_select %p724, %s38, 1
        %s726 = smul.addr %s725, 4
        %s727 = smul.addr %s726, 4
        %s728 = scalar_lea.vmem %s11, %s727
        %p729 = pneg %p342
        %p730 = pneg %p339
        %p731 = scmp.lt.s32.totalorder %s38, 1
        %s732 = scalar_select %p731, %s38, 1
        %s733 = scalar_lea.vmem %s12, %s732
        %p734 = pneg %p368
        %p735 = pneg %p365
        %p736 = scmp.lt.s32.totalorder %s38, 1
        %s737 = scalar_select %p736, %s38, 1
        %s738 = smul.addr %s737, 16
        %s739 = smul.addr %s738, 4
        %s740 = scalar_lea.vmem %s13, %s739
        %p741 = pneg %p394
        %p742 = pneg %p391
        %p743 = scmp.lt.s32.totalorder %s38, 1
        %s744 = scalar_select %p743, %s38, 1
        %s745 = scalar_lea.vmem %s14, %s744
        %p746 = pneg %p420
        %p747 = pneg %p417
        %p748 = pneg %p441
        %p749 = pneg %p438
        %p750 = pneg %p462
        %p751 = pneg %p459
        %p752 = pneg %p483
        %p753 = pneg %p480
        %p754 = pneg %p504
        %p755 = pneg %p501
        %p756 = pneg %p530
        %p757 = pneg %p527
        %s758 = sand.u32 %s517, 1
        %s759 = scalar_lea.sflag [#allocation4], %s758
        %s760 = sand.u32 %s517, 1
        %s761 = smul.addr %s760, 4
        %s762 = scalar_lea.vmem [#allocation3], %s761
        %s763 = smul.u32 16, %s37
        %p764 = scmp.lt.s32.totalorder %s763, 31
        %s765 = scalar_select %p764, %s763, 31
        %s766 = smul.addr %s765, 8
        %s767 = scalar_lea.vmem %s0, %s766
        %s768 = smul.u32 16, %s37
        %p769 = scmp.lt.s32.totalorder %s38, 1
        %s770 = scalar_select %p769, %s38, 1
        %s771 = scalar_lea.vmem %s3, %s770
        %p772 = scmp.lt.s32.totalorder %s38, 1
        %s773 = scalar_select %p772, %s38, 1
        %s774 = scalar_lea.vmem %s4, %s773
        %s775 = smul.u32 6, %s38
        %p776 = scmp.lt.s32.totalorder %s775, 11
        %s777 = scalar_select %p776, %s775, 11
        %s778 = smul.addr %s777, 4
        %s779 = smul.addr %s778, 4
        %s780 = scalar_lea.vmem %s5, %s779
        %s781 = smul.u32 6, %s38
        %s782 = smul.u32 6, %s38
        %p783 = scmp.lt.s32.totalorder %s782, 11
        %s784 = scalar_select %p783, %s782, 11
        %s785 = scalar_lea.vmem %s6, %s784
        %s786 = smul.u32 6, %s38
        %p787 = scmp.lt.s32.totalorder %s38, 1
        %s788 = scalar_select %p787, %s38, 1
        %s789 = smul.addr %s788, 4
        %s790 = smul.addr %s789, 4
        %s791 = scalar_lea.vmem %s7, %s790
        %p792 = scmp.lt.s32.totalorder %s38, 1
        %s793 = scalar_select %p792, %s38, 1
        %s794 = scalar_lea.vmem %s8, %s793
        %p795 = scmp.lt.s32.totalorder %s38, 1
        %s796 = scalar_select %p795, %s38, 1
        %s797 = scalar_lea.vmem %s9, %s796
        %p798 = scmp.lt.s32.totalorder %s38, 1
        %s799 = scalar_select %p798, %s38, 1
        %s800 = scalar_lea.vmem %s10, %s799
        %p801 = scmp.lt.s32.totalorder %s38, 1
        %s802 = scalar_select %p801, %s38, 1
        %s803 = smul.addr %s802, 4
        %s804 = smul.addr %s803, 4
        %s805 = scalar_lea.vmem %s11, %s804
        %p806 = scmp.lt.s32.totalorder %s38, 1
        %s807 = scalar_select %p806, %s38, 1
        %s808 = scalar_lea.vmem %s12, %s807
        %p809 = scmp.lt.s32.totalorder %s38, 1
        %s810 = scalar_select %p809, %s38, 1
        %s811 = smul.addr %s810, 16
        %s812 = smul.addr %s811, 4
        %s813 = scalar_lea.vmem %s13, %s812
        %p814 = scmp.lt.s32.totalorder %s38, 1
        %s815 = scalar_select %p814, %s38, 1
        %s816 = scalar_lea.vmem %s14, %s815
        %p818 = scmp.eq.s32.totalorder %s38, 0
        // Predicated region
        $region97: #{vit_forward.1} parent=95 // pred_check
          %p819 = pneg %p818
        $region98: #{vit_forward.1} parent=95 // pred_check_branch
          %821 = sbr.rel (%p819) target = $region100
        $region99: #{vit_forward.1} parent=95 // pred_region
          %v822 = vld [vmem:[%s767] sm:$0xff]
          %v823 = vld [vmem:[%s767 + $0x8] sm:$0xff]
          %v824 = vld [vmem:[%s767 + $0x10] sm:$0xff]
          %v825 = vld [vmem:[%s767 + $0x18] sm:$0xff]
          %v826 = vld [vmem:[%s767 + $0x20] sm:$0xff]
          %v827 = vld [vmem:[%s767 + $0x28] sm:$0xff]
          %v828 = vld [vmem:[%s767 + $0x30] sm:$0xff]
          %v829 = vld [vmem:[%s767 + $0x38] sm:$0xff]
          %v830 = vld [vmem:[%s767 + $0x40] sm:$0xff]
          %v831 = vld [vmem:[%s767 + $0x48] sm:$0xff]
          %v832 = vld [vmem:[%s767 + $0x50] sm:$0xff]
          %v833 = vld [vmem:[%s767 + $0x58] sm:$0xff]
          %v834 = vld [vmem:[%s767 + $0x60] sm:$0xff]
          %v835 = vld [vmem:[%s767 + $0x68] sm:$0xff]
          %v836 = vld [vmem:[%s767 + $0x70] sm:$0xff]
          %v837 = vld [vmem:[%s767 + $0x78] sm:$0xff]
          %v838 = vpack.c.bf16 %v823, %v822
          %v839 = vpack.c.bf16 %v825, %v824
          %v840 = vpack.c.bf16 %v827, %v826
          %v841 = vpack.c.bf16 %v829, %v828
          %v842 = vpack.c.bf16 %v831, %v830
          %v843 = vpack.c.bf16 %v833, %v832
          %v844 = vpack.c.bf16 %v835, %v834
          %v845 = vpack.c.bf16 %v837, %v836
          %v846 = vld [vmem:[%s2] sm:$0xf]
          %v847 = vld [vmem:[%s2 + $0x4] sm:$0xf]
          %v848 = vld [vmem:[%s2 + $0x8] sm:$0xf]
          %v849 = vld [vmem:[%s2 + $0xc] sm:$0xf]
          %v850 = vld [vmem:[%s2 + $0x10] sm:$0xf]
          %v851 = vld [vmem:[%s2 + $0x14] sm:$0xf]
          %v852 = vld [vmem:[%s1] sm:$0xff]
          %v853 = vld [vmem:[%s1 + $0x8] sm:$0xff]
          %v854 = vld [vmem:[%s1 + $0x10] sm:$0xff]
          %v855 = vld [vmem:[%s1 + $0x18] sm:$0xff]
          %v856 = vld [vmem:[%s1 + $0x20] sm:$0xff]
          %v857 = vld [vmem:[%s1 + $0x28] sm:$0xff]
          %v858 = vld [vmem:[%s1 + $0x30] sm:$0xff]
          %v859 = vld [vmem:[%s1 + $0x38] sm:$0xff]
          %v860 = vld [vmem:[%s1 + $0x40] sm:$0xff]
          %v861 = vld [vmem:[%s1 + $0x48] sm:$0xff]
          %v862 = vld [vmem:[%s1 + $0x50] sm:$0xff]
          %v863 = vld [vmem:[%s1 + $0x58] sm:$0xff]
          %v864 = vld [vmem:[%s1 + $0x60] sm:$0xff]
          %v865 = vld [vmem:[%s1 + $0x68] sm:$0xff]
          %v866 = vld [vmem:[%s1 + $0x70] sm:$0xff]
          %v867 = vld [vmem:[%s1 + $0x78] sm:$0xff]
          %v874 = vunpack.c.l.b16 %v846
          %v875 = vunpack.c.l.b16 %v847
          %v876 = vunpack.c.l.b16 %v848
          %v877 = vunpack.c.l.b16 %v849
          %v878 = vunpack.c.l.b16 %v850
          %v879 = vunpack.c.l.b16 %v851
          %v880 = vpack.c.b16 %v875, %v874
          %v881 = vpack.c.b16 %v877, %v876
          %v882 = vpack.c.b16 %v879, %v878
          %vm886 = vcmask 392192
          %v888 = vsel %vm886, %v838, 0
          %v891 = vsel %vm886, %v839, 0
          %v894 = vsel %vm886, %v840, 0
          %v897 = vsel %vm886, %v841, 0
          %v900 = vsel %vm886, %v842, 0
          %v903 = vsel %vm886, %v843, 0
          %v906 = vsel %vm886, %v844, 0
          %v909 = vsel %vm886, %v845, 0
          %911 = vmatpush.bf16.msra.mxu0 0
          %912 = vmatpush.bf16.msra.mxu0 0
          %913 = vmatpush.bf16.msra.mxu0 0
          %914 = vmatpush.bf16.msra.mxu0 0
          %915 = vmatpush.bf16.msra.mxu0 0
          %916 = vmatpush.bf16.msra.mxu0 %v882
          %917 = vmatpush.bf16.msra.mxu0 %v881
          %918 = vmatpush.bf16.msra.mxu0 %v880
          %919 = vmatmul.bf16.gmra.mxu0 %v888
          %v920 = vpop.f32.mrf.mxu0
          %v921 = vadd.f32 %v852, %v920
          %v922 = vpop.f32.mrf.mxu0
          %v923 = vadd.f32 %v853, %v922
          %924 = vmatmul.bf16.gmra.mxu0 %v891
          %v925 = vpop.f32.mrf.mxu0
          %v926 = vadd.f32 %v854, %v925
          %v927 = vpop.f32.mrf.mxu0
          %v928 = vadd.f32 %v855, %v927
          %929 = vmatmul.bf16.gmra.mxu0 %v894
          %v930 = vpop.f32.mrf.mxu0
          %v931 = vadd.f32 %v856, %v930
          %v932 = vpop.f32.mrf.mxu0
          %v933 = vadd.f32 %v857, %v932
          %934 = vmatmul.bf16.gmra.mxu0 %v897
          %v935 = vpop.f32.mrf.mxu0
          %v936 = vadd.f32 %v858, %v935
          %v937 = vpop.f32.mrf.mxu0
          %v938 = vadd.f32 %v859, %v937
          %939 = vmatmul.bf16.gmra.mxu0 %v900
          %v940 = vpop.f32.mrf.mxu0
          %v941 = vadd.f32 %v860, %v940
          %v942 = vpop.f32.mrf.mxu0
          %v943 = vadd.f32 %v861, %v942
          %944 = vmatmul.bf16.gmra.mxu0 %v903
          %v945 = vpop.f32.mrf.mxu0
          %v946 = vadd.f32 %v862, %v945
          %v947 = vpop.f32.mrf.mxu0
          %v948 = vadd.f32 %v863, %v947
          %949 = vmatmul.bf16.gmra.mxu0 %v906
          %v950 = vpop.f32.mrf.mxu0
          %v951 = vadd.f32 %v864, %v950
          %v952 = vpop.f32.mrf.mxu0
          %v953 = vadd.f32 %v865, %v952
          %954 = vmatmul.bf16.gmra.mxu0 %v909
          %v955 = vpop.f32.mrf.mxu0
          %v956 = vadd.f32 %v866, %v955
          %v957 = vpop.f32.mrf.mxu0
          %v958 = vadd.f32 %v867, %v957
          %959 = vdwg.mxu0
          %vm960 = vcmask 261120
          %961 = vst.msk [vmem:[#allocation2] sm:$0xff] %vm960, %v921
          %962 = vst.msk [vmem:[#allocation2 + $0x8] sm:$0xff] %vm960, %v923
          %963 = vst.msk [vmem:[#allocation2 + $0x10] sm:$0xff] %vm960, %v926
          %964 = vst.msk [vmem:[#allocation2 + $0x18] sm:$0xff] %vm960, %v928
          %965 = vst.msk [vmem:[#allocation2 + $0x20] sm:$0xff] %vm960, %v931
          %966 = vst.msk [vmem:[#allocation2 + $0x28] sm:$0xff] %vm960, %v933
          %967 = vst.msk [vmem:[#allocation2 + $0x30] sm:$0xff] %vm960, %v936
          %968 = vst.msk [vmem:[#allocation2 + $0x38] sm:$0xff] %vm960, %v938
          %969 = vst.msk [vmem:[#allocation2 + $0x40] sm:$0xff] %vm960, %v941
          %970 = vst.msk [vmem:[#allocation2 + $0x48] sm:$0xff] %vm960, %v943
          %971 = vst.msk [vmem:[#allocation2 + $0x50] sm:$0xff] %vm960, %v946
          %972 = vst.msk [vmem:[#allocation2 + $0x58] sm:$0xff] %vm960, %v948
          %973 = vst.msk [vmem:[#allocation2 + $0x60] sm:$0xff] %vm960, %v951
          %974 = vst.msk [vmem:[#allocation2 + $0x68] sm:$0xff] %vm960, %v953
          %975 = vst.msk [vmem:[#allocation2 + $0x70] sm:$0xff] %vm960, %v956
          %976 = vst.msk [vmem:[#allocation2 + $0x78] sm:$0xff] %vm960, %v958
        $region100: #{vit_forward.1} parent=95 // pred_fallthru
          _
        %v977 = vld [vmem:[#allocation2] sm:$0xff]
        %v978 = vld [vmem:[#allocation2 + $0x8] sm:$0xff]
        %v979 = vld [vmem:[#allocation2 + $0x10] sm:$0xff]
        %v980 = vld [vmem:[#allocation2 + $0x18] sm:$0xff]
        %v981 = vld [vmem:[#allocation2 + $0x20] sm:$0xff]
        %v982 = vld [vmem:[#allocation2 + $0x28] sm:$0xff]
        %v983 = vld [vmem:[#allocation2 + $0x30] sm:$0xff]
        %v984 = vld [vmem:[#allocation2 + $0x38] sm:$0xff]
        %v985 = vld [vmem:[#allocation2 + $0x40] sm:$0xff]
        %v986 = vld [vmem:[#allocation2 + $0x48] sm:$0xff]
        %v987 = vld [vmem:[#allocation2 + $0x50] sm:$0xff]
        %v988 = vld [vmem:[#allocation2 + $0x58] sm:$0xff]
        %v989 = vld [vmem:[#allocation2 + $0x60] sm:$0xff]
        %v990 = vld [vmem:[#allocation2 + $0x68] sm:$0xff]
        %v991 = vld [vmem:[#allocation2 + $0x70] sm:$0xff]
        %v992 = vld [vmem:[#allocation2 + $0x78] sm:$0xff]
        %v993 = vld [vmem:[%s771] sm:$0x1]
        %v994 = vld [vmem:[%s774] sm:$0x1]
        %vm995 = vcmask 261120
        %v996 = vsel %vm995, %v977, 0.0
        %997 = vadd.xlane.f32.xlu0 %v996
        %v998 = vpop.xlane.xlu0 %997
        %v999 = vsel %vm995, %v978, 0.0
        %1000 = vadd.xlane.f32.xlu0 %v999
        %v1001 = vpop.xlane.xlu0 %1000
        %v1002 = vsel %vm995, %v979, 0.0
        %1003 = vadd.xlane.f32.xlu0 %v1002
        %v1004 = vpop.xlane.xlu0 %1003
        %v1005 = vsel %vm995, %v980, 0.0
        %1006 = vadd.xlane.f32.xlu0 %v1005
        %v1007 = vpop.xlane.xlu0 %1006
        %v1008 = vsel %vm995, %v981, 0.0
        %1009 = vadd.xlane.f32.xlu0 %v1008
        %v1010 = vpop.xlane.xlu0 %1009
        %v1011 = vsel %vm995, %v982, 0.0
        %1012 = vadd.xlane.f32.xlu0 %v1011
        %v1013 = vpop.xlane.xlu0 %1012
        %v1014 = vsel %vm995, %v983, 0.0
        %1015 = vadd.xlane.f32.xlu0 %v1014
        %v1016 = vpop.xlane.xlu0 %1015
        %v1017 = vsel %vm995, %v984, 0.0
        %1018 = vadd.xlane.f32.xlu0 %v1017
        %v1019 = vpop.xlane.xlu0 %1018
        %v1020 = vsel %vm995, %v985, 0.0
        %1021 = vadd.xlane.f32.xlu0 %v1020
        %v1022 = vpop.xlane.xlu0 %1021
        %v1023 = vsel %vm995, %v986, 0.0
        %1024 = vadd.xlane.f32.xlu0 %v1023
        %v1025 = vpop.xlane.xlu0 %1024
        %v1026 = vsel %vm995, %v987, 0.0
        %1027 = vadd.xlane.f32.xlu0 %v1026
        %v1028 = vpop.xlane.xlu0 %1027
        %v1029 = vsel %vm995, %v988, 0.0
        %1030 = vadd.xlane.f32.xlu0 %v1029
        %v1031 = vpop.xlane.xlu0 %1030
        %v1032 = vsel %vm995, %v989, 0.0
        %1033 = vadd.xlane.f32.xlu0 %v1032
        %v1034 = vpop.xlane.xlu0 %1033
        %v1035 = vsel %vm995, %v990, 0.0
        %1036 = vadd.xlane.f32.xlu0 %v1035
        %v1037 = vpop.xlane.xlu0 %1036
        %v1038 = vsel %vm995, %v991, 0.0
        %1039 = vadd.xlane.f32.xlu0 %v1038
        %v1040 = vpop.xlane.xlu0 %1039
        %v1041 = vsel %vm995, %v992, 0.0
        %1042 = vadd.xlane.f32.xlu0 %v1041
        %v1043 = vpop.xlane.xlu0 %1042
        %v1044 = vrcp.pop 32.0
        %v1045 = vmul.f32 32.0, %v1044
        %v1046 = vsub.f32 1.0, %v1045
        %v1047 = vmul.f32 %v1044, %v1046
        %v1048 = vadd.f32 %v1044, %v1047
        %vm1049 = vweird.f32 %v1044
        %v1050 = vsel %vm1049, %v1044, %v1048
        %v1051 = vmul.f32 %v998, %v1050
        %v1052 = vmul.f32 %v1001, %v1050
        %v1053 = vmul.f32 %v1004, %v1050
        %v1054 = vmul.f32 %v1007, %v1050
        %v1055 = vmul.f32 %v1010, %v1050
        %v1056 = vmul.f32 %v1013, %v1050
        %v1057 = vmul.f32 %v1016, %v1050
        %v1058 = vmul.f32 %v1019, %v1050
        %v1059 = vmul.f32 %v1022, %v1050
        %v1060 = vmul.f32 %v1025, %v1050
        %v1061 = vmul.f32 %v1028, %v1050
        %v1062 = vmul.f32 %v1031, %v1050
        %v1063 = vmul.f32 %v1034, %v1050
        %v1064 = vmul.f32 %v1037, %v1050
        %v1065 = vmul.f32 %v1040, %v1050
        %v1066 = vmul.f32 %v1043, %v1050
        %v1067 = vsub.f32 %v977, %v1051
        %v1068 = vsub.f32 %v978, %v1052
        %v1069 = vsub.f32 %v979, %v1053
        %v1070 = vsub.f32 %v980, %v1054
        %v1071 = vsub.f32 %v981, %v1055
        %v1072 = vsub.f32 %v982, %v1056
        %v1073 = vsub.f32 %v983, %v1057
        %v1074 = vsub.f32 %v984, %v1058
        %v1075 = vsub.f32 %v985, %v1059
        %v1076 = vsub.f32 %v986, %v1060
        %v1077 = vsub.f32 %v987, %v1061
        %v1078 = vsub.f32 %v988, %v1062
        %v1079 = vsub.f32 %v989, %v1063
        %v1080 = vsub.f32 %v990, %v1064
        %v1081 = vsub.f32 %v991, %v1065
        %v1082 = vsub.f32 %v992, %v1066
        %v1083 = vmul.f32 %v1067, %v1067
        %v1084 = vmul.f32 %v1068, %v1068
        %v1085 = vmul.f32 %v1069, %v1069
        %v1086 = vmul.f32 %v1070, %v1070
        %v1087 = vmul.f32 %v1071, %v1071
        %v1088 = vmul.f32 %v1072, %v1072
        %v1089 = vmul.f32 %v1073, %v1073
        %v1090 = vmul.f32 %v1074, %v1074
        %v1091 = vmul.f32 %v1075, %v1075
        %v1092 = vmul.f32 %v1076, %v1076
        %v1093 = vmul.f32 %v1077, %v1077
        %v1094 = vmul.f32 %v1078, %v1078
        %v1095 = vmul.f32 %v1079, %v1079
        %v1096 = vmul.f32 %v1080, %v1080
        %v1097 = vmul.f32 %v1081, %v1081
        %v1098 = vmul.f32 %v1082, %v1082
        %v1099 = vsel %vm995, %v1083, 0.0
        %1100 = vadd.xlane.f32.xlu0 %v1099
        %v1101 = vpop.xlane.xlu0 %1100
        %v1102 = vsel %vm995, %v1084, 0.0
        %1103 = vadd.xlane.f32.xlu0 %v1102
        %v1104 = vpop.xlane.xlu0 %1103
        %v1105 = vsel %vm995, %v1085, 0.0
        %1106 = vadd.xlane.f32.xlu0 %v1105
        %v1107 = vpop.xlane.xlu0 %1106
        %v1108 = vsel %vm995, %v1086, 0.0
        %1109 = vadd.xlane.f32.xlu0 %v1108
        %v1110 = vpop.xlane.xlu0 %1109
        %v1111 = vsel %vm995, %v1087, 0.0
        %1112 = vadd.xlane.f32.xlu0 %v1111
        %v1113 = vpop.xlane.xlu0 %1112
        %v1114 = vsel %vm995, %v1088, 0.0
        %1115 = vadd.xlane.f32.xlu0 %v1114
        %v1116 = vpop.xlane.xlu0 %1115
        %v1117 = vsel %vm995, %v1089, 0.0
        %1118 = vadd.xlane.f32.xlu0 %v1117
        %v1119 = vpop.xlane.xlu0 %1118
        %v1120 = vsel %vm995, %v1090, 0.0
        %1121 = vadd.xlane.f32.xlu0 %v1120
        %v1122 = vpop.xlane.xlu0 %1121
        %v1123 = vsel %vm995, %v1091, 0.0
        %1124 = vadd.xlane.f32.xlu0 %v1123
        %v1125 = vpop.xlane.xlu0 %1124
        %v1126 = vsel %vm995, %v1092, 0.0
        %1127 = vadd.xlane.f32.xlu0 %v1126
        %v1128 = vpop.xlane.xlu0 %1127
        %v1129 = vsel %vm995, %v1093, 0.0
        %1130 = vadd.xlane.f32.xlu0 %v1129
        %v1131 = vpop.xlane.xlu0 %1130
        %v1132 = vsel %vm995, %v1094, 0.0
        %1133 = vadd.xlane.f32.xlu0 %v1132
        %v1134 = vpop.xlane.xlu0 %1133
        %v1135 = vsel %vm995, %v1095, 0.0
        %1136 = vadd.xlane.f32.xlu0 %v1135
        %v1137 = vpop.xlane.xlu0 %1136
        %v1138 = vsel %vm995, %v1096, 0.0
        %1139 = vadd.xlane.f32.xlu0 %v1138
        %v1140 = vpop.xlane.xlu0 %1139
        %v1141 = vsel %vm995, %v1097, 0.0
        %1142 = vadd.xlane.f32.xlu0 %v1141
        %v1143 = vpop.xlane.xlu0 %1142
        %v1144 = vsel %vm995, %v1098, 0.0
        %1145 = vadd.xlane.f32.xlu0 %v1144
        %v1146 = vpop.xlane.xlu0 %1145
        %v1147 = vmul.f32 %v1101, %v1050
        %v1148 = vmul.f32 %v1104, %v1050
        %v1149 = vmul.f32 %v1107, %v1050
        %v1150 = vmul.f32 %v1110, %v1050
        %v1151 = vmul.f32 %v1113, %v1050
        %v1152 = vmul.f32 %v1116, %v1050
        %v1153 = vmul.f32 %v1119, %v1050
        %v1154 = vmul.f32 %v1122, %v1050
        %v1155 = vmul.f32 %v1125, %v1050
        %v1156 = vmul.f32 %v1128, %v1050
        %v1157 = vmul.f32 %v1131, %v1050
        %v1158 = vmul.f32 %v1134, %v1050
        %v1159 = vmul.f32 %v1137, %v1050
        %v1160 = vmul.f32 %v1140, %v1050
        %v1161 = vmul.f32 %v1143, %v1050
        %v1162 = vmul.f32 %v1146, %v1050
        %v1163 = vadd.f32 %v1147, 1e-12
        %v1164 = vadd.f32 %v1148, 1e-12
        %v1165 = vadd.f32 %v1149, 1e-12
        %v1166 = vadd.f32 %v1150, 1e-12
        %v1167 = vadd.f32 %v1151, 1e-12
        %v1168 = vadd.f32 %v1152, 1e-12
        %v1169 = vadd.f32 %v1153, 1e-12
        %v1170 = vadd.f32 %v1154, 1e-12
        %v1171 = vadd.f32 %v1155, 1e-12
        %v1172 = vadd.f32 %v1156, 1e-12
        %v1173 = vadd.f32 %v1157, 1e-12
        %v1174 = vadd.f32 %v1158, 1e-12
        %v1175 = vadd.f32 %v1159, 1e-12
        %v1176 = vadd.f32 %v1160, 1e-12
        %v1177 = vadd.f32 %v1161, 1e-12
        %v1178 = vadd.f32 %v1162, 1e-12
        %v1179 = vrsqrt.pop %v1163
        %v1180 = vmul.f32 %v1179, %v1163
        %v1181 = vmul.f32 %v1180, %v1179
        %v1182 = vmul.f32 0.5, %v1181
        %v1183 = vsub.f32 1.5, %v1182
        %v1184 = vmul.f32 %v1179, %v1183
        %vm1185 = vweird.f32 %v1163
        %vm1186 = vweird.f32 %v1179
        %vm1187 = vmor %vm1185, %vm1186
        %v1188 = vsel %vm1187, %v1179, %v1184
        %v1189 = vrsqrt.pop %v1164
        %v1190 = vmul.f32 %v1189, %v1164
        %v1191 = vmul.f32 %v1190, %v1189
        %v1192 = vmul.f32 0.5, %v1191
        %v1193 = vsub.f32 1.5, %v1192
        %v1194 = vmul.f32 %v1189, %v1193
        %vm1195 = vweird.f32 %v1164
        %vm1196 = vweird.f32 %v1189
        %vm1197 = vmor %vm1195, %vm1196
        %v1198 = vsel %vm1197, %v1189, %v1194
        %v1199 = vrsqrt.pop %v1165
        %v1200 = vmul.f32 %v1199, %v1165
        %v1201 = vmul.f32 %v1200, %v1199
        %v1202 = vmul.f32 0.5, %v1201
        %v1203 = vsub.f32 1.5, %v1202
        %v1204 = vmul.f32 %v1199, %v1203
        %vm1205 = vweird.f32 %v1165
        %vm1206 = vweird.f32 %v1199
        %vm1207 = vmor %vm1205, %vm1206
        %v1208 = vsel %vm1207, %v1199, %v1204
        %v1209 = vrsqrt.pop %v1166
        %v1210 = vmul.f32 %v1209, %v1166
        %v1211 = vmul.f32 %v1210, %v1209
        %v1212 = vmul.f32 0.5, %v1211
        %v1213 = vsub.f32 1.5, %v1212
        %v1214 = vmul.f32 %v1209, %v1213
        %vm1215 = vweird.f32 %v1166
        %vm1216 = vweird.f32 %v1209
        %vm1217 = vmor %vm1215, %vm1216
        %v1218 = vsel %vm1217, %v1209, %v1214
        %v1219 = vrsqrt.pop %v1167
        %v1220 = vmul.f32 %v1219, %v1167
        %v1221 = vmul.f32 %v1220, %v1219
        %v1222 = vmul.f32 0.5, %v1221
        %v1223 = vsub.f32 1.5, %v1222
        %v1224 = vmul.f32 %v1219, %v1223
        %vm1225 = vweird.f32 %v1167
        %vm1226 = vweird.f32 %v1219
        %vm1227 = vmor %vm1225, %vm1226
        %v1228 = vsel %vm1227, %v1219, %v1224
        %v1229 = vrsqrt.pop %v1168
        %v1230 = vmul.f32 %v1229, %v1168
        %v1231 = vmul.f32 %v1230, %v1229
        %v1232 = vmul.f32 0.5, %v1231
        %v1233 = vsub.f32 1.5, %v1232
        %v1234 = vmul.f32 %v1229, %v1233
        %vm1235 = vweird.f32 %v1168
        %vm1236 = vweird.f32 %v1229
        %vm1237 = vmor %vm1235, %vm1236
        %v1238 = vsel %vm1237, %v1229, %v1234
        %v1239 = vrsqrt.pop %v1169
        %v1240 = vmul.f32 %v1239, %v1169
        %v1241 = vmul.f32 %v1240, %v1239
        %v1242 = vmul.f32 0.5, %v1241
        %v1243 = vsub.f32 1.5, %v1242
        %v1244 = vmul.f32 %v1239, %v1243
        %vm1245 = vweird.f32 %v1169
        %vm1246 = vweird.f32 %v1239
        %vm1247 = vmor %vm1245, %vm1246
        %v1248 = vsel %vm1247, %v1239, %v1244
        %v1249 = vrsqrt.pop %v1170
        %v1250 = vmul.f32 %v1249, %v1170
        %v1251 = vmul.f32 %v1250, %v1249
        %v1252 = vmul.f32 0.5, %v1251
        %v1253 = vsub.f32 1.5, %v1252
        %v1254 = vmul.f32 %v1249, %v1253
        %vm1255 = vweird.f32 %v1170
        %vm1256 = vweird.f32 %v1249
        %vm1257 = vmor %vm1255, %vm1256
        %v1258 = vsel %vm1257, %v1249, %v1254
        %v1259 = vrsqrt.pop %v1171
        %v1260 = vmul.f32 %v1259, %v1171
        %v1261 = vmul.f32 %v1260, %v1259
        %v1262 = vmul.f32 0.5, %v1261
        %v1263 = vsub.f32 1.5, %v1262
        %v1264 = vmul.f32 %v1259, %v1263
        %vm1265 = vweird.f32 %v1171
        %vm1266 = vweird.f32 %v1259
        %vm1267 = vmor %vm1265, %vm1266
        %v1268 = vsel %vm1267, %v1259, %v1264
        %v1269 = vrsqrt.pop %v1172
        %v1270 = vmul.f32 %v1269, %v1172
        %v1271 = vmul.f32 %v1270, %v1269
        %v1272 = vmul.f32 0.5, %v1271
        %v1273 = vsub.f32 1.5, %v1272
        %v1274 = vmul.f32 %v1269, %v1273
        %vm1275 = vweird.f32 %v1172
        %vm1276 = vweird.f32 %v1269
        %vm1277 = vmor %vm1275, %vm1276
        %v1278 = vsel %vm1277, %v1269, %v1274
        %v1279 = vrsqrt.pop %v1173
        %v1280 = vmul.f32 %v1279, %v1173
        %v1281 = vmul.f32 %v1280, %v1279
        %v1282 = vmul.f32 0.5, %v1281
        %v1283 = vsub.f32 1.5, %v1282
        %v1284 = vmul.f32 %v1279, %v1283
        %vm1285 = vweird.f32 %v1173
        %vm1286 = vweird.f32 %v1279
        %vm1287 = vmor %vm1285, %vm1286
        %v1288 = vsel %vm1287, %v1279, %v1284
        %v1289 = vrsqrt.pop %v1174
        %v1290 = vmul.f32 %v1289, %v1174
        %v1291 = vmul.f32 %v1290, %v1289
        %v1292 = vmul.f32 0.5, %v1291
        %v1293 = vsub.f32 1.5, %v1292
        %v1294 = vmul.f32 %v1289, %v1293
        %vm1295 = vweird.f32 %v1174
        %vm1296 = vweird.f32 %v1289
        %vm1297 = vmor %vm1295, %vm1296
        %v1298 = vsel %vm1297, %v1289, %v1294
        %v1299 = vrsqrt.pop %v1175
        %v1300 = vmul.f32 %v1299, %v1175
        %v1301 = vmul.f32 %v1300, %v1299
        %v1302 = vmul.f32 0.5, %v1301
        %v1303 = vsub.f32 1.5, %v1302
        %v1304 = vmul.f32 %v1299, %v1303
        %vm1305 = vweird.f32 %v1175
        %vm1306 = vweird.f32 %v1299
        %vm1307 = vmor %vm1305, %vm1306
        %v1308 = vsel %vm1307, %v1299, %v1304
        %v1309 = vrsqrt.pop %v1176
        %v1310 = vmul.f32 %v1309, %v1176
        %v1311 = vmul.f32 %v1310, %v1309
        %v1312 = vmul.f32 0.5, %v1311
        %v1313 = vsub.f32 1.5, %v1312
        %v1314 = vmul.f32 %v1309, %v1313
        %vm1315 = vweird.f32 %v1176
        %vm1316 = vweird.f32 %v1309
        %vm1317 = vmor %vm1315, %vm1316
        %v1318 = vsel %vm1317, %v1309, %v1314
        %v1319 = vrsqrt.pop %v1177
        %v1320 = vmul.f32 %v1319, %v1177
        %v1321 = vmul.f32 %v1320, %v1319
        %v1322 = vmul.f32 0.5, %v1321
        %v1323 = vsub.f32 1.5, %v1322
        %v1324 = vmul.f32 %v1319, %v1323
        %vm1325 = vweird.f32 %v1177
        %vm1326 = vweird.f32 %v1319
        %vm1327 = vmor %vm1325, %vm1326
        %v1328 = vsel %vm1327, %v1319, %v1324
        %v1329 = vrsqrt.pop %v1178
        %v1330 = vmul.f32 %v1329, %v1178
        %v1331 = vmul.f32 %v1330, %v1329
        %v1332 = vmul.f32 0.5, %v1331
        %v1333 = vsub.f32 1.5, %v1332
        %v1334 = vmul.f32 %v1329, %v1333
        %vm1335 = vweird.f32 %v1178
        %vm1336 = vweird.f32 %v1329
        %vm1337 = vmor %vm1335, %vm1336
        %v1338 = vsel %vm1337, %v1329, %v1334
        %v1339 = vmul.f32 %v1067, %v1188
        %v1340 = vmul.f32 %v1068, %v1198
        %v1341 = vmul.f32 %v1069, %v1208
        %v1342 = vmul.f32 %v1070, %v1218
        %v1343 = vmul.f32 %v1071, %v1228
        %v1344 = vmul.f32 %v1072, %v1238
        %v1345 = vmul.f32 %v1073, %v1248
        %v1346 = vmul.f32 %v1074, %v1258
        %v1347 = vmul.f32 %v1075, %v1268
        %v1348 = vmul.f32 %v1076, %v1278
        %v1349 = vmul.f32 %v1077, %v1288
        %v1350 = vmul.f32 %v1078, %v1298
        %v1351 = vmul.f32 %v1079, %v1308
        %v1352 = vmul.f32 %v1080, %v1318
        %v1353 = vmul.f32 %v1081, %v1328
        %v1354 = vmul.f32 %v1082, %v1338
        %v1356 = vperm.slane %v993, 0
        %v1358 = vmul.f32 %v1339, %v1356
        %v1359 = vmul.f32 %v1340, %v1356
        %v1360 = vmul.f32 %v1341, %v1356
        %v1361 = vmul.f32 %v1342, %v1356
        %v1362 = vmul.f32 %v1343, %v1356
        %v1363 = vmul.f32 %v1344, %v1356
        %v1364 = vmul.f32 %v1345, %v1356
        %v1365 = vmul.f32 %v1346, %v1356
        %v1366 = vmul.f32 %v1347, %v1356
        %v1367 = vmul.f32 %v1348, %v1356
        %v1368 = vmul.f32 %v1349, %v1356
        %v1369 = vmul.f32 %v1350, %v1356
        %v1370 = vmul.f32 %v1351, %v1356
        %v1371 = vmul.f32 %v1352, %v1356
        %v1372 = vmul.f32 %v1353, %v1356
        %v1373 = vmul.f32 %v1354, %v1356
        %v1375 = vperm.slane %v994, 0
        %v1377 = vadd.f32 %v1358, %v1375
        %v1378 = vadd.f32 %v1359, %v1375
        %v1379 = vadd.f32 %v1360, %v1375
        %v1380 = vadd.f32 %v1361, %v1375
        %v1381 = vadd.f32 %v1362, %v1375
        %v1382 = vadd.f32 %v1363, %v1375
        %v1383 = vadd.f32 %v1364, %v1375
        %v1384 = vadd.f32 %v1365, %v1375
        %v1385 = vadd.f32 %v1366, %v1375
        %v1386 = vadd.f32 %v1367, %v1375
        %v1387 = vadd.f32 %v1368, %v1375
        %v1388 = vadd.f32 %v1369, %v1375
        %v1389 = vadd.f32 %v1370, %v1375
        %v1390 = vadd.f32 %v1371, %v1375
        %v1391 = vadd.f32 %v1372, %v1375
        %v1392 = vadd.f32 %v1373, %v1375
        %v1393 = vpack.c.bf16 %v1378, %v1377
        %v1394 = vpack.c.bf16 %v1380, %v1379
        %v1395 = vpack.c.bf16 %v1382, %v1381
        %v1396 = vpack.c.bf16 %v1384, %v1383
        %v1397 = vpack.c.bf16 %v1386, %v1385
        %v1398 = vpack.c.bf16 %v1388, %v1387
        %v1399 = vpack.c.bf16 %v1390, %v1389
        %v1400 = vpack.c.bf16 %v1392, %v1391
        %v1401 = vlaneseq
        %v1402 = vand.u32 %v1401, 127
        %vm1403 = vcmp.lt.s32.totalorder %v1402, 17
        %v1404 = vld [vmem:[%s780] sm:$0xf]
        %v1405 = vld [vmem:[%s780 + $0x4] sm:$0xf]
        %v1406 = vld [vmem:[%s780 + $0x8] sm:$0xf]
        %v1407 = vld [vmem:[%s780 + $0xc] sm:$0xf]
        %v1408 = vld [vmem:[%s785] sm:$0x1]
        %v1410 = vperm.slane %v1408, 0
        %v1416 = vunpack.c.l.b16 %v1404
        %v1417 = vunpack.c.l.b16 %v1405
        %v1418 = vunpack.c.l.b16 %v1406
        %v1419 = vunpack.c.l.b16 %v1407
        %v1420 = vpack.c.b16 %v1417, %v1416
        %v1421 = vpack.c.b16 %v1419, %v1418
        %v1425 = vsel %vm995, %v1393, 0
        %v1428 = vsel %vm995, %v1394, 0
        %v1431 = vsel %vm995, %v1395, 0
        %v1434 = vsel %vm995, %v1396, 0
        %v1437 = vsel %vm995, %v1397, 0
        %v1440 = vsel %vm995, %v1398, 0
        %v1443 = vsel %vm995, %v1399, 0
        %v1446 = vsel %vm995, %v1400, 0
        %1448 = vmatpush.bf16.msra.mxu0 0
        %1449 = vmatpush.bf16.msra.mxu0 0
        %1450 = vmatpush.bf16.msra.mxu0 0
        %1451 = vmatpush.bf16.msra.mxu0 0
        %1452 = vmatpush.bf16.msra.mxu0 0
        %1453 = vmatpush.bf16.msra.mxu0 0
        %1454 = vmatpush.bf16.msra.mxu0 %v1421
        %1455 = vmatpush.bf16.msra.mxu0 %v1420
        %1456 = vmatmul.bf16.gmra.mxu0 %v1425
        %v1457 = vpop.f32.mrf.mxu0
        %v1458 = vadd.f32 %v1410, %v1457
        %v1459 = vpop.f32.mrf.mxu0
        %v1460 = vadd.f32 %v1410, %v1459
        %1461 = vmatmul.bf16.gmra.mxu0 %v1428
        %v1462 = vpop.f32.mrf.mxu0
        %v1463 = vadd.f32 %v1410, %v1462
        %v1464 = vpop.f32.mrf.mxu0
        %v1465 = vadd.f32 %v1410, %v1464
        %1466 = vmatmul.bf16.gmra.mxu0 %v1431
        %v1467 = vpop.f32.mrf.mxu0
        %v1468 = vadd.f32 %v1410, %v1467
        %v1469 = vpop.f32.mrf.mxu0
        %v1470 = vadd.f32 %v1410, %v1469
        %1471 = vmatmul.bf16.gmra.mxu0 %v1434
        %v1472 = vpop.f32.mrf.mxu0
        %v1473 = vadd.f32 %v1410, %v1472
        %v1474 = vpop.f32.mrf.mxu0
        %v1475 = vadd.f32 %v1410, %v1474
        %1476 = vmatmul.bf16.gmra.mxu0 %v1437
        %v1477 = vpop.f32.mrf.mxu0
        %v1478 = vadd.f32 %v1410, %v1477
        %v1479 = vpop.f32.mrf.mxu0
        %v1480 = vadd.f32 %v1410, %v1479
        %1481 = vmatmul.bf16.gmra.mxu0 %v1440
        %v1482 = vpop.f32.mrf.mxu0
        %v1483 = vadd.f32 %v1410, %v1482
        %v1484 = vpop.f32.mrf.mxu0
        %v1485 = vadd.f32 %v1410, %v1484
        %1486 = vmatmul.bf16.gmra.mxu0 %v1443
        %v1487 = vpop.f32.mrf.mxu0
        %v1488 = vadd.f32 %v1410, %v1487
        %v1489 = vpop.f32.mrf.mxu0
        %v1490 = vadd.f32 %v1410, %v1489
        %1491 = vmatmul.bf16.gmra.mxu0 %v1446
        %v1492 = vpop.f32.mrf.mxu0
        %v1493 = vadd.f32 %v1410, %v1492
        %v1494 = vpop.f32.mrf.mxu0
        %v1495 = vadd.f32 %v1410, %v1494
        %1496 = vdwg.mxu0
        %s1497 = scalar_lea.vmem %s780, 32
        %v1498 = vld [vmem:[%s1497] sm:$0xf]
        %v1499 = vld [vmem:[%s1497 + $0x4] sm:$0xf]
        %v1500 = vld [vmem:[%s1497 + $0x8] sm:$0xf]
        %v1501 = vld [vmem:[%s1497 + $0xc] sm:$0xf]
        %s1502 = scalar_lea.vmem %s785, 2
        %v1503 = vld [vmem:[%s1502] sm:$0x1]
        %v1505 = vperm.slane %v1503, 0
        %v1511 = vunpack.c.l.b16 %v1498
        %v1512 = vunpack.c.l.b16 %v1499
        %v1513 = vunpack.c.l.b16 %v1500
        %v1514 = vunpack.c.l.b16 %v1501
        %v1515 = vpack.c.b16 %v1512, %v1511
        %v1516 = vpack.c.b16 %v1514, %v1513
        %1519 = vmatpush.bf16.msra.mxu0 0
        %1520 = vmatpush.bf16.msra.mxu0 0
        %1521 = vmatpush.bf16.msra.mxu0 0
        %1522 = vmatpush.bf16.msra.mxu0 0
        %1523 = vmatpush.bf16.msra.mxu0 0
        %1524 = vmatpush.bf16.msra.mxu0 0
        %1525 = vmatpush.bf16.msra.mxu0 %v1516
        %1526 = vmatpush.bf16.msra.mxu0 %v1515
        %1527 = vmatmul.bf16.gmra.mxu0 %v1425
        %v1528 = vpop.f32.mrf.mxu0
        %v1529 = vadd.f32 %v1505, %v1528
        %v1530 = vpop.f32.mrf.mxu0
        %v1531 = vadd.f32 %v1505, %v1530
        %1532 = vmatmul.bf16.gmra.mxu0 %v1428
        %v1533 = vpop.f32.mrf.mxu0
        %v1534 = vadd.f32 %v1505, %v1533
        %v1535 = vpop.f32.mrf.mxu0
        %v1536 = vadd.f32 %v1505, %v1535
        %1537 = vmatmul.bf16.gmra.mxu0 %v1431
        %v1538 = vpop.f32.mrf.mxu0
        %v1539 = vadd.f32 %v1505, %v1538
        %v1540 = vpop.f32.mrf.mxu0
        %v1541 = vadd.f32 %v1505, %v1540
        %1542 = vmatmul.bf16.gmra.mxu0 %v1434
        %v1543 = vpop.f32.mrf.mxu0
        %v1544 = vadd.f32 %v1505, %v1543
        %v1545 = vpop.f32.mrf.mxu0
        %v1546 = vadd.f32 %v1505, %v1545
        %1547 = vmatmul.bf16.gmra.mxu0 %v1437
        %v1548 = vpop.f32.mrf.mxu0
        %v1549 = vadd.f32 %v1505, %v1548
        %v1550 = vpop.f32.mrf.mxu0
        %v1551 = vadd.f32 %v1505, %v1550
        %1552 = vmatmul.bf16.gmra.mxu0 %v1440
        %v1553 = vpop.f32.mrf.mxu0
        %v1554 = vadd.f32 %v1505, %v1553
        %v1555 = vpop.f32.mrf.mxu0
        %v1556 = vadd.f32 %v1505, %v1555
        %1557 = vmatmul.bf16.gmra.mxu0 %v1443
        %v1558 = vpop.f32.mrf.mxu0
        %v1559 = vadd.f32 %v1505, %v1558
        %v1560 = vpop.f32.mrf.mxu0
        %v1561 = vadd.f32 %v1505, %v1560
        %1562 = vmatmul.bf16.gmra.mxu0 %v1446
        %v1563 = vpop.f32.mrf.mxu0
        %v1564 = vadd.f32 %v1505, %v1563
        %v1565 = vpop.f32.mrf.mxu0
        %v1566 = vadd.f32 %v1505, %v1565
        %1567 = vdwg.mxu0
        %s1568 = scalar_lea.vmem %s780, 64
        %v1569 = vld [vmem:[%s1568] sm:$0xf]
        %v1570 = vld [vmem:[%s1568 + $0x4] sm:$0xf]
        %v1571 = vld [vmem:[%s1568 + $0x8] sm:$0xf]
        %v1572 = vld [vmem:[%s1568 + $0xc] sm:$0xf]
        %s1573 = scalar_lea.vmem %s785, 4
        %v1574 = vld [vmem:[%s1573] sm:$0x1]
        %v1576 = vperm.slane %v1574, 0
        %v1582 = vunpack.c.l.b16 %v1569
        %v1583 = vunpack.c.l.b16 %v1570
        %v1584 = vunpack.c.l.b16 %v1571
        %v1585 = vunpack.c.l.b16 %v1572
        %v1586 = vpack.c.b16 %v1583, %v1582
        %v1587 = vpack.c.b16 %v1585, %v1584
        %1590 = vmatpush.bf16.msra.mxu0 0
        %1591 = vmatpush.bf16.msra.mxu0 0
        %1592 = vmatpush.bf16.msra.mxu0 0
        %1593 = vmatpush.bf16.msra.mxu0 0
        %1594 = vmatpush.bf16.msra.mxu0 0
        %1595 = vmatpush.bf16.msra.mxu0 0
        %1596 = vmatpush.bf16.msra.mxu0 %v1587
        %1597 = vmatpush.bf16.msra.mxu0 %v1586
        %1598 = vmatmul.bf16.gmra.mxu0 %v1425
        %v1599 = vpop.f32.mrf.mxu0
        %v1600 = vadd.f32 %v1576, %v1599
        %v1601 = vpop.f32.mrf.mxu0
        %v1602 = vadd.f32 %v1576, %v1601
        %1603 = vmatmul.bf16.gmra.mxu0 %v1428
        %v1604 = vpop.f32.mrf.mxu0
        %v1605 = vadd.f32 %v1576, %v1604
        %v1606 = vpop.f32.mrf.mxu0
        %v1607 = vadd.f32 %v1576, %v1606
        %1608 = vmatmul.bf16.gmra.mxu0 %v1431
        %v1609 = vpop.f32.mrf.mxu0
        %v1610 = vadd.f32 %v1576, %v1609
        %v1611 = vpop.f32.mrf.mxu0
        %v1612 = vadd.f32 %v1576, %v1611
        %1613 = vmatmul.bf16.gmra.mxu0 %v1434
        %v1614 = vpop.f32.mrf.mxu0
        %v1615 = vadd.f32 %v1576, %v1614
        %v1616 = vpop.f32.mrf.mxu0
        %v1617 = vadd.f32 %v1576, %v1616
        %1618 = vmatmul.bf16.gmra.mxu0 %v1437
        %v1619 = vpop.f32.mrf.mxu0
        %v1620 = vadd.f32 %v1576, %v1619
        %v1621 = vpop.f32.mrf.mxu0
        %v1622 = vadd.f32 %v1576, %v1621
        %1623 = vmatmul.bf16.gmra.mxu0 %v1440
        %v1624 = vpop.f32.mrf.mxu0
        %v1625 = vadd.f32 %v1576, %v1624
        %v1626 = vpop.f32.mrf.mxu0
        %v1627 = vadd.f32 %v1576, %v1626
        %1628 = vmatmul.bf16.gmra.mxu0 %v1443
        %v1629 = vpop.f32.mrf.mxu0
        %v1630 = vadd.f32 %v1576, %v1629
        %v1631 = vpop.f32.mrf.mxu0
        %v1632 = vadd.f32 %v1576, %v1631
        %1633 = vmatmul.bf16.gmra.mxu0 %v1446
        %v1634 = vpop.f32.mrf.mxu0
        %v1635 = vadd.f32 %v1576, %v1634
        %v1636 = vpop.f32.mrf.mxu0
        %v1637 = vadd.f32 %v1576, %v1636
        %1638 = vdwg.mxu0
        %v1639 = vpack.c.bf16 %v1458, %v1458
        %v1640 = vpack.c.bf16 %v1460, %v1460
        %v1641 = vpack.c.bf16 %v1463, %v1463
        %v1642 = vpack.c.bf16 %v1465, %v1465
        %v1643 = vpack.c.bf16 %v1468, %v1468
        %v1644 = vpack.c.bf16 %v1470, %v1470
        %v1645 = vpack.c.bf16 %v1473, %v1473
        %v1646 = vpack.c.bf16 %v1475, %v1475
        %v1647 = vpack.c.bf16 %v1478, %v1478
        %v1648 = vpack.c.bf16 %v1480, %v1480
        %v1649 = vpack.c.bf16 %v1483, %v1483
        %v1650 = vpack.c.bf16 %v1485, %v1485
        %v1651 = vpack.c.bf16 %v1488, %v1488
        %v1652 = vpack.c.bf16 %v1490, %v1490
        %v1653 = vpack.c.bf16 %v1493, %v1493
        %v1654 = vpack.c.bf16 %v1495, %v1495
        %v1655 = vpack.c.bf16 %v1529, %v1529
        %v1656 = vpack.c.bf16 %v1531, %v1531
        %v1657 = vpack.c.bf16 %v1534, %v1534
        %v1658 = vpack.c.bf16 %v1536, %v1536
        %v1659 = vpack.c.bf16 %v1539, %v1539
        %v1660 = vpack.c.bf16 %v1541, %v1541
        %v1661 = vpack.c.bf16 %v1544, %v1544
        %v1662 = vpack.c.bf16 %v1546, %v1546
        %v1663 = vpack.c.bf16 %v1549, %v1549
        %v1664 = vpack.c.bf16 %v1551, %v1551
        %v1665 = vpack.c.bf16 %v1554, %v1554
        %v1666 = vpack.c.bf16 %v1556, %v1556
        %v1667 = vpack.c.bf16 %v1559, %v1559
        %v1668 = vpack.c.bf16 %v1561, %v1561
        %v1669 = vpack.c.bf16 %v1564, %v1564
        %v1670 = vpack.c.bf16 %v1566, %v1566
        %v1671 = vpack.c.bf16 %v1600, %v1600
        %v1672 = vpack.c.bf16 %v1602, %v1602
        %v1673 = vpack.c.bf16 %v1605, %v1605
        %v1674 = vpack.c.bf16 %v1607, %v1607
        %v1675 = vpack.c.bf16 %v1610, %v1610
        %v1676 = vpack.c.bf16 %v1612, %v1612
        %v1677 = vpack.c.bf16 %v1615, %v1615
        %v1678 = vpack.c.bf16 %v1617, %v1617
        %v1679 = vpack.c.bf16 %v1620, %v1620
        %v1680 = vpack.c.bf16 %v1622, %v1622
        %v1681 = vpack.c.bf16 %v1625, %v1625
        %v1682 = vpack.c.bf16 %v1627, %v1627
        %v1683 = vpack.c.bf16 %v1630, %v1630
        %v1684 = vpack.c.bf16 %v1632, %v1632
        %v1685 = vpack.c.bf16 %v1635, %v1635
        %v1686 = vpack.c.bf16 %v1637, %v1637
        %v1691 = vunpack.c.l.b16 %v1639
        %v1692 = vunpack.c.l.b16 %v1640
        %v1693 = vunpack.c.l.b16 %v1641
        %v1694 = vunpack.c.l.b16 %v1642
        %v1695 = vpack.c.b16 %v1692, %v1691
        %v1696 = vpack.c.b16 %v1694, %v1693
        %v1701 = vunpack.c.l.b16 %v1655
        %v1702 = vunpack.c.l.b16 %v1656
        %v1703 = vunpack.c.l.b16 %v1657
        %v1704 = vunpack.c.l.b16 %v1658
        %v1705 = vpack.c.b16 %v1702, %v1701
        %v1706 = vpack.c.b16 %v1704, %v1703
        %vm1707 = vcmask 130048
        %v1709 = vsel %vm1707, %v1695, 0
        %v1712 = vsel %vm1707, %v1696, 0
        %v1715 = vsel %vm1707, %v1705, 0
        %v1718 = vsel %vm1707, %v1706, 0
        %1720 = vmatpush.bf16.xpose.msra.mxu0 0
        %1721 = vmatpush.bf16.xpose.msra.mxu0 0
        %1722 = vmatpush.bf16.xpose.msra.mxu0 0
        %1723 = vmatpush.bf16.xpose.msra.mxu0 0
        %1724 = vmatpush.bf16.xpose.msra.mxu0 0
        %1725 = vmatpush.bf16.xpose.msra.mxu0 0
        %1726 = vmatpush.bf16.xpose.msra.mxu0 %v1718
        %1727 = vmatpush.bf16.xpose.msra.mxu0 %v1715
        %1728 = vmatmul.bf16.gmra.mxu0 %v1709
        %v1729 = vpop.f32.mrf.mxu0
        %v1730 = vadd.f32 0.0, %v1729
        %v1731 = vpop.f32.mrf.mxu0
        %v1732 = vadd.f32 0.0, %v1731
        %1733 = vmatmul.bf16.gmra.mxu0 %v1712
        %v1734 = vpop.f32.mrf.mxu0
        %v1735 = vadd.f32 0.0, %v1734
        %v1736 = vpop.f32.mrf.mxu0
        %v1737 = vadd.f32 0.0, %v1736
        %1738 = vdwg.mxu0
        %v1743 = vunpack.c.l.b16 %v1643
        %v1744 = vunpack.c.l.b16 %v1644
        %v1745 = vunpack.c.l.b16 %v1645
        %v1746 = vunpack.c.l.b16 %v1646
        %v1747 = vpack.c.b16 %v1744, %v1743
        %v1748 = vpack.c.b16 %v1746, %v1745
        %v1753 = vunpack.c.l.b16 %v1659
        %v1754 = vunpack.c.l.b16 %v1660
        %v1755 = vunpack.c.l.b16 %v1661
        %v1756 = vunpack.c.l.b16 %v1662
        %v1757 = vpack.c.b16 %v1754, %v1753
        %v1758 = vpack.c.b16 %v1756, %v1755
        %v1760 = vsel %vm1707, %v1747, 0
        %v1763 = vsel %vm1707, %v1748, 0
        %v1766 = vsel %vm1707, %v1757, 0
        %v1769 = vsel %vm1707, %v1758, 0
        %1771 = vmatpush.bf16.xpose.msra.mxu0 0
        %1772 = vmatpush.bf16.xpose.msra.mxu0 0
        %1773 = vmatpush.bf16.xpose.msra.mxu0 0
        %1774 = vmatpush.bf16.xpose.msra.mxu0 0
        %1775 = vmatpush.bf16.xpose.msra.mxu0 0
        %1776 = vmatpush.bf16.xpose.msra.mxu0 0
        %1777 = vmatpush.bf16.xpose.msra.mxu0 %v1769
        %1778 = vmatpush.bf16.xpose.msra.mxu0 %v1766
        %1779 = vmatmul.bf16.gmra.mxu0 %v1760
        %v1780 = vpop.f32.mrf.mxu0
        %v1781 = vadd.f32 0.0, %v1780
        %v1782 = vpop.f32.mrf.mxu0
        %v1783 = vadd.f32 0.0, %v1782
        %1784 = vmatmul.bf16.gmra.mxu0 %v1763
        %v1785 = vpop.f32.mrf.mxu0
        %v1786 = vadd.f32 0.0, %v1785
        %v1787 = vpop.f32.mrf.mxu0
        %v1788 = vadd.f32 0.0, %v1787
        %1789 = vdwg.mxu0
        %v1794 = vunpack.c.l.b16 %v1647
        %v1795 = vunpack.c.l.b16 %v1648
        %v1796 = vunpack.c.l.b16 %v1649
        %v1797 = vunpack.c.l.b16 %v1650
        %v1798 = vpack.c.b16 %v1795, %v1794
        %v1799 = vpack.c.b16 %v1797, %v1796
        %v1804 = vunpack.c.l.b16 %v1663
        %v1805 = vunpack.c.l.b16 %v1664
        %v1806 = vunpack.c.l.b16 %v1665
        %v1807 = vunpack.c.l.b16 %v1666
        %v1808 = vpack.c.b16 %v1805, %v1804
        %v1809 = vpack.c.b16 %v1807, %v1806
        %v1811 = vsel %vm1707, %v1798, 0
        %v1814 = vsel %vm1707, %v1799, 0
        %v1817 = vsel %vm1707, %v1808, 0
        %v1820 = vsel %vm1707, %v1809, 0
        %1822 = vmatpush.bf16.xpose.msra.mxu0 0
        %1823 = vmatpush.bf16.xpose.msra.mxu0 0
        %1824 = vmatpush.bf16.xpose.msra.mxu0 0
        %1825 = vmatpush.bf16.xpose.msra.mxu0 0
        %1826 = vmatpush.bf16.xpose.msra.mxu0 0
        %1827 = vmatpush.bf16.xpose.msra.mxu0 0
        %1828 = vmatpush.bf16.xpose.msra.mxu0 %v1820
        %1829 = vmatpush.bf16.xpose.msra.mxu0 %v1817
        %1830 = vmatmul.bf16.gmra.mxu0 %v1811
        %v1831 = vpop.f32.mrf.mxu0
        %v1832 = vadd.f32 0.0, %v1831
        %v1833 = vpop.f32.mrf.mxu0
        %v1834 = vadd.f32 0.0, %v1833
        %1835 = vmatmul.bf16.gmra.mxu0 %v1814
        %v1836 = vpop.f32.mrf.mxu0
        %v1837 = vadd.f32 0.0, %v1836
        %v1838 = vpop.f32.mrf.mxu0
        %v1839 = vadd.f32 0.0, %v1838
        %1840 = vdwg.mxu0
        %v1845 = vunpack.c.l.b16 %v1651
        %v1846 = vunpack.c.l.b16 %v1652
        %v1847 = vunpack.c.l.b16 %v1653
        %v1848 = vunpack.c.l.b16 %v1654
        %v1849 = vpack.c.b16 %v1846, %v1845
        %v1850 = vpack.c.b16 %v1848, %v1847
        %v1855 = vunpack.c.l.b16 %v1667
        %v1856 = vunpack.c.l.b16 %v1668
        %v1857 = vunpack.c.l.b16 %v1669
        %v1858 = vunpack.c.l.b16 %v1670
        %v1859 = vpack.c.b16 %v1856, %v1855
        %v1860 = vpack.c.b16 %v1858, %v1857
        %v1862 = vsel %vm1707, %v1849, 0
        %v1865 = vsel %vm1707, %v1850, 0
        %v1868 = vsel %vm1707, %v1859, 0
        %v1871 = vsel %vm1707, %v1860, 0
        %1873 = vmatpush.bf16.xpose.msra.mxu0 0
        %1874 = vmatpush.bf16.xpose.msra.mxu0 0
        %1875 = vmatpush.bf16.xpose.msra.mxu0 0
        %1876 = vmatpush.bf16.xpose.msra.mxu0 0
        %1877 = vmatpush.bf16.xpose.msra.mxu0 0
        %1878 = vmatpush.bf16.xpose.msra.mxu0 0
        %1879 = vmatpush.bf16.xpose.msra.mxu0 %v1871
        %1880 = vmatpush.bf16.xpose.msra.mxu0 %v1868
        %1881 = vmatmul.bf16.gmra.mxu0 %v1862
        %v1882 = vpop.f32.mrf.mxu0
        %v1883 = vadd.f32 0.0, %v1882
        %v1884 = vpop.f32.mrf.mxu0
        %v1885 = vadd.f32 0.0, %v1884
        %1886 = vmatmul.bf16.gmra.mxu0 %v1865
        %v1887 = vpop.f32.mrf.mxu0
        %v1888 = vadd.f32 0.0, %v1887
        %v1889 = vpop.f32.mrf.mxu0
        %v1890 = vadd.f32 0.0, %v1889
        %1891 = vdwg.mxu0
        %v1892 = vmul.f32 %v1730, 0.25
        %v1893 = vmul.f32 %v1732, 0.25
        %v1894 = vmul.f32 %v1735, 0.25
        %v1895 = vmul.f32 %v1737, 0.25
        %v1896 = vmul.f32 %v1781, 0.25
        %v1897 = vmul.f32 %v1783, 0.25
        %v1898 = vmul.f32 %v1786, 0.25
        %v1899 = vmul.f32 %v1788, 0.25
        %v1900 = vmul.f32 %v1832, 0.25
        %v1901 = vmul.f32 %v1834, 0.25
        %v1902 = vmul.f32 %v1837, 0.25
        %v1903 = vmul.f32 %v1839, 0.25
        %v1904 = vmul.f32 %v1883, 0.25
        %v1905 = vmul.f32 %v1885, 0.25
        %v1906 = vmul.f32 %v1888, 0.25
        %v1907 = vmul.f32 %v1890, 0.25
        %v1908 = vsel %vm1403, 1, 0
        %vm1909 = vcmp.eq.s32.totalorder %v1908, 1
        %v1910 = vsel %vm1909, %v1892, -1e+30
        %v1911 = vsel %vm1909, %v1893, -1e+30
        %v1912 = vsel %vm1909, %v1894, -1e+30
        %v1913 = vsel %vm1909, %v1895, -1e+30
        %v1914 = vsel %vm1909, %v1896, -1e+30
        %v1915 = vsel %vm1909, %v1897, -1e+30
        %v1916 = vsel %vm1909, %v1898, -1e+30
        %v1917 = vsel %vm1909, %v1899, -1e+30
        %v1918 = vsel %vm1909, %v1900, -1e+30
        %v1919 = vsel %vm1909, %v1901, -1e+30
        %v1920 = vsel %vm1909, %v1902, -1e+30
        %v1921 = vsel %vm1909, %v1903, -1e+30
        %v1922 = vsel %vm1909, %v1904, -1e+30
        %v1923 = vsel %vm1909, %v1905, -1e+30
        %v1924 = vsel %vm1909, %v1906, -1e+30
        %v1925 = vsel %vm1909, %v1907, -1e+30
        %v1926 = vsel %vm995, %v1910, -inf
        %1927 = vmax.xlane.f32.xlu0 %v1926
        %v1928 = vpop.xlane.xlu0 %1927
        %v1929 = vsel %vm995, %v1911, -inf
        %1930 = vmax.xlane.f32.xlu0 %v1929
        %v1931 = vpop.xlane.xlu0 %1930
        %v1932 = vsel %vm995, %v1912, -inf
        %1933 = vmax.xlane.f32.xlu0 %v1932
        %v1934 = vpop.xlane.xlu0 %1933
        %v1935 = vsel %vm995, %v1913, -inf
        %1936 = vmax.xlane.f32.xlu0 %v1935
        %v1937 = vpop.xlane.xlu0 %1936
        %v1938 = vsel %vm995, %v1914, -inf
        %1939 = vmax.xlane.f32.xlu0 %v1938
        %v1940 = vpop.xlane.xlu0 %1939
        %v1941 = vsel %vm995, %v1915, -inf
        %1942 = vmax.xlane.f32.xlu0 %v1941
        %v1943 = vpop.xlane.xlu0 %1942
        %v1944 = vsel %vm995, %v1916, -inf
        %1945 = vmax.xlane.f32.xlu0 %v1944
        %v1946 = vpop.xlane.xlu0 %1945
        %v1947 = vsel %vm995, %v1917, -inf
        %1948 = vmax.xlane.f32.xlu0 %v1947
        %v1949 = vpop.xlane.xlu0 %1948
        %v1950 = vsel %vm995, %v1918, -inf
        %1951 = vmax.xlane.f32.xlu0 %v1950
        %v1952 = vpop.xlane.xlu0 %1951
        %v1953 = vsel %vm995, %v1919, -inf
        %1954 = vmax.xlane.f32.xlu0 %v1953
        %v1955 = vpop.xlane.xlu0 %1954
        %v1956 = vsel %vm995, %v1920, -inf
        %1957 = vmax.xlane.f32.xlu0 %v1956
        %v1958 = vpop.xlane.xlu0 %1957
        %v1959 = vsel %vm995, %v1921, -inf
        %1960 = vmax.xlane.f32.xlu0 %v1959
        %v1961 = vpop.xlane.xlu0 %1960
        %v1962 = vsel %vm995, %v1922, -inf
        %1963 = vmax.xlane.f32.xlu0 %v1962
        %v1964 = vpop.xlane.xlu0 %1963
        %v1965 = vsel %vm995, %v1923, -inf
        %1966 = vmax.xlane.f32.xlu0 %v1965
        %v1967 = vpop.xlane.xlu0 %1966
        %v1968 = vsel %vm995, %v1924, -inf
        %1969 = vmax.xlane.f32.xlu0 %v1968
        %v1970 = vpop.xlane.xlu0 %1969
        %v1971 = vsel %vm995, %v1925, -inf
        %1972 = vmax.xlane.f32.xlu0 %v1971
        %v1973 = vpop.xlane.xlu0 %1972
        %v1974 = vsub.f32 %v1910, %v1928
        %v1975 = vsub.f32 %v1911, %v1931
        %v1976 = vsub.f32 %v1912, %v1934
        %v1977 = vsub.f32 %v1913, %v1937
        %v1978 = vsub.f32 %v1914, %v1940
        %v1979 = vsub.f32 %v1915, %v1943
        %v1980 = vsub.f32 %v1916, %v1946
        %v1981 = vsub.f32 %v1917, %v1949
        %v1982 = vsub.f32 %v1918, %v1952
        %v1983 = vsub.f32 %v1919, %v1955
        %v1984 = vsub.f32 %v1920, %v1958
        %v1985 = vsub.f32 %v1921, %v1961
        %v1986 = vsub.f32 %v1922, %v1964
        %v1987 = vsub.f32 %v1923, %v1967
        %v1988 = vsub.f32 %v1924, %v1970
        %v1989 = vsub.f32 %v1925, %v1973
        %v1990 = vmul.f32 %v1974, 1.442695
        %v1991 = vpow.pop %v1990
        %v1992 = vmul.f32 %v1975, 1.442695
        %v1993 = vpow.pop %v1992
        %v1994 = vmul.f32 %v1976, 1.442695
        %v1995 = vpow.pop %v1994
        %v1996 = vmul.f32 %v1977, 1.442695
        %v1997 = vpow.pop %v1996
        %v1998 = vmul.f32 %v1978, 1.442695
        %v1999 = vpow.pop %v1998
        %v2000 = vmul.f32 %v1979, 1.442695
        %v2001 = vpow.pop %v2000
        %v2002 = vmul.f32 %v1980, 1.442695
        %v2003 = vpow.pop %v2002
        %v2004 = vmul.f32 %v1981, 1.442695
        %v2005 = vpow.pop %v2004
        %v2006 = vmul.f32 %v1982, 1.442695
        %v2007 = vpow.pop %v2006
        %v2008 = vmul.f32 %v1983, 1.442695
        %v2009 = vpow.pop %v2008
        %v2010 = vmul.f32 %v1984, 1.442695
        %v2011 = vpow.pop %v2010
        %v2012 = vmul.f32 %v1985, 1.442695
        %v2013 = vpow.pop %v2012
        %v2014 = vmul.f32 %v1986, 1.442695
        %v2015 = vpow.pop %v2014
        %v2016 = vmul.f32 %v1987, 1.442695
        %v2017 = vpow.pop %v2016
        %v2018 = vmul.f32 %v1988, 1.442695
        %v2019 = vpow.pop %v2018
        %v2020 = vmul.f32 %v1989, 1.442695
        %v2021 = vpow.pop %v2020
        %v2022 = vsel %vm995, %v1991, 0.0
        %2023 = vadd.xlane.f32.xlu0 %v2022
        %v2024 = vpop.xlane.xlu0 %2023
        %v2025 = vsel %vm995, %v1993, 0.0
        %2026 = vadd.xlane.f32.xlu0 %v2025
        %v2027 = vpop.xlane.xlu0 %2026
        %v2028 = vsel %vm995, %v1995, 0.0
        %2029 = vadd.xlane.f32.xlu0 %v2028
        %v2030 = vpop.xlane.xlu0 %2029
        %v2031 = vsel %vm995, %v1997, 0.0
        %2032 = vadd.xlane.f32.xlu0 %v2031
        %v2033 = vpop.xlane.xlu0 %2032
        %v2034 = vsel %vm995, %v1999, 0.0
        %2035 = vadd.xlane.f32.xlu0 %v2034
        %v2036 = vpop.xlane.xlu0 %2035
        %v2037 = vsel %vm995, %v2001, 0.0
        %2038 = vadd.xlane.f32.xlu0 %v2037
        %v2039 = vpop.xlane.xlu0 %2038
        %v2040 = vsel %vm995, %v2003, 0.0
        %2041 = vadd.xlane.f32.xlu0 %v2040
        %v2042 = vpop.xlane.xlu0 %2041
        %v2043 = vsel %vm995, %v2005, 0.0
        %2044 = vadd.xlane.f32.xlu0 %v2043
        %v2045 = vpop.xlane.xlu0 %2044
        %v2046 = vsel %vm995, %v2007, 0.0
        %2047 = vadd.xlane.f32.xlu0 %v2046
        %v2048 = vpop.xlane.xlu0 %2047
        %v2049 = vsel %vm995, %v2009, 0.0
        %2050 = vadd.xlane.f32.xlu0 %v2049
        %v2051 = vpop.xlane.xlu0 %2050
        %v2052 = vsel %vm995, %v2011, 0.0
        %2053 = vadd.xlane.f32.xlu0 %v2052
        %v2054 = vpop.xlane.xlu0 %2053
        %v2055 = vsel %vm995, %v2013, 0.0
        %2056 = vadd.xlane.f32.xlu0 %v2055
        %v2057 = vpop.xlane.xlu0 %2056
        %v2058 = vsel %vm995, %v2015, 0.0
        %2059 = vadd.xlane.f32.xlu0 %v2058
        %v2060 = vpop.xlane.xlu0 %2059
        %v2061 = vsel %vm995, %v2017, 0.0
        %2062 = vadd.xlane.f32.xlu0 %v2061
        %v2063 = vpop.xlane.xlu0 %2062
        %v2064 = vsel %vm995, %v2019, 0.0
        %2065 = vadd.xlane.f32.xlu0 %v2064
        %v2066 = vpop.xlane.xlu0 %2065
        %v2067 = vsel %vm995, %v2021, 0.0
        %2068 = vadd.xlane.f32.xlu0 %v2067
        %v2069 = vpop.xlane.xlu0 %2068
        %v2070 = vrcp.pop %v2024
        %v2071 = vrcp.pop %v2027
        %v2072 = vrcp.pop %v2030
        %v2073 = vrcp.pop %v2033
        %v2074 = vrcp.pop %v2036
        %v2075 = vrcp.pop %v2039
        %v2076 = vrcp.pop %v2042
        %v2077 = vrcp.pop %v2045
        %v2078 = vrcp.pop %v2048
        %v2079 = vrcp.pop %v2051
        %v2080 = vrcp.pop %v2054
        %v2081 = vrcp.pop %v2057
        %v2082 = vrcp.pop %v2060
        %v2083 = vrcp.pop %v2063
        %v2084 = vrcp.pop %v2066
        %v2085 = vrcp.pop %v2069
        %v2086 = vmul.f32 %v1991, %v2070
        %v2087 = vmul.f32 %v1993, %v2071
        %v2088 = vmul.f32 %v1995, %v2072
        %v2089 = vmul.f32 %v1997, %v2073
        %v2090 = vmul.f32 %v1999, %v2074
        %v2091 = vmul.f32 %v2001, %v2075
        %v2092 = vmul.f32 %v2003, %v2076
        %v2093 = vmul.f32 %v2005, %v2077
        %v2094 = vmul.f32 %v2007, %v2078
        %v2095 = vmul.f32 %v2009, %v2079
        %v2096 = vmul.f32 %v2011, %v2080
        %v2097 = vmul.f32 %v2013, %v2081
        %v2098 = vmul.f32 %v2015, %v2082
        %v2099 = vmul.f32 %v2017, %v2083
        %v2100 = vmul.f32 %v2019, %v2084
        %v2101 = vmul.f32 %v2021, %v2085
        %v2102 = vpack.c.bf16 %v2086, %v2086
        %v2103 = vpack.c.bf16 %v2087, %v2087
        %v2104 = vpack.c.bf16 %v2088, %v2088
        %v2105 = vpack.c.bf16 %v2089, %v2089
        %v2106 = vpack.c.bf16 %v2090, %v2090
        %v2107 = vpack.c.bf16 %v2091, %v2091
        %v2108 = vpack.c.bf16 %v2092, %v2092
        %v2109 = vpack.c.bf16 %v2093, %v2093
        %v2110 = vpack.c.bf16 %v2094, %v2094
        %v2111 = vpack.c.bf16 %v2095, %v2095
        %v2112 = vpack.c.bf16 %v2096, %v2096
        %v2113 = vpack.c.bf16 %v2097, %v2097
        %v2114 = vpack.c.bf16 %v2098, %v2098
        %v2115 = vpack.c.bf16 %v2099, %v2099
        %v2116 = vpack.c.bf16 %v2100, %v2100
        %v2117 = vpack.c.bf16 %v2101, %v2101
        %v2122 = vunpack.c.l.b16 %v2102
        %v2123 = vunpack.c.l.b16 %v2103
        %v2124 = vunpack.c.l.b16 %v2104
        %v2125 = vunpack.c.l.b16 %v2105
        %v2126 = vpack.c.b16 %v2123, %v2122
        %v2127 = vpack.c.b16 %v2125, %v2124
        %v2132 = vunpack.c.l.b16 %v1671
        %v2133 = vunpack.c.l.b16 %v1672
        %v2134 = vunpack.c.l.b16 %v1673
        %v2135 = vunpack.c.l.b16 %v1674
        %v2136 = vpack.c.b16 %v2133, %v2132
        %v2137 = vpack.c.b16 %v2135, %v2134
        %v2141 = vsel %vm995, %v2126, 0
        %v2144 = vsel %vm995, %v2127, 0
        %2146 = vmatpush.bf16.msra.mxu0 0
        %2147 = vmatpush.bf16.msra.mxu0 0
        %2148 = vmatpush.bf16.msra.mxu0 0
        %2149 = vmatpush.bf16.msra.mxu0 0
        %2150 = vmatpush.bf16.msra.mxu0 0
        %2151 = vmatpush.bf16.msra.mxu0 0
        %2152 = vmatpush.bf16.msra.mxu0 %v2137
        %2153 = vmatpush.bf16.msra.mxu0 %v2136
        %2154 = vmatmul.bf16.gmra.mxu0 %v2141
        %v2155 = vpop.f32.mrf.mxu0
        %v2156 = vadd.f32 0.0, %v2155
        %v2157 = vpop.f32.mrf.mxu0
        %v2158 = vadd.f32 0.0, %v2157
        %2159 = vmatmul.bf16.gmra.mxu0 %v2144
        %v2160 = vpop.f32.mrf.mxu0
        %v2161 = vadd.f32 0.0, %v2160
        %v2162 = vpop.f32.mrf.mxu0
        %v2163 = vadd.f32 0.0, %v2162
        %2164 = vdwg.mxu0
        %v2169 = vunpack.c.l.b16 %v2106
        %v2170 = vunpack.c.l.b16 %v2107
        %v2171 = vunpack.c.l.b16 %v2108
        %v2172 = vunpack.c.l.b16 %v2109
        %v2173 = vpack.c.b16 %v2170, %v2169
        %v2174 = vpack.c.b16 %v2172, %v2171
        %v2179 = vunpack.c.l.b16 %v1675
        %v2180 = vunpack.c.l.b16 %v1676
        %v2181 = vunpack.c.l.b16 %v1677
        %v2182 = vunpack.c.l.b16 %v1678
        %v2183 = vpack.c.b16 %v2180, %v2179
        %v2184 = vpack.c.b16 %v2182, %v2181
        %v2188 = vsel %vm995, %v2173, 0
        %v2191 = vsel %vm995, %v2174, 0
        %2193 = vmatpush.bf16.msra.mxu0 0
        %2194 = vmatpush.bf16.msra.mxu0 0
        %2195 = vmatpush.bf16.msra.mxu0 0
        %2196 = vmatpush.bf16.msra.mxu0 0
        %2197 = vmatpush.bf16.msra.mxu0 0
        %2198 = vmatpush.bf16.msra.mxu0 0
        %2199 = vmatpush.bf16.msra.mxu0 %v2184
        %2200 = vmatpush.bf16.msra.mxu0 %v2183
        %2201 = vmatmul.bf16.gmra.mxu0 %v2188
        %v2202 = vpop.f32.mrf.mxu0
        %v2203 = vadd.f32 0.0, %v2202
        %v2204 = vpop.f32.mrf.mxu0
        %v2205 = vadd.f32 0.0, %v2204
        %2206 = vmatmul.bf16.gmra.mxu0 %v2191
        %v2207 = vpop.f32.mrf.mxu0
        %v2208 = vadd.f32 0.0, %v2207
        %v2209 = vpop.f32.mrf.mxu0
        %v2210 = vadd.f32 0.0, %v2209
        %2211 = vdwg.mxu0
        %v2216 = vunpack.c.l.b16 %v2110
        %v2217 = vunpack.c.l.b16 %v2111
        %v2218 = vunpack.c.l.b16 %v2112
        %v2219 = vunpack.c.l.b16 %v2113
        %v2220 = vpack.c.b16 %v2217, %v2216
        %v2221 = vpack.c.b16 %v2219, %v2218
        %v2226 = vunpack.c.l.b16 %v1679
        %v2227 = vunpack.c.l.b16 %v1680
        %v2228 = vunpack.c.l.b16 %v1681
        %v2229 = vunpack.c.l.b16 %v1682
        %v2230 = vpack.c.b16 %v2227, %v2226
        %v2231 = vpack.c.b16 %v2229, %v2228
        %v2235 = vsel %vm995, %v2220, 0
        %v2238 = vsel %vm995, %v2221, 0
        %2240 = vmatpush.bf16.msra.mxu0 0
        %2241 = vmatpush.bf16.msra.mxu0 0
        %2242 = vmatpush.bf16.msra.mxu0 0
        %2243 = vmatpush.bf16.msra.mxu0 0
        %2244 = vmatpush.bf16.msra.mxu0 0
        %2245 = vmatpush.bf16.msra.mxu0 0
        %2246 = vmatpush.bf16.msra.mxu0 %v2231
        %2247 = vmatpush.bf16.msra.mxu0 %v2230
        %2248 = vmatmul.bf16.gmra.mxu0 %v2235
        %v2249 = vpop.f32.mrf.mxu0
        %v2250 = vadd.f32 0.0, %v2249
        %v2251 = vpop.f32.mrf.mxu0
        %v2252 = vadd.f32 0.0, %v2251
        %2253 = vmatmul.bf16.gmra.mxu0 %v2238
        %v2254 = vpop.f32.mrf.mxu0
        %v2255 = vadd.f32 0.0, %v2254
        %v2256 = vpop.f32.mrf.mxu0
        %v2257 = vadd.f32 0.0, %v2256
        %2258 = vdwg.mxu0
        %v2263 = vunpack.c.l.b16 %v2114
        %v2264 = vunpack.c.l.b16 %v2115
        %v2265 = vunpack.c.l.b16 %v2116
        %v2266 = vunpack.c.l.b16 %v2117
        %v2267 = vpack.c.b16 %v2264, %v2263
        %v2268 = vpack.c.b16 %v2266, %v2265
        %v2273 = vunpack.c.l.b16 %v1683
        %v2274 = vunpack.c.l.b16 %v1684
        %v2275 = vunpack.c.l.b16 %v1685
        %v2276 = vunpack.c.l.b16 %v1686
        %v2277 = vpack.c.b16 %v2274, %v2273
        %v2278 = vpack.c.b16 %v2276, %v2275
        %v2282 = vsel %vm995, %v2267, 0
        %v2285 = vsel %vm995, %v2268, 0
        %2287 = vmatpush.bf16.msra.mxu0 0
        %2288 = vmatpush.bf16.msra.mxu0 0
        %2289 = vmatpush.bf16.msra.mxu0 0
        %2290 = vmatpush.bf16.msra.mxu0 0
        %2291 = vmatpush.bf16.msra.mxu0 0
        %2292 = vmatpush.bf16.msra.mxu0 0
        %2293 = vmatpush.bf16.msra.mxu0 %v2278
        %2294 = vmatpush.bf16.msra.mxu0 %v2277
        %2295 = vmatmul.bf16.gmra.mxu0 %v2282
        %v2296 = vpop.f32.mrf.mxu0
        %v2297 = vadd.f32 0.0, %v2296
        %v2298 = vpop.f32.mrf.mxu0
        %v2299 = vadd.f32 0.0, %v2298
        %2300 = vmatmul.bf16.gmra.mxu0 %v2285
        %v2301 = vpop.f32.mrf.mxu0
        %v2302 = vadd.f32 0.0, %v2301
        %v2303 = vpop.f32.mrf.mxu0
        %v2304 = vadd.f32 0.0, %v2303
        %2305 = vdwg.mxu0
        %s2306 = scalar_lea.vmem %s780, 16
        %v2307 = vld [vmem:[%s2306] sm:$0xf]
        %v2308 = vld [vmem:[%s2306 + $0x4] sm:$0xf]
        %v2309 = vld [vmem:[%s2306 + $0x8] sm:$0xf]
        %v2310 = vld [vmem:[%s2306 + $0xc] sm:$0xf]
        %s2311 = scalar_lea.vmem %s785, 1
        %v2312 = vld [vmem:[%s2311] sm:$0x1]
        %v2314 = vperm.slane %v2312, 0
        %v2320 = vunpack.c.l.b16 %v2307
        %v2321 = vunpack.c.l.b16 %v2308
        %v2322 = vunpack.c.l.b16 %v2309
        %v2323 = vunpack.c.l.b16 %v2310
        %v2324 = vpack.c.b16 %v2321, %v2320
        %v2325 = vpack.c.b16 %v2323, %v2322
        %2328 = vmatpush.bf16.msra.mxu0 0
        %2329 = vmatpush.bf16.msra.mxu0 0
        %2330 = vmatpush.bf16.msra.mxu0 0
        %2331 = vmatpush.bf16.msra.mxu0 0
        %2332 = vmatpush.bf16.msra.mxu0 0
        %2333 = vmatpush.bf16.msra.mxu0 0
        %2334 = vmatpush.bf16.msra.mxu0 %v2325
        %2335 = vmatpush.bf16.msra.mxu0 %v2324
        %2336 = vmatmul.bf16.gmra.mxu0 %v1425
        %v2337 = vpop.f32.mrf.mxu0
        %v2338 = vadd.f32 %v2314, %v2337
        %v2339 = vpop.f32.mrf.mxu0
        %v2340 = vadd.f32 %v2314, %v2339
        %2341 = vmatmul.bf16.gmra.mxu0 %v1428
        %v2342 = vpop.f32.mrf.mxu0
        %v2343 = vadd.f32 %v2314, %v2342
        %v2344 = vpop.f32.mrf.mxu0
        %v2345 = vadd.f32 %v2314, %v2344
        %2346 = vmatmul.bf16.gmra.mxu0 %v1431
        %v2347 = vpop.f32.mrf.mxu0
        %v2348 = vadd.f32 %v2314, %v2347
        %v2349 = vpop.f32.mrf.mxu0
        %v2350 = vadd.f32 %v2314, %v2349
        %2351 = vmatmul.bf16.gmra.mxu0 %v1434
        %v2352 = vpop.f32.mrf.mxu0
        %v2353 = vadd.f32 %v2314, %v2352
        %v2354 = vpop.f32.mrf.mxu0
        %v2355 = vadd.f32 %v2314, %v2354
        %2356 = vmatmul.bf16.gmra.mxu0 %v1437
        %v2357 = vpop.f32.mrf.mxu0
        %v2358 = vadd.f32 %v2314, %v2357
        %v2359 = vpop.f32.mrf.mxu0
        %v2360 = vadd.f32 %v2314, %v2359
        %2361 = vmatmul.bf16.gmra.mxu0 %v1440
        %v2362 = vpop.f32.mrf.mxu0
        %v2363 = vadd.f32 %v2314, %v2362
        %v2364 = vpop.f32.mrf.mxu0
        %v2365 = vadd.f32 %v2314, %v2364
        %2366 = vmatmul.bf16.gmra.mxu0 %v1443
        %v2367 = vpop.f32.mrf.mxu0
        %v2368 = vadd.f32 %v2314, %v2367
        %v2369 = vpop.f32.mrf.mxu0
        %v2370 = vadd.f32 %v2314, %v2369
        %2371 = vmatmul.bf16.gmra.mxu0 %v1446
        %v2372 = vpop.f32.mrf.mxu0
        %v2373 = vadd.f32 %v2314, %v2372
        %v2374 = vpop.f32.mrf.mxu0
        %v2375 = vadd.f32 %v2314, %v2374
        %2376 = vdwg.mxu0
        %s2377 = scalar_lea.vmem %s780, 48
        %v2378 = vld [vmem:[%s2377] sm:$0xf]
        %v2379 = vld [vmem:[%s2377 + $0x4] sm:$0xf]
        %v2380 = vld [vmem:[%s2377 + $0x8] sm:$0xf]
        %v2381 = vld [vmem:[%s2377 + $0xc] sm:$0xf]
        %s2382 = scalar_lea.vmem %s785, 3
        %v2383 = vld [vmem:[%s2382] sm:$0x1]
        %v2385 = vperm.slane %v2383, 0
        %v2391 = vunpack.c.l.b16 %v2378
        %v2392 = vunpack.c.l.b16 %v2379
        %v2393 = vunpack.c.l.b16 %v2380
        %v2394 = vunpack.c.l.b16 %v2381
        %v2395 = vpack.c.b16 %v2392, %v2391
        %v2396 = vpack.c.b16 %v2394, %v2393
        %2399 = vmatpush.bf16.msra.mxu0 0
        %2400 = vmatpush.bf16.msra.mxu0 0
        %2401 = vmatpush.bf16.msra.mxu0 0
        %2402 = vmatpush.bf16.msra.mxu0 0
        %2403 = vmatpush.bf16.msra.mxu0 0
        %2404 = vmatpush.bf16.msra.mxu0 0
        %2405 = vmatpush.bf16.msra.mxu0 %v2396
        %2406 = vmatpush.bf16.msra.mxu0 %v2395
        %2407 = vmatmul.bf16.gmra.mxu0 %v1425
        %v2408 = vpop.f32.mrf.mxu0
        %v2409 = vadd.f32 %v2385, %v2408
        %v2410 = vpop.f32.mrf.mxu0
        %v2411 = vadd.f32 %v2385, %v2410
        %2412 = vmatmul.bf16.gmra.mxu0 %v1428
        %v2413 = vpop.f32.mrf.mxu0
        %v2414 = vadd.f32 %v2385, %v2413
        %v2415 = vpop.f32.mrf.mxu0
        %v2416 = vadd.f32 %v2385, %v2415
        %2417 = vmatmul.bf16.gmra.mxu0 %v1431
        %v2418 = vpop.f32.mrf.mxu0
        %v2419 = vadd.f32 %v2385, %v2418
        %v2420 = vpop.f32.mrf.mxu0
        %v2421 = vadd.f32 %v2385, %v2420
        %2422 = vmatmul.bf16.gmra.mxu0 %v1434
        %v2423 = vpop.f32.mrf.mxu0
        %v2424 = vadd.f32 %v2385, %v2423
        %v2425 = vpop.f32.mrf.mxu0
        %v2426 = vadd.f32 %v2385, %v2425
        %2427 = vmatmul.bf16.gmra.mxu0 %v1437
        %v2428 = vpop.f32.mrf.mxu0
        %v2429 = vadd.f32 %v2385, %v2428
        %v2430 = vpop.f32.mrf.mxu0
        %v2431 = vadd.f32 %v2385, %v2430
        %2432 = vmatmul.bf16.gmra.mxu0 %v1440
        %v2433 = vpop.f32.mrf.mxu0
        %v2434 = vadd.f32 %v2385, %v2433
        %v2435 = vpop.f32.mrf.mxu0
        %v2436 = vadd.f32 %v2385, %v2435
        %2437 = vmatmul.bf16.gmra.mxu0 %v1443
        %v2438 = vpop.f32.mrf.mxu0
        %v2439 = vadd.f32 %v2385, %v2438
        %v2440 = vpop.f32.mrf.mxu0
        %v2441 = vadd.f32 %v2385, %v2440
        %2442 = vmatmul.bf16.gmra.mxu0 %v1446
        %v2443 = vpop.f32.mrf.mxu0
        %v2444 = vadd.f32 %v2385, %v2443
        %v2445 = vpop.f32.mrf.mxu0
        %v2446 = vadd.f32 %v2385, %v2445
        %2447 = vdwg.mxu0
        %s2448 = scalar_lea.vmem %s780, 80
        %v2449 = vld [vmem:[%s2448] sm:$0xf]
        %v2450 = vld [vmem:[%s2448 + $0x4] sm:$0xf]
        %v2451 = vld [vmem:[%s2448 + $0x8] sm:$0xf]
        %v2452 = vld [vmem:[%s2448 + $0xc] sm:$0xf]
        %s2453 = scalar_lea.vmem %s785, 5
        %v2454 = vld [vmem:[%s2453] sm:$0x1]
        %v2456 = vperm.slane %v2454, 0
        %v2462 = vunpack.c.l.b16 %v2449
        %v2463 = vunpack.c.l.b16 %v2450
        %v2464 = vunpack.c.l.b16 %v2451
        %v2465 = vunpack.c.l.b16 %v2452
        %v2466 = vpack.c.b16 %v2463, %v2462
        %v2467 = vpack.c.b16 %v2465, %v2464
        %2470 = vmatpush.bf16.msra.mxu0 0
        %2471 = vmatpush.bf16.msra.mxu0 0
        %2472 = vmatpush.bf16.msra.mxu0 0
        %2473 = vmatpush.bf16.msra.mxu0 0
        %2474 = vmatpush.bf16.msra.mxu0 0
        %2475 = vmatpush.bf16.msra.mxu0 0
        %2476 = vmatpush.bf16.msra.mxu0 %v2467
        %2477 = vmatpush.bf16.msra.mxu0 %v2466
        %2478 = vmatmul.bf16.gmra.mxu0 %v1425
        %v2479 = vpop.f32.mrf.mxu0
        %v2480 = vadd.f32 %v2456, %v2479
        %v2481 = vpop.f32.mrf.mxu0
        %v2482 = vadd.f32 %v2456, %v2481
        %2483 = vmatmul.bf16.gmra.mxu0 %v1428
        %v2484 = vpop.f32.mrf.mxu0
        %v2485 = vadd.f32 %v2456, %v2484
        %v2486 = vpop.f32.mrf.mxu0
        %v2487 = vadd.f32 %v2456, %v2486
        %2488 = vmatmul.bf16.gmra.mxu0 %v1431
        %v2489 = vpop.f32.mrf.mxu0
        %v2490 = vadd.f32 %v2456, %v2489
        %v2491 = vpop.f32.mrf.mxu0
        %v2492 = vadd.f32 %v2456, %v2491
        %2493 = vmatmul.bf16.gmra.mxu0 %v1434
        %v2494 = vpop.f32.mrf.mxu0
        %v2495 = vadd.f32 %v2456, %v2494
        %v2496 = vpop.f32.mrf.mxu0
        %v2497 = vadd.f32 %v2456, %v2496
        %2498 = vmatmul.bf16.gmra.mxu0 %v1437
        %v2499 = vpop.f32.mrf.mxu0
        %v2500 = vadd.f32 %v2456, %v2499
        %v2501 = vpop.f32.mrf.mxu0
        %v2502 = vadd.f32 %v2456, %v2501
        %2503 = vmatmul.bf16.gmra.mxu0 %v1440
        %v2504 = vpop.f32.mrf.mxu0
        %v2505 = vadd.f32 %v2456, %v2504
        %v2506 = vpop.f32.mrf.mxu0
        %v2507 = vadd.f32 %v2456, %v2506
        %2508 = vmatmul.bf16.gmra.mxu0 %v1443
        %v2509 = vpop.f32.mrf.mxu0
        %v2510 = vadd.f32 %v2456, %v2509
        %v2511 = vpop.f32.mrf.mxu0
        %v2512 = vadd.f32 %v2456, %v2511
        %2513 = vmatmul.bf16.gmra.mxu0 %v1446
        %v2514 = vpop.f32.mrf.mxu0
        %v2515 = vadd.f32 %v2456, %v2514
        %v2516 = vpop.f32.mrf.mxu0
        %v2517 = vadd.f32 %v2456, %v2516
        %2518 = vdwg.mxu0
        %v2519 = vpack.c.bf16 %v2338, %v2338
        %v2520 = vpack.c.bf16 %v2340, %v2340
        %v2521 = vpack.c.bf16 %v2343, %v2343
        %v2522 = vpack.c.bf16 %v2345, %v2345
        %v2523 = vpack.c.bf16 %v2348, %v2348
        %v2524 = vpack.c.bf16 %v2350, %v2350
        %v2525 = vpack.c.bf16 %v2353, %v2353
        %v2526 = vpack.c.bf16 %v2355, %v2355
        %v2527 = vpack.c.bf16 %v2358, %v2358
        %v2528 = vpack.c.bf16 %v2360, %v2360
        %v2529 = vpack.c.bf16 %v2363, %v2363
        %v2530 = vpack.c.bf16 %v2365, %v2365
        %v2531 = vpack.c.bf16 %v2368, %v2368
        %v2532 = vpack.c.bf16 %v2370, %v2370
        %v2533 = vpack.c.bf16 %v2373, %v2373
        %v2534 = vpack.c.bf16 %v2375, %v2375
        %v2535 = vpack.c.bf16 %v2409, %v2409
        %v2536 = vpack.c.bf16 %v2411, %v2411
        %v2537 = vpack.c.bf16 %v2414, %v2414
        %v2538 = vpack.c.bf16 %v2416, %v2416
        %v2539 = vpack.c.bf16 %v2419, %v2419
        %v2540 = vpack.c.bf16 %v2421, %v2421
        %v2541 = vpack.c.bf16 %v2424, %v2424
        %v2542 = vpack.c.bf16 %v2426, %v2426
        %v2543 = vpack.c.bf16 %v2429, %v2429
        %v2544 = vpack.c.bf16 %v2431, %v2431
        %v2545 = vpack.c.bf16 %v2434, %v2434
        %v2546 = vpack.c.bf16 %v2436, %v2436
        %v2547 = vpack.c.bf16 %v2439, %v2439
        %v2548 = vpack.c.bf16 %v2441, %v2441
        %v2549 = vpack.c.bf16 %v2444, %v2444
        %v2550 = vpack.c.bf16 %v2446, %v2446
        %v2551 = vpack.c.bf16 %v2480, %v2480
        %v2552 = vpack.c.bf16 %v2482, %v2482
        %v2553 = vpack.c.bf16 %v2485, %v2485
        %v2554 = vpack.c.bf16 %v2487, %v2487
        %v2555 = vpack.c.bf16 %v2490, %v2490
        %v2556 = vpack.c.bf16 %v2492, %v2492
        %v2557 = vpack.c.bf16 %v2495, %v2495
        %v2558 = vpack.c.bf16 %v2497, %v2497
        %v2559 = vpack.c.bf16 %v2500, %v2500
        %v2560 = vpack.c.bf16 %v2502, %v2502
        %v2561 = vpack.c.bf16 %v2505, %v2505
        %v2562 = vpack.c.bf16 %v2507, %v2507
        %v2563 = vpack.c.bf16 %v2510, %v2510
        %v2564 = vpack.c.bf16 %v2512, %v2512
        %v2565 = vpack.c.bf16 %v2515, %v2515
        %v2566 = vpack.c.bf16 %v2517, %v2517
        %v2571 = vunpack.c.l.b16 %v2519
        %v2572 = vunpack.c.l.b16 %v2520
        %v2573 = vunpack.c.l.b16 %v2521
        %v2574 = vunpack.c.l.b16 %v2522
        %v2575 = vpack.c.b16 %v2572, %v2571
        %v2576 = vpack.c.b16 %v2574, %v2573
        %v2581 = vunpack.c.l.b16 %v2535
        %v2582 = vunpack.c.l.b16 %v2536
        %v2583 = vunpack.c.l.b16 %v2537
        %v2584 = vunpack.c.l.b16 %v2538
        %v2585 = vpack.c.b16 %v2582, %v2581
        %v2586 = vpack.c.b16 %v2584, %v2583
        %v2588 = vsel %vm1707, %v2575, 0
        %v2591 = vsel %vm1707, %v2576, 0
        %v2594 = vsel %vm1707, %v2585, 0
        %v2597 = vsel %vm1707, %v2586, 0
        %2599 = vmatpush.bf16.xpose.msra.mxu0 0
        %2600 = vmatpush.bf16.xpose.msra.mxu0 0
        %2601 = vmatpush.bf16.xpose.msra.mxu0 0
        %2602 = vmatpush.bf16.xpose.msra.mxu0 0
        %2603 = vmatpush.bf16.xpose.msra.mxu0 0
        %2604 = vmatpush.bf16.xpose.msra.mxu0 0
        %2605 = vmatpush.bf16.xpose.msra.mxu0 %v2597
        %2606 = vmatpush.bf16.xpose.msra.mxu0 %v2594
        %2607 = vmatmul.bf16.gmra.mxu0 %v2588
        %v2608 = vpop.f32.mrf.mxu0
        %v2609 = vadd.f32 0.0, %v2608
        %v2610 = vpop.f32.mrf.mxu0
        %v2611 = vadd.f32 0.0, %v2610
        %2612 = vmatmul.bf16.gmra.mxu0 %v2591
        %v2613 = vpop.f32.mrf.mxu0
        %v2614 = vadd.f32 0.0, %v2613
        %v2615 = vpop.f32.mrf.mxu0
        %v2616 = vadd.f32 0.0, %v2615
        %2617 = vdwg.mxu0
        %v2622 = vunpack.c.l.b16 %v2523
        %v2623 = vunpack.c.l.b16 %v2524
        %v2624 = vunpack.c.l.b16 %v2525
        %v2625 = vunpack.c.l.b16 %v2526
        %v2626 = vpack.c.b16 %v2623, %v2622
        %v2627 = vpack.c.b16 %v2625, %v2624
        %v2632 = vunpack.c.l.b16 %v2539
        %v2633 = vunpack.c.l.b16 %v2540
        %v2634 = vunpack.c.l.b16 %v2541
        %v2635 = vunpack.c.l.b16 %v2542
        %v2636 = vpack.c.b16 %v2633, %v2632
        %v2637 = vpack.c.b16 %v2635, %v2634
        %v2639 = vsel %vm1707, %v2626, 0
        %v2642 = vsel %vm1707, %v2627, 0
        %v2645 = vsel %vm1707, %v2636, 0
        %v2648 = vsel %vm1707, %v2637, 0
        %2650 = vmatpush.bf16.xpose.msra.mxu0 0
        %2651 = vmatpush.bf16.xpose.msra.mxu0 0
        %2652 = vmatpush.bf16.xpose.msra.mxu0 0
        %2653 = vmatpush.bf16.xpose.msra.mxu0 0
        %2654 = vmatpush.bf16.xpose.msra.mxu0 0
        %2655 = vmatpush.bf16.xpose.msra.mxu0 0
        %2656 = vmatpush.bf16.xpose.msra.mxu0 %v2648
        %2657 = vmatpush.bf16.xpose.msra.mxu0 %v2645
        %2658 = vmatmul.bf16.gmra.mxu0 %v2639
        %v2659 = vpop.f32.mrf.mxu0
        %v2660 = vadd.f32 0.0, %v2659
        %v2661 = vpop.f32.mrf.mxu0
        %v2662 = vadd.f32 0.0, %v2661
        %2663 = vmatmul.bf16.gmra.mxu0 %v2642
        %v2664 = vpop.f32.mrf.mxu0
        %v2665 = vadd.f32 0.0, %v2664
        %v2666 = vpop.f32.mrf.mxu0
        %v2667 = vadd.f32 0.0, %v2666
        %2668 = vdwg.mxu0
        %v2673 = vunpack.c.l.b16 %v2527
        %v2674 = vunpack.c.l.b16 %v2528
        %v2675 = vunpack.c.l.b16 %v2529
        %v2676 = vunpack.c.l.b16 %v2530
        %v2677 = vpack.c.b16 %v2674, %v2673
        %v2678 = vpack.c.b16 %v2676, %v2675
        %v2683 = vunpack.c.l.b16 %v2543
        %v2684 = vunpack.c.l.b16 %v2544
        %v2685 = vunpack.c.l.b16 %v2545
        %v2686 = vunpack.c.l.b16 %v2546
        %v2687 = vpack.c.b16 %v2684, %v2683
        %v2688 = vpack.c.b16 %v2686, %v2685
        %v2690 = vsel %vm1707, %v2677, 0
        %v2693 = vsel %vm1707, %v2678, 0
        %v2696 = vsel %vm1707, %v2687, 0
        %v2699 = vsel %vm1707, %v2688, 0
        %2701 = vmatpush.bf16.xpose.msra.mxu0 0
        %2702 = vmatpush.bf16.xpose.msra.mxu0 0
        %2703 = vmatpush.bf16.xpose.msra.mxu0 0
        %2704 = vmatpush.bf16.xpose.msra.mxu0 0
        %2705 = vmatpush.bf16.xpose.msra.mxu0 0
        %2706 = vmatpush.bf16.xpose.msra.mxu0 0
        %2707 = vmatpush.bf16.xpose.msra.mxu0 %v2699
        %2708 = vmatpush.bf16.xpose.msra.mxu0 %v2696
        %2709 = vmatmul.bf16.gmra.mxu0 %v2690
        %v2710 = vpop.f32.mrf.mxu0
        %v2711 = vadd.f32 0.0, %v2710
        %v2712 = vpop.f32.mrf.mxu0
        %v2713 = vadd.f32 0.0, %v2712
        %2714 = vmatmul.bf16.gmra.mxu0 %v2693
        %v2715 = vpop.f32.mrf.mxu0
        %v2716 = vadd.f32 0.0, %v2715
        %v2717 = vpop.f32.mrf.mxu0
        %v2718 = vadd.f32 0.0, %v2717
        %2719 = vdwg.mxu0
        %v2724 = vunpack.c.l.b16 %v2531
        %v2725 = vunpack.c.l.b16 %v2532
        %v2726 = vunpack.c.l.b16 %v2533
        %v2727 = vunpack.c.l.b16 %v2534
        %v2728 = vpack.c.b16 %v2725, %v2724
        %v2729 = vpack.c.b16 %v2727, %v2726
        %v2734 = vunpack.c.l.b16 %v2547
        %v2735 = vunpack.c.l.b16 %v2548
        %v2736 = vunpack.c.l.b16 %v2549
        %v2737 = vunpack.c.l.b16 %v2550
        %v2738 = vpack.c.b16 %v2735, %v2734
        %v2739 = vpack.c.b16 %v2737, %v2736
        %v2741 = vsel %vm1707, %v2728, 0
        %v2744 = vsel %vm1707, %v2729, 0
        %v2747 = vsel %vm1707, %v2738, 0
        %v2750 = vsel %vm1707, %v2739, 0
        %2752 = vmatpush.bf16.xpose.msra.mxu0 0
        %2753 = vmatpush.bf16.xpose.msra.mxu0 0
        %2754 = vmatpush.bf16.xpose.msra.mxu0 0
        %2755 = vmatpush.bf16.xpose.msra.mxu0 0
        %2756 = vmatpush.bf16.xpose.msra.mxu0 0
        %2757 = vmatpush.bf16.xpose.msra.mxu0 0
        %2758 = vmatpush.bf16.xpose.msra.mxu0 %v2750
        %2759 = vmatpush.bf16.xpose.msra.mxu0 %v2747
        %2760 = vmatmul.bf16.gmra.mxu0 %v2741
        %v2761 = vpop.f32.mrf.mxu0
        %v2762 = vadd.f32 0.0, %v2761
        %v2763 = vpop.f32.mrf.mxu0
        %v2764 = vadd.f32 0.0, %v2763
        %2765 = vmatmul.bf16.gmra.mxu0 %v2744
        %v2766 = vpop.f32.mrf.mxu0
        %v2767 = vadd.f32 0.0, %v2766
        %v2768 = vpop.f32.mrf.mxu0
        %v2769 = vadd.f32 0.0, %v2768
        %2770 = vdwg.mxu0
        %v2771 = vmul.f32 %v2609, 0.25
        %v2772 = vmul.f32 %v2611, 0.25
        %v2773 = vmul.f32 %v2614, 0.25
        %v2774 = vmul.f32 %v2616, 0.25
        %v2775 = vmul.f32 %v2660, 0.25
        %v2776 = vmul.f32 %v2662, 0.25
        %v2777 = vmul.f32 %v2665, 0.25
        %v2778 = vmul.f32 %v2667, 0.25
        %v2779 = vmul.f32 %v2711, 0.25
        %v2780 = vmul.f32 %v2713, 0.25
        %v2781 = vmul.f32 %v2716, 0.25
        %v2782 = vmul.f32 %v2718, 0.25
        %v2783 = vmul.f32 %v2762, 0.25
        %v2784 = vmul.f32 %v2764, 0.25
        %v2785 = vmul.f32 %v2767, 0.25
        %v2786 = vmul.f32 %v2769, 0.25
        %v2787 = vsel %vm1909, %v2771, -1e+30
        %v2788 = vsel %vm1909, %v2772, -1e+30
        %v2789 = vsel %vm1909, %v2773, -1e+30
        %v2790 = vsel %vm1909, %v2774, -1e+30
        %v2791 = vsel %vm1909, %v2775, -1e+30
        %v2792 = vsel %vm1909, %v2776, -1e+30
        %v2793 = vsel %vm1909, %v2777, -1e+30
        %v2794 = vsel %vm1909, %v2778, -1e+30
        %v2795 = vsel %vm1909, %v2779, -1e+30
        %v2796 = vsel %vm1909, %v2780, -1e+30
        %v2797 = vsel %vm1909, %v2781, -1e+30
        %v2798 = vsel %vm1909, %v2782, -1e+30
        %v2799 = vsel %vm1909, %v2783, -1e+30
        %v2800 = vsel %vm1909, %v2784, -1e+30
        %v2801 = vsel %vm1909, %v2785, -1e+30
        %v2802 = vsel %vm1909, %v2786, -1e+30
        %v2803 = vsel %vm995, %v2787, -inf
        %2804 = vmax.xlane.f32.xlu0 %v2803
        %v2805 = vpop.xlane.xlu0 %2804
        %v2806 = vsel %vm995, %v2788, -inf
        %2807 = vmax.xlane.f32.xlu0 %v2806
        %v2808 = vpop.xlane.xlu0 %2807
        %v2809 = vsel %vm995, %v2789, -inf
        %2810 = vmax.xlane.f32.xlu0 %v2809
        %v2811 = vpop.xlane.xlu0 %2810
        %v2812 = vsel %vm995, %v2790, -inf
        %2813 = vmax.xlane.f32.xlu0 %v2812
        %v2814 = vpop.xlane.xlu0 %2813
        %v2815 = vsel %vm995, %v2791, -inf
        %2816 = vmax.xlane.f32.xlu0 %v2815
        %v2817 = vpop.xlane.xlu0 %2816
        %v2818 = vsel %vm995, %v2792, -inf
        %2819 = vmax.xlane.f32.xlu0 %v2818
        %v2820 = vpop.xlane.xlu0 %2819
        %v2821 = vsel %vm995, %v2793, -inf
        %2822 = vmax.xlane.f32.xlu0 %v2821
        %v2823 = vpop.xlane.xlu0 %2822
        %v2824 = vsel %vm995, %v2794, -inf
        %2825 = vmax.xlane.f32.xlu0 %v2824
        %v2826 = vpop.xlane.xlu0 %2825
        %v2827 = vsel %vm995, %v2795, -inf
        %2828 = vmax.xlane.f32.xlu0 %v2827
        %v2829 = vpop.xlane.xlu0 %2828
        %v2830 = vsel %vm995, %v2796, -inf
        %2831 = vmax.xlane.f32.xlu0 %v2830
        %v2832 = vpop.xlane.xlu0 %2831
        %v2833 = vsel %vm995, %v2797, -inf
        %2834 = vmax.xlane.f32.xlu0 %v2833
        %v2835 = vpop.xlane.xlu0 %2834
        %v2836 = vsel %vm995, %v2798, -inf
        %2837 = vmax.xlane.f32.xlu0 %v2836
        %v2838 = vpop.xlane.xlu0 %2837
        %v2839 = vsel %vm995, %v2799, -inf
        %2840 = vmax.xlane.f32.xlu0 %v2839
        %v2841 = vpop.xlane.xlu0 %2840
        %v2842 = vsel %vm995, %v2800, -inf
        %2843 = vmax.xlane.f32.xlu0 %v2842
        %v2844 = vpop.xlane.xlu0 %2843
        %v2845 = vsel %vm995, %v2801, -inf
        %2846 = vmax.xlane.f32.xlu0 %v2845
        %v2847 = vpop.xlane.xlu0 %2846
        %v2848 = vsel %vm995, %v2802, -inf
        %2849 = vmax.xlane.f32.xlu0 %v2848
        %v2850 = vpop.xlane.xlu0 %2849
        %v2851 = vsub.f32 %v2787, %v2805
        %v2852 = vsub.f32 %v2788, %v2808
        %v2853 = vsub.f32 %v2789, %v2811
        %v2854 = vsub.f32 %v2790, %v2814
        %v2855 = vsub.f32 %v2791, %v2817
        %v2856 = vsub.f32 %v2792, %v2820
        %v2857 = vsub.f32 %v2793, %v2823
        %v2858 = vsub.f32 %v2794, %v2826
        %v2859 = vsub.f32 %v2795, %v2829
        %v2860 = vsub.f32 %v2796, %v2832
        %v2861 = vsub.f32 %v2797, %v2835
        %v2862 = vsub.f32 %v2798, %v2838
        %v2863 = vsub.f32 %v2799, %v2841
        %v2864 = vsub.f32 %v2800, %v2844
        %v2865 = vsub.f32 %v2801, %v2847
        %v2866 = vsub.f32 %v2802, %v2850
        %v2867 = vmul.f32 %v2851, 1.442695
        %v2868 = vpow.pop %v2867
        %v2869 = vmul.f32 %v2852, 1.442695
        %v2870 = vpow.pop %v2869
        %v2871 = vmul.f32 %v2853, 1.442695
        %v2872 = vpow.pop %v2871
        %v2873 = vmul.f32 %v2854, 1.442695
        %v2874 = vpow.pop %v2873
        %v2875 = vmul.f32 %v2855, 1.442695
        %v2876 = vpow.pop %v2875
        %v2877 = vmul.f32 %v2856, 1.442695
        %v2878 = vpow.pop %v2877
        %v2879 = vmul.f32 %v2857, 1.442695
        %v2880 = vpow.pop %v2879
        %v2881 = vmul.f32 %v2858, 1.442695
        %v2882 = vpow.pop %v2881
        %v2883 = vmul.f32 %v2859, 1.442695
        %v2884 = vpow.pop %v2883
        %v2885 = vmul.f32 %v2860, 1.442695
        %v2886 = vpow.pop %v2885
        %v2887 = vmul.f32 %v2861, 1.442695
        %v2888 = vpow.pop %v2887
        %v2889 = vmul.f32 %v2862, 1.442695
        %v2890 = vpow.pop %v2889
        %v2891 = vmul.f32 %v2863, 1.442695
        %v2892 = vpow.pop %v2891
        %v2893 = vmul.f32 %v2864, 1.442695
        %v2894 = vpow.pop %v2893
        %v2895 = vmul.f32 %v2865, 1.442695
        %v2896 = vpow.pop %v2895
        %v2897 = vmul.f32 %v2866, 1.442695
        %v2898 = vpow.pop %v2897
        %v2899 = vsel %vm995, %v2868, 0.0
        %2900 = vadd.xlane.f32.xlu0 %v2899
        %v2901 = vpop.xlane.xlu0 %2900
        %v2902 = vsel %vm995, %v2870, 0.0
        %2903 = vadd.xlane.f32.xlu0 %v2902
        %v2904 = vpop.xlane.xlu0 %2903
        %v2905 = vsel %vm995, %v2872, 0.0
        %2906 = vadd.xlane.f32.xlu0 %v2905
        %v2907 = vpop.xlane.xlu0 %2906
        %v2908 = vsel %vm995, %v2874, 0.0
        %2909 = vadd.xlane.f32.xlu0 %v2908
        %v2910 = vpop.xlane.xlu0 %2909
        %v2911 = vsel %vm995, %v2876, 0.0
        %2912 = vadd.xlane.f32.xlu0 %v2911
        %v2913 = vpop.xlane.xlu0 %2912
        %v2914 = vsel %vm995, %v2878, 0.0
        %2915 = vadd.xlane.f32.xlu0 %v2914
        %v2916 = vpop.xlane.xlu0 %2915
        %v2917 = vsel %vm995, %v2880, 0.0
        %2918 = vadd.xlane.f32.xlu0 %v2917
        %v2919 = vpop.xlane.xlu0 %2918
        %v2920 = vsel %vm995, %v2882, 0.0
        %2921 = vadd.xlane.f32.xlu0 %v2920
        %v2922 = vpop.xlane.xlu0 %2921
        %v2923 = vsel %vm995, %v2884, 0.0
        %2924 = vadd.xlane.f32.xlu0 %v2923
        %v2925 = vpop.xlane.xlu0 %2924
        %v2926 = vsel %vm995, %v2886, 0.0
        %2927 = vadd.xlane.f32.xlu0 %v2926
        %v2928 = vpop.xlane.xlu0 %2927
        %v2929 = vsel %vm995, %v2888, 0.0
        %2930 = vadd.xlane.f32.xlu0 %v2929
        %v2931 = vpop.xlane.xlu0 %2930
        %v2932 = vsel %vm995, %v2890, 0.0
        %2933 = vadd.xlane.f32.xlu0 %v2932
        %v2934 = vpop.xlane.xlu0 %2933
        %v2935 = vsel %vm995, %v2892, 0.0
        %2936 = vadd.xlane.f32.xlu0 %v2935
        %v2937 = vpop.xlane.xlu0 %2936
        %v2938 = vsel %vm995, %v2894, 0.0
        %2939 = vadd.xlane.f32.xlu0 %v2938
        %v2940 = vpop.xlane.xlu0 %2939
        %v2941 = vsel %vm995, %v2896, 0.0
        %2942 = vadd.xlane.f32.xlu0 %v2941
        %v2943 = vpop.xlane.xlu0 %2942
        %v2944 = vsel %vm995, %v2898, 0.0
        %2945 = vadd.xlane.f32.xlu0 %v2944
        %v2946 = vpop.xlane.xlu0 %2945
        %v2947 = vrcp.pop %v2901
        %v2948 = vrcp.pop %v2904
        %v2949 = vrcp.pop %v2907
        %v2950 = vrcp.pop %v2910
        %v2951 = vrcp.pop %v2913
        %v2952 = vrcp.pop %v2916
        %v2953 = vrcp.pop %v2919
        %v2954 = vrcp.pop %v2922
        %v2955 = vrcp.pop %v2925
        %v2956 = vrcp.pop %v2928
        %v2957 = vrcp.pop %v2931
        %v2958 = vrcp.pop %v2934
        %v2959 = vrcp.pop %v2937
        %v2960 = vrcp.pop %v2940
        %v2961 = vrcp.pop %v2943
        %v2962 = vrcp.pop %v2946
        %v2963 = vmul.f32 %v2868, %v2947
        %v2964 = vmul.f32 %v2870, %v2948
        %v2965 = vmul.f32 %v2872, %v2949
        %v2966 = vmul.f32 %v2874, %v2950
        %v2967 = vmul.f32 %v2876, %v2951
        %v2968 = vmul.f32 %v2878, %v2952
        %v2969 = vmul.f32 %v2880, %v2953
        %v2970 = vmul.f32 %v2882, %v2954
        %v2971 = vmul.f32 %v2884, %v2955
        %v2972 = vmul.f32 %v2886, %v2956
        %v2973 = vmul.f32 %v2888, %v2957
        %v2974 = vmul.f32 %v2890, %v2958
        %v2975 = vmul.f32 %v2892, %v2959
        %v2976 = vmul.f32 %v2894, %v2960
        %v2977 = vmul.f32 %v2896, %v2961
        %v2978 = vmul.f32 %v2898, %v2962
        %v2979 = vpack.c.bf16 %v2963, %v2963
        %v2980 = vpack.c.bf16 %v2964, %v2964
        %v2981 = vpack.c.bf16 %v2965, %v2965
        %v2982 = vpack.c.bf16 %v2966, %v2966
        %v2983 = vpack.c.bf16 %v2967, %v2967
        %v2984 = vpack.c.bf16 %v2968, %v2968
        %v2985 = vpack.c.bf16 %v2969, %v2969
        %v2986 = vpack.c.bf16 %v2970, %v2970
        %v2987 = vpack.c.bf16 %v2971, %v2971
        %v2988 = vpack.c.bf16 %v2972, %v2972
        %v2989 = vpack.c.bf16 %v2973, %v2973
        %v2990 = vpack.c.bf16 %v2974, %v2974
        %v2991 = vpack.c.bf16 %v2975, %v2975
        %v2992 = vpack.c.bf16 %v2976, %v2976
        %v2993 = vpack.c.bf16 %v2977, %v2977
        %v2994 = vpack.c.bf16 %v2978, %v2978
        %v2999 = vunpack.c.l.b16 %v2979
        %v3000 = vunpack.c.l.b16 %v2980
        %v3001 = vunpack.c.l.b16 %v2981
        %v3002 = vunpack.c.l.b16 %v2982
        %v3003 = vpack.c.b16 %v3000, %v2999
        %v3004 = vpack.c.b16 %v3002, %v3001
        %v3009 = vunpack.c.l.b16 %v2551
        %v3010 = vunpack.c.l.b16 %v2552
        %v3011 = vunpack.c.l.b16 %v2553
        %v3012 = vunpack.c.l.b16 %v2554
        %v3013 = vpack.c.b16 %v3010, %v3009
        %v3014 = vpack.c.b16 %v3012, %v3011
        %v3018 = vsel %vm995, %v3003, 0
        %v3021 = vsel %vm995, %v3004, 0
        %3023 = vmatpush.bf16.msra.mxu0 0
        %3024 = vmatpush.bf16.msra.mxu0 0
        %3025 = vmatpush.bf16.msra.mxu0 0
        %3026 = vmatpush.bf16.msra.mxu0 0
        %3027 = vmatpush.bf16.msra.mxu0 0
        %3028 = vmatpush.bf16.msra.mxu0 0
        %3029 = vmatpush.bf16.msra.mxu0 %v3014
        %3030 = vmatpush.bf16.msra.mxu0 %v3013
        %3031 = vmatmul.bf16.gmra.mxu0 %v3018
        %v3032 = vpop.f32.mrf.mxu0
        %v3033 = vadd.f32 0.0, %v3032
        %v3034 = vpop.f32.mrf.mxu0
        %v3035 = vadd.f32 0.0, %v3034
        %3036 = vmatmul.bf16.gmra.mxu0 %v3021
        %v3037 = vpop.f32.mrf.mxu0
        %v3038 = vadd.f32 0.0, %v3037
        %v3039 = vpop.f32.mrf.mxu0
        %v3040 = vadd.f32 0.0, %v3039
        %3041 = vdwg.mxu0
        %v3046 = vunpack.c.l.b16 %v2983
        %v3047 = vunpack.c.l.b16 %v2984
        %v3048 = vunpack.c.l.b16 %v2985
        %v3049 = vunpack.c.l.b16 %v2986
        %v3050 = vpack.c.b16 %v3047, %v3046
        %v3051 = vpack.c.b16 %v3049, %v3048
        %v3056 = vunpack.c.l.b16 %v2555
        %v3057 = vunpack.c.l.b16 %v2556
        %v3058 = vunpack.c.l.b16 %v2557
        %v3059 = vunpack.c.l.b16 %v2558
        %v3060 = vpack.c.b16 %v3057, %v3056
        %v3061 = vpack.c.b16 %v3059, %v3058
        %v3065 = vsel %vm995, %v3050, 0
        %v3068 = vsel %vm995, %v3051, 0
        %3070 = vmatpush.bf16.msra.mxu0 0
        %3071 = vmatpush.bf16.msra.mxu0 0
        %3072 = vmatpush.bf16.msra.mxu0 0
        %3073 = vmatpush.bf16.msra.mxu0 0
        %3074 = vmatpush.bf16.msra.mxu0 0
        %3075 = vmatpush.bf16.msra.mxu0 0
        %3076 = vmatpush.bf16.msra.mxu0 %v3061
        %3077 = vmatpush.bf16.msra.mxu0 %v3060
        %3078 = vmatmul.bf16.gmra.mxu0 %v3065
        %v3079 = vpop.f32.mrf.mxu0
        %v3080 = vadd.f32 0.0, %v3079
        %v3081 = vpop.f32.mrf.mxu0
        %v3082 = vadd.f32 0.0, %v3081
        %3083 = vmatmul.bf16.gmra.mxu0 %v3068
        %v3084 = vpop.f32.mrf.mxu0
        %v3085 = vadd.f32 0.0, %v3084
        %v3086 = vpop.f32.mrf.mxu0
        %v3087 = vadd.f32 0.0, %v3086
        %3088 = vdwg.mxu0
        %v3093 = vunpack.c.l.b16 %v2987
        %v3094 = vunpack.c.l.b16 %v2988
        %v3095 = vunpack.c.l.b16 %v2989
        %v3096 = vunpack.c.l.b16 %v2990
        %v3097 = vpack.c.b16 %v3094, %v3093
        %v3098 = vpack.c.b16 %v3096, %v3095
        %v3103 = vunpack.c.l.b16 %v2559
        %v3104 = vunpack.c.l.b16 %v2560
        %v3105 = vunpack.c.l.b16 %v2561
        %v3106 = vunpack.c.l.b16 %v2562
        %v3107 = vpack.c.b16 %v3104, %v3103
        %v3108 = vpack.c.b16 %v3106, %v3105
        %v3112 = vsel %vm995, %v3097, 0
        %v3115 = vsel %vm995, %v3098, 0
        %3117 = vmatpush.bf16.msra.mxu0 0
        %3118 = vmatpush.bf16.msra.mxu0 0
        %3119 = vmatpush.bf16.msra.mxu0 0
        %3120 = vmatpush.bf16.msra.mxu0 0
        %3121 = vmatpush.bf16.msra.mxu0 0
        %3122 = vmatpush.bf16.msra.mxu0 0
        %3123 = vmatpush.bf16.msra.mxu0 %v3108
        %3124 = vmatpush.bf16.msra.mxu0 %v3107
        %3125 = vmatmul.bf16.gmra.mxu0 %v3112
        %v3126 = vpop.f32.mrf.mxu0
        %v3127 = vadd.f32 0.0, %v3126
        %v3128 = vpop.f32.mrf.mxu0
        %v3129 = vadd.f32 0.0, %v3128
        %3130 = vmatmul.bf16.gmra.mxu0 %v3115
        %v3131 = vpop.f32.mrf.mxu0
        %v3132 = vadd.f32 0.0, %v3131
        %v3133 = vpop.f32.mrf.mxu0
        %v3134 = vadd.f32 0.0, %v3133
        %3135 = vdwg.mxu0
        %v3140 = vunpack.c.l.b16 %v2991
        %v3141 = vunpack.c.l.b16 %v2992
        %v3142 = vunpack.c.l.b16 %v2993
        %v3143 = vunpack.c.l.b16 %v2994
        %v3144 = vpack.c.b16 %v3141, %v3140
        %v3145 = vpack.c.b16 %v3143, %v3142
        %v3150 = vunpack.c.l.b16 %v2563
        %v3151 = vunpack.c.l.b16 %v2564
        %v3152 = vunpack.c.l.b16 %v2565
        %v3153 = vunpack.c.l.b16 %v2566
        %v3154 = vpack.c.b16 %v3151, %v3150
        %v3155 = vpack.c.b16 %v3153, %v3152
        %v3159 = vsel %vm995, %v3144, 0
        %v3162 = vsel %vm995, %v3145, 0
        %3164 = vmatpush.bf16.msra.mxu0 0
        %3165 = vmatpush.bf16.msra.mxu0 0
        %3166 = vmatpush.bf16.msra.mxu0 0
        %3167 = vmatpush.bf16.msra.mxu0 0
        %3168 = vmatpush.bf16.msra.mxu0 0
        %3169 = vmatpush.bf16.msra.mxu0 0
        %3170 = vmatpush.bf16.msra.mxu0 %v3155
        %3171 = vmatpush.bf16.msra.mxu0 %v3154
        %3172 = vmatmul.bf16.gmra.mxu0 %v3159
        %v3173 = vpop.f32.mrf.mxu0
        %v3174 = vadd.f32 0.0, %v3173
        %v3175 = vpop.f32.mrf.mxu0
        %v3176 = vadd.f32 0.0, %v3175
        %3177 = vmatmul.bf16.gmra.mxu0 %v3162
        %v3178 = vpop.f32.mrf.mxu0
        %v3179 = vadd.f32 0.0, %v3178
        %v3180 = vpop.f32.mrf.mxu0
        %v3181 = vadd.f32 0.0, %v3180
        %3182 = vdwg.mxu0
        %3199 = vrot.lane.b32.xlu0 %v3033, 16
        %v3200 = vpop.permute.xlu0 %3199
        %3201 = vrot.lane.b32.xlu0 %v3035, 16
        %v3202 = vpop.permute.xlu0 %3201
        %3203 = vrot.lane.b32.xlu0 %v3038, 16
        %v3204 = vpop.permute.xlu0 %3203
        %3205 = vrot.lane.b32.xlu0 %v3040, 16
        %v3206 = vpop.permute.xlu0 %3205
        %3207 = vrot.lane.b32.xlu0 %v3080, 16
        %v3208 = vpop.permute.xlu0 %3207
        %3209 = vrot.lane.b32.xlu0 %v3082, 16
        %v3210 = vpop.permute.xlu0 %3209
        %3211 = vrot.lane.b32.xlu0 %v3085, 16
        %v3212 = vpop.permute.xlu0 %3211
        %3213 = vrot.lane.b32.xlu0 %v3087, 16
        %v3214 = vpop.permute.xlu0 %3213
        %3215 = vrot.lane.b32.xlu0 %v3127, 16
        %v3216 = vpop.permute.xlu0 %3215
        %3217 = vrot.lane.b32.xlu0 %v3129, 16
        %v3218 = vpop.permute.xlu0 %3217
        %3219 = vrot.lane.b32.xlu0 %v3132, 16
        %v3220 = vpop.permute.xlu0 %3219
        %3221 = vrot.lane.b32.xlu0 %v3134, 16
        %v3222 = vpop.permute.xlu0 %3221
        %3223 = vrot.lane.b32.xlu0 %v3174, 16
        %v3224 = vpop.permute.xlu0 %3223
        %3225 = vrot.lane.b32.xlu0 %v3176, 16
        %v3226 = vpop.permute.xlu0 %3225
        %3227 = vrot.lane.b32.xlu0 %v3179, 16
        %v3228 = vpop.permute.xlu0 %3227
        %3229 = vrot.lane.b32.xlu0 %v3181, 16
        %v3230 = vpop.permute.xlu0 %3229
        %v3247 = vsel %vm1707, %v2156, %v3200
        %v3248 = vsel %vm1707, %v2158, %v3202
        %v3249 = vsel %vm1707, %v2161, %v3204
        %v3250 = vsel %vm1707, %v2163, %v3206
        %v3251 = vsel %vm1707, %v2203, %v3208
        %v3252 = vsel %vm1707, %v2205, %v3210
        %v3253 = vsel %vm1707, %v2208, %v3212
        %v3254 = vsel %vm1707, %v2210, %v3214
        %v3255 = vsel %vm1707, %v2250, %v3216
        %v3256 = vsel %vm1707, %v2252, %v3218
        %v3257 = vsel %vm1707, %v2255, %v3220
        %v3258 = vsel %vm1707, %v2257, %v3222
        %v3259 = vsel %vm1707, %v2297, %v3224
        %v3260 = vsel %vm1707, %v2299, %v3226
        %v3261 = vsel %vm1707, %v2302, %v3228
        %v3262 = vsel %vm1707, %v2304, %v3230
        %v3263 = vpack.c.bf16 %v3248, %v3247
        %v3264 = vpack.c.bf16 %v3250, %v3249
        %v3265 = vpack.c.bf16 %v3252, %v3251
        %v3266 = vpack.c.bf16 %v3254, %v3253
        %v3267 = vpack.c.bf16 %v3256, %v3255
        %v3268 = vpack.c.bf16 %v3258, %v3257
        %v3269 = vpack.c.bf16 %v3260, %v3259
        %v3270 = vpack.c.bf16 %v3262, %v3261
        %v3271 = vld [vmem:[%s791] sm:$0xf]
        %v3272 = vld [vmem:[%s791 + $0x4] sm:$0xf]
        %v3273 = vld [vmem:[%s791 + $0x8] sm:$0xf]
        %v3274 = vld [vmem:[%s791 + $0xc] sm:$0xf]
        %v3275 = vld [vmem:[%s794] sm:$0x1]
        %v3277 = vperm.slane %v3275, 0
        %v3283 = vunpack.c.l.b16 %v3271
        %v3284 = vunpack.c.l.b16 %v3272
        %v3285 = vunpack.c.l.b16 %v3273
        %v3286 = vunpack.c.l.b16 %v3274
        %v3287 = vpack.c.b16 %v3284, %v3283
        %v3288 = vpack.c.b16 %v3286, %v3285
        %v3292 = vsel %vm995, %v3263, 0
        %v3295 = vsel %vm995, %v3264, 0
        %v3298 = vsel %vm995, %v3265, 0
        %v3301 = vsel %vm995, %v3266, 0
        %v3304 = vsel %vm995, %v3267, 0
        %v3307 = vsel %vm995, %v3268, 0
        %v3310 = vsel %vm995, %v3269, 0
        %v3313 = vsel %vm995, %v3270, 0
        %3315 = vmatpush.bf16.msra.mxu0 0
        %3316 = vmatpush.bf16.msra.mxu0 0
        %3317 = vmatpush.bf16.msra.mxu0 0
        %3318 = vmatpush.bf16.msra.mxu0 0
        %3319 = vmatpush.bf16.msra.mxu0 0
        %3320 = vmatpush.bf16.msra.mxu0 0
        %3321 = vmatpush.bf16.msra.mxu0 %v3288
        %3322 = vmatpush.bf16.msra.mxu0 %v3287
        %3323 = vmatmul.bf16.gmra.mxu0 %v3292
        %v3324 = vpop.f32.mrf.mxu0
        %v3325 = vadd.f32 %v3277, %v3324
        %v3326 = vpop.f32.mrf.mxu0
        %v3327 = vadd.f32 %v3277, %v3326
        %3328 = vmatmul.bf16.gmra.mxu0 %v3295
        %v3329 = vpop.f32.mrf.mxu0
        %v3330 = vadd.f32 %v3277, %v3329
        %v3331 = vpop.f32.mrf.mxu0
        %v3332 = vadd.f32 %v3277, %v3331
        %3333 = vmatmul.bf16.gmra.mxu0 %v3298
        %v3334 = vpop.f32.mrf.mxu0
        %v3335 = vadd.f32 %v3277, %v3334
        %v3336 = vpop.f32.mrf.mxu0
        %v3337 = vadd.f32 %v3277, %v3336
        %3338 = vmatmul.bf16.gmra.mxu0 %v3301
        %v3339 = vpop.f32.mrf.mxu0
        %v3340 = vadd.f32 %v3277, %v3339
        %v3341 = vpop.f32.mrf.mxu0
        %v3342 = vadd.f32 %v3277, %v3341
        %3343 = vmatmul.bf16.gmra.mxu0 %v3304
        %v3344 = vpop.f32.mrf.mxu0
        %v3345 = vadd.f32 %v3277, %v3344
        %v3346 = vpop.f32.mrf.mxu0
        %v3347 = vadd.f32 %v3277, %v3346
        %3348 = vmatmul.bf16.gmra.mxu0 %v3307
        %v3349 = vpop.f32.mrf.mxu0
        %v3350 = vadd.f32 %v3277, %v3349
        %v3351 = vpop.f32.mrf.mxu0
        %v3352 = vadd.f32 %v3277, %v3351
        %3353 = vmatmul.bf16.gmra.mxu0 %v3310
        %v3354 = vpop.f32.mrf.mxu0
        %v3355 = vadd.f32 %v3277, %v3354
        %v3356 = vpop.f32.mrf.mxu0
        %v3357 = vadd.f32 %v3277, %v3356
        %3358 = vmatmul.bf16.gmra.mxu0 %v3313
        %v3359 = vpop.f32.mrf.mxu0
        %v3360 = vadd.f32 %v3277, %v3359
        %v3361 = vpop.f32.mrf.mxu0
        %v3362 = vadd.f32 %v3277, %v3361
        %3363 = vdwg.mxu0
        %v3364 = vadd.f32 %v977, %v3325
        %v3365 = vadd.f32 %v978, %v3327
        %v3366 = vadd.f32 %v979, %v3330
        %v3367 = vadd.f32 %v980, %v3332
        %v3368 = vadd.f32 %v981, %v3335
        %v3369 = vadd.f32 %v982, %v3337
        %v3370 = vadd.f32 %v983, %v3340
        %v3371 = vadd.f32 %v984, %v3342
        %v3372 = vadd.f32 %v985, %v3345
        %v3373 = vadd.f32 %v986, %v3347
        %v3374 = vadd.f32 %v987, %v3350
        %v3375 = vadd.f32 %v988, %v3352
        %v3376 = vadd.f32 %v989, %v3355
        %v3377 = vadd.f32 %v990, %v3357
        %v3378 = vadd.f32 %v991, %v3360
        %v3379 = vadd.f32 %v992, %v3362
        %v3380 = vld [vmem:[%s797] sm:$0x1]
        %v3381 = vld [vmem:[%s800] sm:$0x1]
        %v3382 = vsel %vm995, %v3364, 0.0
        %3383 = vadd.xlane.f32.xlu0 %v3382
        %v3384 = vpop.xlane.xlu0 %3383
        %v3385 = vsel %vm995, %v3365, 0.0
        %3386 = vadd.xlane.f32.xlu0 %v3385
        %v3387 = vpop.xlane.xlu0 %3386
        %v3388 = vsel %vm995, %v3366, 0.0
        %3389 = vadd.xlane.f32.xlu0 %v3388
        %v3390 = vpop.xlane.xlu0 %3389
        %v3391 = vsel %vm995, %v3367, 0.0
        %3392 = vadd.xlane.f32.xlu0 %v3391
        %v3393 = vpop.xlane.xlu0 %3392
        %v3394 = vsel %vm995, %v3368, 0.0
        %3395 = vadd.xlane.f32.xlu0 %v3394
        %v3396 = vpop.xlane.xlu0 %3395
        %v3397 = vsel %vm995, %v3369, 0.0
        %3398 = vadd.xlane.f32.xlu0 %v3397
        %v3399 = vpop.xlane.xlu0 %3398
        %v3400 = vsel %vm995, %v3370, 0.0
        %3401 = vadd.xlane.f32.xlu0 %v3400
        %v3402 = vpop.xlane.xlu0 %3401
        %v3403 = vsel %vm995, %v3371, 0.0
        %3404 = vadd.xlane.f32.xlu0 %v3403
        %v3405 = vpop.xlane.xlu0 %3404
        %v3406 = vsel %vm995, %v3372, 0.0
        %3407 = vadd.xlane.f32.xlu0 %v3406
        %v3408 = vpop.xlane.xlu0 %3407
        %v3409 = vsel %vm995, %v3373, 0.0
        %3410 = vadd.xlane.f32.xlu0 %v3409
        %v3411 = vpop.xlane.xlu0 %3410
        %v3412 = vsel %vm995, %v3374, 0.0
        %3413 = vadd.xlane.f32.xlu0 %v3412
        %v3414 = vpop.xlane.xlu0 %3413
        %v3415 = vsel %vm995, %v3375, 0.0
        %3416 = vadd.xlane.f32.xlu0 %v3415
        %v3417 = vpop.xlane.xlu0 %3416
        %v3418 = vsel %vm995, %v3376, 0.0
        %3419 = vadd.xlane.f32.xlu0 %v3418
        %v3420 = vpop.xlane.xlu0 %3419
        %v3421 = vsel %vm995, %v3377, 0.0
        %3422 = vadd.xlane.f32.xlu0 %v3421
        %v3423 = vpop.xlane.xlu0 %3422
        %v3424 = vsel %vm995, %v3378, 0.0
        %3425 = vadd.xlane.f32.xlu0 %v3424
        %v3426 = vpop.xlane.xlu0 %3425
        %v3427 = vsel %vm995, %v3379, 0.0
        %3428 = vadd.xlane.f32.xlu0 %v3427
        %v3429 = vpop.xlane.xlu0 %3428
        %v3430 = vmul.f32 %v3384, %v1050
        %v3431 = vmul.f32 %v3387, %v1050
        %v3432 = vmul.f32 %v3390, %v1050
        %v3433 = vmul.f32 %v3393, %v1050
        %v3434 = vmul.f32 %v3396, %v1050
        %v3435 = vmul.f32 %v3399, %v1050
        %v3436 = vmul.f32 %v3402, %v1050
        %v3437 = vmul.f32 %v3405, %v1050
        %v3438 = vmul.f32 %v3408, %v1050
        %v3439 = vmul.f32 %v3411, %v1050
        %v3440 = vmul.f32 %v3414, %v1050
        %v3441 = vmul.f32 %v3417, %v1050
        %v3442 = vmul.f32 %v3420, %v1050
        %v3443 = vmul.f32 %v3423, %v1050
        %v3444 = vmul.f32 %v3426, %v1050
        %v3445 = vmul.f32 %v3429, %v1050
        %v3446 = vsub.f32 %v3364, %v3430
        %v3447 = vsub.f32 %v3365, %v3431
        %v3448 = vsub.f32 %v3366, %v3432
        %v3449 = vsub.f32 %v3367, %v3433
        %v3450 = vsub.f32 %v3368, %v3434
        %v3451 = vsub.f32 %v3369, %v3435
        %v3452 = vsub.f32 %v3370, %v3436
        %v3453 = vsub.f32 %v3371, %v3437
        %v3454 = vsub.f32 %v3372, %v3438
        %v3455 = vsub.f32 %v3373, %v3439
        %v3456 = vsub.f32 %v3374, %v3440
        %v3457 = vsub.f32 %v3375, %v3441
        %v3458 = vsub.f32 %v3376, %v3442
        %v3459 = vsub.f32 %v3377, %v3443
        %v3460 = vsub.f32 %v3378, %v3444
        %v3461 = vsub.f32 %v3379, %v3445
        %v3462 = vmul.f32 %v3446, %v3446
        %v3463 = vmul.f32 %v3447, %v3447
        %v3464 = vmul.f32 %v3448, %v3448
        %v3465 = vmul.f32 %v3449, %v3449
        %v3466 = vmul.f32 %v3450, %v3450
        %v3467 = vmul.f32 %v3451, %v3451
        %v3468 = vmul.f32 %v3452, %v3452
        %v3469 = vmul.f32 %v3453, %v3453
        %v3470 = vmul.f32 %v3454, %v3454
        %v3471 = vmul.f32 %v3455, %v3455
        %v3472 = vmul.f32 %v3456, %v3456
        %v3473 = vmul.f32 %v3457, %v3457
        %v3474 = vmul.f32 %v3458, %v3458
        %v3475 = vmul.f32 %v3459, %v3459
        %v3476 = vmul.f32 %v3460, %v3460
        %v3477 = vmul.f32 %v3461, %v3461
        %v3478 = vsel %vm995, %v3462, 0.0
        %3479 = vadd.xlane.f32.xlu0 %v3478
        %v3480 = vpop.xlane.xlu0 %3479
        %v3481 = vsel %vm995, %v3463, 0.0
        %3482 = vadd.xlane.f32.xlu0 %v3481
        %v3483 = vpop.xlane.xlu0 %3482
        %v3484 = vsel %vm995, %v3464, 0.0
        %3485 = vadd.xlane.f32.xlu0 %v3484
        %v3486 = vpop.xlane.xlu0 %3485
        %v3487 = vsel %vm995, %v3465, 0.0
        %3488 = vadd.xlane.f32.xlu0 %v3487
        %v3489 = vpop.xlane.xlu0 %3488
        %v3490 = vsel %vm995, %v3466, 0.0
        %3491 = vadd.xlane.f32.xlu0 %v3490
        %v3492 = vpop.xlane.xlu0 %3491
        %v3493 = vsel %vm995, %v3467, 0.0
        %3494 = vadd.xlane.f32.xlu0 %v3493
        %v3495 = vpop.xlane.xlu0 %3494
        %v3496 = vsel %vm995, %v3468, 0.0
        %3497 = vadd.xlane.f32.xlu0 %v3496
        %v3498 = vpop.xlane.xlu0 %3497
        %v3499 = vsel %vm995, %v3469, 0.0
        %3500 = vadd.xlane.f32.xlu0 %v3499
        %v3501 = vpop.xlane.xlu0 %3500
        %v3502 = vsel %vm995, %v3470, 0.0
        %3503 = vadd.xlane.f32.xlu0 %v3502
        %v3504 = vpop.xlane.xlu0 %3503
        %v3505 = vsel %vm995, %v3471, 0.0
        %3506 = vadd.xlane.f32.xlu0 %v3505
        %v3507 = vpop.xlane.xlu0 %3506
        %v3508 = vsel %vm995, %v3472, 0.0
        %3509 = vadd.xlane.f32.xlu0 %v3508
        %v3510 = vpop.xlane.xlu0 %3509
        %v3511 = vsel %vm995, %v3473, 0.0
        %3512 = vadd.xlane.f32.xlu0 %v3511
        %v3513 = vpop.xlane.xlu0 %3512
        %v3514 = vsel %vm995, %v3474, 0.0
        %3515 = vadd.xlane.f32.xlu0 %v3514
        %v3516 = vpop.xlane.xlu0 %3515
        %v3517 = vsel %vm995, %v3475, 0.0
        %3518 = vadd.xlane.f32.xlu0 %v3517
        %v3519 = vpop.xlane.xlu0 %3518
        %v3520 = vsel %vm995, %v3476, 0.0
        %3521 = vadd.xlane.f32.xlu0 %v3520
        %v3522 = vpop.xlane.xlu0 %3521
        %v3523 = vsel %vm995, %v3477, 0.0
        %3524 = vadd.xlane.f32.xlu0 %v3523
        %v3525 = vpop.xlane.xlu0 %3524
        %v3526 = vmul.f32 %v3480, %v1050
        %v3527 = vmul.f32 %v3483, %v1050
        %v3528 = vmul.f32 %v3486, %v1050
        %v3529 = vmul.f32 %v3489, %v1050
        %v3530 = vmul.f32 %v3492, %v1050
        %v3531 = vmul.f32 %v3495, %v1050
        %v3532 = vmul.f32 %v3498, %v1050
        %v3533 = vmul.f32 %v3501, %v1050
        %v3534 = vmul.f32 %v3504, %v1050
        %v3535 = vmul.f32 %v3507, %v1050
        %v3536 = vmul.f32 %v3510, %v1050
        %v3537 = vmul.f32 %v3513, %v1050
        %v3538 = vmul.f32 %v3516, %v1050
        %v3539 = vmul.f32 %v3519, %v1050
        %v3540 = vmul.f32 %v3522, %v1050
        %v3541 = vmul.f32 %v3525, %v1050
        %v3542 = vadd.f32 %v3526, 1e-12
        %v3543 = vadd.f32 %v3527, 1e-12
        %v3544 = vadd.f32 %v3528, 1e-12
        %v3545 = vadd.f32 %v3529, 1e-12
        %v3546 = vadd.f32 %v3530, 1e-12
        %v3547 = vadd.f32 %v3531, 1e-12
        %v3548 = vadd.f32 %v3532, 1e-12
        %v3549 = vadd.f32 %v3533, 1e-12
        %v3550 = vadd.f32 %v3534, 1e-12
        %v3551 = vadd.f32 %v3535, 1e-12
        %v3552 = vadd.f32 %v3536, 1e-12
        %v3553 = vadd.f32 %v3537, 1e-12
        %v3554 = vadd.f32 %v3538, 1e-12
        %v3555 = vadd.f32 %v3539, 1e-12
        %v3556 = vadd.f32 %v3540, 1e-12
        %v3557 = vadd.f32 %v3541, 1e-12
        %v3558 = vrsqrt.pop %v3542
        %v3559 = vmul.f32 %v3558, %v3542
        %v3560 = vmul.f32 %v3559, %v3558
        %v3561 = vmul.f32 0.5, %v3560
        %v3562 = vsub.f32 1.5, %v3561
        %v3563 = vmul.f32 %v3558, %v3562
        %vm3564 = vweird.f32 %v3542
        %vm3565 = vweird.f32 %v3558
        %vm3566 = vmor %vm3564, %vm3565
        %v3567 = vsel %vm3566, %v3558, %v3563
        %v3568 = vrsqrt.pop %v3543
        %v3569 = vmul.f32 %v3568, %v3543
        %v3570 = vmul.f32 %v3569, %v3568
        %v3571 = vmul.f32 0.5, %v3570
        %v3572 = vsub.f32 1.5, %v3571
        %v3573 = vmul.f32 %v3568, %v3572
        %vm3574 = vweird.f32 %v3543
        %vm3575 = vweird.f32 %v3568
        %vm3576 = vmor %vm3574, %vm3575
        %v3577 = vsel %vm3576, %v3568, %v3573
        %v3578 = vrsqrt.pop %v3544
        %v3579 = vmul.f32 %v3578, %v3544
        %v3580 = vmul.f32 %v3579, %v3578
        %v3581 = vmul.f32 0.5, %v3580
        %v3582 = vsub.f32 1.5, %v3581
        %v3583 = vmul.f32 %v3578, %v3582
        %vm3584 = vweird.f32 %v3544
        %vm3585 = vweird.f32 %v3578
        %vm3586 = vmor %vm3584, %vm3585
        %v3587 = vsel %vm3586, %v3578, %v3583
        %v3588 = vrsqrt.pop %v3545
        %v3589 = vmul.f32 %v3588, %v3545
        %v3590 = vmul.f32 %v3589, %v3588
        %v3591 = vmul.f32 0.5, %v3590
        %v3592 = vsub.f32 1.5, %v3591
        %v3593 = vmul.f32 %v3588, %v3592
        %vm3594 = vweird.f32 %v3545
        %vm3595 = vweird.f32 %v3588
        %vm3596 = vmor %vm3594, %vm3595
        %v3597 = vsel %vm3596, %v3588, %v3593
        %v3598 = vrsqrt.pop %v3546
        %v3599 = vmul.f32 %v3598, %v3546
        %v3600 = vmul.f32 %v3599, %v3598
        %v3601 = vmul.f32 0.5, %v3600
        %v3602 = vsub.f32 1.5, %v3601
        %v3603 = vmul.f32 %v3598, %v3602
        %vm3604 = vweird.f32 %v3546
        %vm3605 = vweird.f32 %v3598
        %vm3606 = vmor %vm3604, %vm3605
        %v3607 = vsel %vm3606, %v3598, %v3603
        %v3608 = vrsqrt.pop %v3547
        %v3609 = vmul.f32 %v3608, %v3547
        %v3610 = vmul.f32 %v3609, %v3608
        %v3611 = vmul.f32 0.5, %v3610
        %v3612 = vsub.f32 1.5, %v3611
        %v3613 = vmul.f32 %v3608, %v3612
        %vm3614 = vweird.f32 %v3547
        %vm3615 = vweird.f32 %v3608
        %vm3616 = vmor %vm3614, %vm3615
        %v3617 = vsel %vm3616, %v3608, %v3613
        %v3618 = vrsqrt.pop %v3548
        %v3619 = vmul.f32 %v3618, %v3548
        %v3620 = vmul.f32 %v3619, %v3618
        %v3621 = vmul.f32 0.5, %v3620
        %v3622 = vsub.f32 1.5, %v3621
        %v3623 = vmul.f32 %v3618, %v3622
        %vm3624 = vweird.f32 %v3548
        %vm3625 = vweird.f32 %v3618
        %vm3626 = vmor %vm3624, %vm3625
        %v3627 = vsel %vm3626, %v3618, %v3623
        %v3628 = vrsqrt.pop %v3549
        %v3629 = vmul.f32 %v3628, %v3549
        %v3630 = vmul.f32 %v3629, %v3628
        %v3631 = vmul.f32 0.5, %v3630
        %v3632 = vsub.f32 1.5, %v3631
        %v3633 = vmul.f32 %v3628, %v3632
        %vm3634 = vweird.f32 %v3549
        %vm3635 = vweird.f32 %v3628
        %vm3636 = vmor %vm3634, %vm3635
        %v3637 = vsel %vm3636, %v3628, %v3633
        %v3638 = vrsqrt.pop %v3550
        %v3639 = vmul.f32 %v3638, %v3550
        %v3640 = vmul.f32 %v3639, %v3638
        %v3641 = vmul.f32 0.5, %v3640
        %v3642 = vsub.f32 1.5, %v3641
        %v3643 = vmul.f32 %v3638, %v3642
        %vm3644 = vweird.f32 %v3550
        %vm3645 = vweird.f32 %v3638
        %vm3646 = vmor %vm3644, %vm3645
        %v3647 = vsel %vm3646, %v3638, %v3643
        %v3648 = vrsqrt.pop %v3551
        %v3649 = vmul.f32 %v3648, %v3551
        %v3650 = vmul.f32 %v3649, %v3648
        %v3651 = vmul.f32 0.5, %v3650
        %v3652 = vsub.f32 1.5, %v3651
        %v3653 = vmul.f32 %v3648, %v3652
        %vm3654 = vweird.f32 %v3551
        %vm3655 = vweird.f32 %v3648
        %vm3656 = vmor %vm3654, %vm3655
        %v3657 = vsel %vm3656, %v3648, %v3653
        %v3658 = vrsqrt.pop %v3552
        %v3659 = vmul.f32 %v3658, %v3552
        %v3660 = vmul.f32 %v3659, %v3658
        %v3661 = vmul.f32 0.5, %v3660
        %v3662 = vsub.f32 1.5, %v3661
        %v3663 = vmul.f32 %v3658, %v3662
        %vm3664 = vweird.f32 %v3552
        %vm3665 = vweird.f32 %v3658
        %vm3666 = vmor %vm3664, %vm3665
        %v3667 = vsel %vm3666, %v3658, %v3663
        %v3668 = vrsqrt.pop %v3553
        %v3669 = vmul.f32 %v3668, %v3553
        %v3670 = vmul.f32 %v3669, %v3668
        %v3671 = vmul.f32 0.5, %v3670
        %v3672 = vsub.f32 1.5, %v3671
        %v3673 = vmul.f32 %v3668, %v3672
        %vm3674 = vweird.f32 %v3553
        %vm3675 = vweird.f32 %v3668
        %vm3676 = vmor %vm3674, %vm3675
        %v3677 = vsel %vm3676, %v3668, %v3673
        %v3678 = vrsqrt.pop %v3554
        %v3679 = vmul.f32 %v3678, %v3554
        %v3680 = vmul.f32 %v3679, %v3678
        %v3681 = vmul.f32 0.5, %v3680
        %v3682 = vsub.f32 1.5, %v3681
        %v3683 = vmul.f32 %v3678, %v3682
        %vm3684 = vweird.f32 %v3554
        %vm3685 = vweird.f32 %v3678
        %vm3686 = vmor %vm3684, %vm3685
        %v3687 = vsel %vm3686, %v3678, %v3683
        %v3688 = vrsqrt.pop %v3555
        %v3689 = vmul.f32 %v3688, %v3555
        %v3690 = vmul.f32 %v3689, %v3688
        %v3691 = vmul.f32 0.5, %v3690
        %v3692 = vsub.f32 1.5, %v3691
        %v3693 = vmul.f32 %v3688, %v3692
        %vm3694 = vweird.f32 %v3555
        %vm3695 = vweird.f32 %v3688
        %vm3696 = vmor %vm3694, %vm3695
        %v3697 = vsel %vm3696, %v3688, %v3693
        %v3698 = vrsqrt.pop %v3556
        %v3699 = vmul.f32 %v3698, %v3556
        %v3700 = vmul.f32 %v3699, %v3698
        %v3701 = vmul.f32 0.5, %v3700
        %v3702 = vsub.f32 1.5, %v3701
        %v3703 = vmul.f32 %v3698, %v3702
        %vm3704 = vweird.f32 %v3556
        %vm3705 = vweird.f32 %v3698
        %vm3706 = vmor %vm3704, %vm3705
        %v3707 = vsel %vm3706, %v3698, %v3703
        %v3708 = vrsqrt.pop %v3557
        %v3709 = vmul.f32 %v3708, %v3557
        %v3710 = vmul.f32 %v3709, %v3708
        %v3711 = vmul.f32 0.5, %v3710
        %v3712 = vsub.f32 1.5, %v3711
        %v3713 = vmul.f32 %v3708, %v3712
        %vm3714 = vweird.f32 %v3557
        %vm3715 = vweird.f32 %v3708
        %vm3716 = vmor %vm3714, %vm3715
        %v3717 = vsel %vm3716, %v3708, %v3713
        %v3718 = vmul.f32 %v3446, %v3567
        %v3719 = vmul.f32 %v3447, %v3577
        %v3720 = vmul.f32 %v3448, %v3587
        %v3721 = vmul.f32 %v3449, %v3597
        %v3722 = vmul.f32 %v3450, %v3607
        %v3723 = vmul.f32 %v3451, %v3617
        %v3724 = vmul.f32 %v3452, %v3627
        %v3725 = vmul.f32 %v3453, %v3637
        %v3726 = vmul.f32 %v3454, %v3647
        %v3727 = vmul.f32 %v3455, %v3657
        %v3728 = vmul.f32 %v3456, %v3667
        %v3729 = vmul.f32 %v3457, %v3677
        %v3730 = vmul.f32 %v3458, %v3687
        %v3731 = vmul.f32 %v3459, %v3697
        %v3732 = vmul.f32 %v3460, %v3707
        %v3733 = vmul.f32 %v3461, %v3717
        %v3735 = vperm.slane %v3380, 0
        %v3737 = vmul.f32 %v3718, %v3735
        %v3738 = vmul.f32 %v3719, %v3735
        %v3739 = vmul.f32 %v3720, %v3735
        %v3740 = vmul.f32 %v3721, %v3735
        %v3741 = vmul.f32 %v3722, %v3735
        %v3742 = vmul.f32 %v3723, %v3735
        %v3743 = vmul.f32 %v3724, %v3735
        %v3744 = vmul.f32 %v3725, %v3735
        %v3745 = vmul.f32 %v3726, %v3735
        %v3746 = vmul.f32 %v3727, %v3735
        %v3747 = vmul.f32 %v3728, %v3735
        %v3748 = vmul.f32 %v3729, %v3735
        %v3749 = vmul.f32 %v3730, %v3735
        %v3750 = vmul.f32 %v3731, %v3735
        %v3751 = vmul.f32 %v3732, %v3735
        %v3752 = vmul.f32 %v3733, %v3735
        %v3754 = vperm.slane %v3381, 0
        %v3756 = vadd.f32 %v3737, %v3754
        %v3757 = vadd.f32 %v3738, %v3754
        %v3758 = vadd.f32 %v3739, %v3754
        %v3759 = vadd.f32 %v3740, %v3754
        %v3760 = vadd.f32 %v3741, %v3754
        %v3761 = vadd.f32 %v3742, %v3754
        %v3762 = vadd.f32 %v3743, %v3754
        %v3763 = vadd.f32 %v3744, %v3754
        %v3764 = vadd.f32 %v3745, %v3754
        %v3765 = vadd.f32 %v3746, %v3754
        %v3766 = vadd.f32 %v3747, %v3754
        %v3767 = vadd.f32 %v3748, %v3754
        %v3768 = vadd.f32 %v3749, %v3754
        %v3769 = vadd.f32 %v3750, %v3754
        %v3770 = vadd.f32 %v3751, %v3754
        %v3771 = vadd.f32 %v3752, %v3754
        %v3772 = vpack.c.bf16 %v3757, %v3756
        %v3773 = vpack.c.bf16 %v3759, %v3758
        %v3774 = vpack.c.bf16 %v3761, %v3760
        %v3775 = vpack.c.bf16 %v3763, %v3762
        %v3776 = vpack.c.bf16 %v3765, %v3764
        %v3777 = vpack.c.bf16 %v3767, %v3766
        %v3778 = vpack.c.bf16 %v3769, %v3768
        %v3779 = vpack.c.bf16 %v3771, %v3770
        %v3780 = vld [vmem:[%s805] sm:$0xf]
        %v3781 = vld [vmem:[%s805 + $0x4] sm:$0xf]
        %v3782 = vld [vmem:[%s805 + $0x8] sm:$0xf]
        %v3783 = vld [vmem:[%s805 + $0xc] sm:$0xf]
        %v3784 = vld [vmem:[%s808] sm:$0x1]
        %v3786 = vperm.slane %v3784, 0
        %v3792 = vunpack.c.l.b16 %v3780
        %v3793 = vunpack.c.l.b16 %v3781
        %v3794 = vunpack.c.l.b16 %v3782
        %v3795 = vunpack.c.l.b16 %v3783
        %v3796 = vpack.c.b16 %v3793, %v3792
        %v3797 = vpack.c.b16 %v3795, %v3794
        %v3801 = vsel %vm995, %v3772, 0
        %v3804 = vsel %vm995, %v3773, 0
        %v3807 = vsel %vm995, %v3774, 0
        %v3810 = vsel %vm995, %v3775, 0
        %v3813 = vsel %vm995, %v3776, 0
        %v3816 = vsel %vm995, %v3777, 0
        %v3819 = vsel %vm995, %v3778, 0
        %v3822 = vsel %vm995, %v3779, 0
        %3824 = vmatpush.bf16.msra.mxu0 0
        %3825 = vmatpush.bf16.msra.mxu0 0
        %3826 = vmatpush.bf16.msra.mxu0 0
        %3827 = vmatpush.bf16.msra.mxu0 0
        %3828 = vmatpush.bf16.msra.mxu0 0
        %3829 = vmatpush.bf16.msra.mxu0 0
        %3830 = vmatpush.bf16.msra.mxu0 %v3797
        %3831 = vmatpush.bf16.msra.mxu0 %v3796
        %3832 = vmatmul.bf16.gmra.mxu0 %v3801
        %v3833 = vpop.f32.mrf.mxu0
        %v3834 = vadd.f32 %v3786, %v3833
        %v3835 = vpop.f32.mrf.mxu0
        %v3836 = vadd.f32 %v3786, %v3835
        %3837 = vmatmul.bf16.gmra.mxu0 %v3804
        %v3838 = vpop.f32.mrf.mxu0
        %v3839 = vadd.f32 %v3786, %v3838
        %v3840 = vpop.f32.mrf.mxu0
        %v3841 = vadd.f32 %v3786, %v3840
        %3842 = vmatmul.bf16.gmra.mxu0 %v3807
        %v3843 = vpop.f32.mrf.mxu0
        %v3844 = vadd.f32 %v3786, %v3843
        %v3845 = vpop.f32.mrf.mxu0
        %v3846 = vadd.f32 %v3786, %v3845
        %3847 = vmatmul.bf16.gmra.mxu0 %v3810
        %v3848 = vpop.f32.mrf.mxu0
        %v3849 = vadd.f32 %v3786, %v3848
        %v3850 = vpop.f32.mrf.mxu0
        %v3851 = vadd.f32 %v3786, %v3850
        %3852 = vmatmul.bf16.gmra.mxu0 %v3813
        %v3853 = vpop.f32.mrf.mxu0
        %v3854 = vadd.f32 %v3786, %v3853
        %v3855 = vpop.f32.mrf.mxu0
        %v3856 = vadd.f32 %v3786, %v3855
        %3857 = vmatmul.bf16.gmra.mxu0 %v3816
        %v3858 = vpop.f32.mrf.mxu0
        %v3859 = vadd.f32 %v3786, %v3858
        %v3860 = vpop.f32.mrf.mxu0
        %v3861 = vadd.f32 %v3786, %v3860
        %3862 = vmatmul.bf16.gmra.mxu0 %v3819
        %v3863 = vpop.f32.mrf.mxu0
        %v3864 = vadd.f32 %v3786, %v3863
        %v3865 = vpop.f32.mrf.mxu0
        %v3866 = vadd.f32 %v3786, %v3865
        %3867 = vmatmul.bf16.gmra.mxu0 %v3822
        %v3868 = vpop.f32.mrf.mxu0
        %v3869 = vadd.f32 %v3786, %v3868
        %v3870 = vpop.f32.mrf.mxu0
        %v3871 = vadd.f32 %v3786, %v3870
        %3872 = vdwg.mxu0
        %v3873 = vmul.f32 %v3834, %v3834
        %v3874 = vmul.f32 %v3836, %v3836
        %v3875 = vmul.f32 %v3839, %v3839
        %v3876 = vmul.f32 %v3841, %v3841
        %v3877 = vmul.f32 %v3844, %v3844
        %v3878 = vmul.f32 %v3846, %v3846
        %v3879 = vmul.f32 %v3849, %v3849
        %v3880 = vmul.f32 %v3851, %v3851
        %v3881 = vmul.f32 %v3854, %v3854
        %v3882 = vmul.f32 %v3856, %v3856
        %v3883 = vmul.f32 %v3859, %v3859
        %v3884 = vmul.f32 %v3861, %v3861
        %v3885 = vmul.f32 %v3864, %v3864
        %v3886 = vmul.f32 %v3866, %v3866
        %v3887 = vmul.f32 %v3869, %v3869
        %v3888 = vmul.f32 %v3871, %v3871
        %v3889 = vmul.f32 %v3834, %v3873
        %v3890 = vmul.f32 %v3836, %v3874
        %v3891 = vmul.f32 %v3839, %v3875
        %v3892 = vmul.f32 %v3841, %v3876
        %v3893 = vmul.f32 %v3844, %v3877
        %v3894 = vmul.f32 %v3846, %v3878
        %v3895 = vmul.f32 %v3849, %v3879
        %v3896 = vmul.f32 %v3851, %v3880
        %v3897 = vmul.f32 %v3854, %v3881
        %v3898 = vmul.f32 %v3856, %v3882
        %v3899 = vmul.f32 %v3859, %v3883
        %v3900 = vmul.f32 %v3861, %v3884
        %v3901 = vmul.f32 %v3864, %v3885
        %v3902 = vmul.f32 %v3866, %v3886
        %v3903 = vmul.f32 %v3869, %v3887
        %v3904 = vmul.f32 %v3871, %v3888
        %v3905 = vmul.f32 %v3889, 0.044715
        %v3906 = vmul.f32 %v3890, 0.044715
        %v3907 = vmul.f32 %v3891, 0.044715
        %v3908 = vmul.f32 %v3892, 0.044715
        %v3909 = vmul.f32 %v3893, 0.044715
        %v3910 = vmul.f32 %v3894, 0.044715
        %v3911 = vmul.f32 %v3895, 0.044715
        %v3912 = vmul.f32 %v3896, 0.044715
        %v3913 = vmul.f32 %v3897, 0.044715
        %v3914 = vmul.f32 %v3898, 0.044715
        %v3915 = vmul.f32 %v3899, 0.044715
        %v3916 = vmul.f32 %v3900, 0.044715
        %v3917 = vmul.f32 %v3901, 0.044715
        %v3918 = vmul.f32 %v3902, 0.044715
        %v3919 = vmul.f32 %v3903, 0.044715
        %v3920 = vmul.f32 %v3904, 0.044715
        %v3921 = vadd.f32 %v3834, %v3905
        %v3922 = vadd.f32 %v3836, %v3906
        %v3923 = vadd.f32 %v3839, %v3907
        %v3924 = vadd.f32 %v3841, %v3908
        %v3925 = vadd.f32 %v3844, %v3909
        %v3926 = vadd.f32 %v3846, %v3910
        %v3927 = vadd.f32 %v3849, %v3911
        %v3928 = vadd.f32 %v3851, %v3912
        %v3929 = vadd.f32 %v3854, %v3913
        %v3930 = vadd.f32 %v3856, %v3914
        %v3931 = vadd.f32 %v3859, %v3915
        %v3932 = vadd.f32 %v3861, %v3916
        %v3933 = vadd.f32 %v3864, %v3917
        %v3934 = vadd.f32 %v3866, %v3918
        %v3935 = vadd.f32 %v3869, %v3919
        %v3936 = vadd.f32 %v3871, %v3920
        %v3937 = vmul.f32 %v3921, 0.7978846
        %v3938 = vmul.f32 %v3922, 0.7978846
        %v3939 = vmul.f32 %v3923, 0.7978846
        %v3940 = vmul.f32 %v3924, 0.7978846
        %v3941 = vmul.f32 %v3925, 0.7978846
        %v3942 = vmul.f32 %v3926, 0.7978846
        %v3943 = vmul.f32 %v3927, 0.7978846
        %v3944 = vmul.f32 %v3928, 0.7978846
        %v3945 = vmul.f32 %v3929, 0.7978846
        %v3946 = vmul.f32 %v3930, 0.7978846
        %v3947 = vmul.f32 %v3931, 0.7978846
        %v3948 = vmul.f32 %v3932, 0.7978846
        %v3949 = vmul.f32 %v3933, 0.7978846
        %v3950 = vmul.f32 %v3934, 0.7978846
        %v3951 = vmul.f32 %v3935, 0.7978846
        %v3952 = vmul.f32 %v3936, 0.7978846
        %v3953 = vtanh.pop %v3937
        %v3954 = vtanh.pop %v3938
        %v3955 = vtanh.pop %v3939
        %v3956 = vtanh.pop %v3940
        %v3957 = vtanh.pop %v3941
        %v3958 = vtanh.pop %v3942
        %v3959 = vtanh.pop %v3943
        %v3960 = vtanh.pop %v3944
        %v3961 = vtanh.pop %v3945
        %v3962 = vtanh.pop %v3946
        %v3963 = vtanh.pop %v3947
        %v3964 = vtanh.pop %v3948
        %v3965 = vtanh.pop %v3949
        %v3966 = vtanh.pop %v3950
        %v3967 = vtanh.pop %v3951
        %v3968 = vtanh.pop %v3952
        %v3969 = vadd.f32 %v3953, 1.0
        %v3970 = vadd.f32 %v3954, 1.0
        %v3971 = vadd.f32 %v3955, 1.0
        %v3972 = vadd.f32 %v3956, 1.0
        %v3973 = vadd.f32 %v3957, 1.0
        %v3974 = vadd.f32 %v3958, 1.0
        %v3975 = vadd.f32 %v3959, 1.0
        %v3976 = vadd.f32 %v3960, 1.0
        %v3977 = vadd.f32 %v3961, 1.0
        %v3978 = vadd.f32 %v3962, 1.0
        %v3979 = vadd.f32 %v3963, 1.0
        %v3980 = vadd.f32 %v3964, 1.0
        %v3981 = vadd.f32 %v3965, 1.0
        %v3982 = vadd.f32 %v3966, 1.0
        %v3983 = vadd.f32 %v3967, 1.0
        %v3984 = vadd.f32 %v3968, 1.0
        %v3985 = vmul.f32 %v3969, 0.5
        %v3986 = vmul.f32 %v3970, 0.5
        %v3987 = vmul.f32 %v3971, 0.5
        %v3988 = vmul.f32 %v3972, 0.5
        %v3989 = vmul.f32 %v3973, 0.5
        %v3990 = vmul.f32 %v3974, 0.5
        %v3991 = vmul.f32 %v3975, 0.5
        %v3992 = vmul.f32 %v3976, 0.5
        %v3993 = vmul.f32 %v3977, 0.5
        %v3994 = vmul.f32 %v3978, 0.5
        %v3995 = vmul.f32 %v3979, 0.5
        %v3996 = vmul.f32 %v3980, 0.5
        %v3997 = vmul.f32 %v3981, 0.5
        %v3998 = vmul.f32 %v3982, 0.5
        %v3999 = vmul.f32 %v3983, 0.5
        %v4000 = vmul.f32 %v3984, 0.5
        %v4001 = vmul.f32 %v3834, %v3985
        %v4002 = vmul.f32 %v3836, %v3986
        %v4003 = vmul.f32 %v3839, %v3987
        %v4004 = vmul.f32 %v3841, %v3988
        %v4005 = vmul.f32 %v3844, %v3989
        %v4006 = vmul.f32 %v3846, %v3990
        %v4007 = vmul.f32 %v3849, %v3991
        %v4008 = vmul.f32 %v3851, %v3992
        %v4009 = vmul.f32 %v3854, %v3993
        %v4010 = vmul.f32 %v3856, %v3994
        %v4011 = vmul.f32 %v3859, %v3995
        %v4012 = vmul.f32 %v3861, %v3996
        %v4013 = vmul.f32 %v3864, %v3997
        %v4014 = vmul.f32 %v3866, %v3998
        %v4015 = vmul.f32 %v3869, %v3999
        %v4016 = vmul.f32 %v3871, %v4000
        %v4017 = vpack.c.bf16 %v4002, %v4001
        %v4018 = vpack.c.bf16 %v4004, %v4003
        %v4019 = vpack.c.bf16 %v4006, %v4005
        %v4020 = vpack.c.bf16 %v4008, %v4007
        %v4021 = vpack.c.bf16 %v4010, %v4009
        %v4022 = vpack.c.bf16 %v4012, %v4011
        %v4023 = vpack.c.bf16 %v4014, %v4013
        %v4024 = vpack.c.bf16 %v4016, %v4015
        %v4025 = vld [vmem:[%s813] sm:$0xf]
        %v4026 = vld [vmem:[%s813 + $0x4] sm:$0xf]
        %v4027 = vld [vmem:[%s813 + $0x8] sm:$0xf]
        %v4028 = vld [vmem:[%s813 + $0xc] sm:$0xf]
        %v4029 = vld [vmem:[%s813 + $0x10] sm:$0xf]
        %v4030 = vld [vmem:[%s813 + $0x14] sm:$0xf]
        %v4031 = vld [vmem:[%s813 + $0x18] sm:$0xf]
        %v4032 = vld [vmem:[%s813 + $0x1c] sm:$0xf]
        %v4033 = vld [vmem:[%s813 + $0x20] sm:$0xf]
        %v4034 = vld [vmem:[%s813 + $0x24] sm:$0xf]
        %v4035 = vld [vmem:[%s813 + $0x28] sm:$0xf]
        %v4036 = vld [vmem:[%s813 + $0x2c] sm:$0xf]
        %v4037 = vld [vmem:[%s813 + $0x30] sm:$0xf]
        %v4038 = vld [vmem:[%s813 + $0x34] sm:$0xf]
        %v4039 = vld [vmem:[%s813 + $0x38] sm:$0xf]
        %v4040 = vld [vmem:[%s813 + $0x3c] sm:$0xf]
        %v4041 = vld [vmem:[%s816] sm:$0x1]
        %v4043 = vperm.slane %v4041, 0
        %v4061 = vunpack.c.l.b16 %v4025
        %v4062 = vunpack.c.l.b16 %v4026
        %v4063 = vunpack.c.l.b16 %v4027
        %v4064 = vunpack.c.l.b16 %v4028
        %v4065 = vunpack.c.l.b16 %v4029
        %v4066 = vunpack.c.l.b16 %v4030
        %v4067 = vunpack.c.l.b16 %v4031
        %v4068 = vunpack.c.l.b16 %v4032
        %v4069 = vunpack.c.l.b16 %v4033
        %v4070 = vunpack.c.l.b16 %v4034
        %v4071 = vunpack.c.l.b16 %v4035
        %v4072 = vunpack.c.l.b16 %v4036
        %v4073 = vunpack.c.l.b16 %v4037
        %v4074 = vunpack.c.l.b16 %v4038
        %v4075 = vunpack.c.l.b16 %v4039
        %v4076 = vunpack.c.l.b16 %v4040
        %v4077 = vpack.c.b16 %v4062, %v4061
        %v4078 = vpack.c.b16 %v4064, %v4063
        %v4079 = vpack.c.b16 %v4066, %v4065
        %v4080 = vpack.c.b16 %v4068, %v4067
        %v4081 = vpack.c.b16 %v4070, %v4069
        %v4082 = vpack.c.b16 %v4072, %v4071
        %v4083 = vpack.c.b16 %v4074, %v4073
        %v4084 = vpack.c.b16 %v4076, %v4075
        %4093 = vmatpush.bf16.msra.mxu0 %v4084
        %4094 = vmatpush.bf16.msra.mxu0 %v4083
        %4095 = vmatpush.bf16.msra.mxu0 %v4082
        %4096 = vmatpush.bf16.msra.mxu0 %v4081
        %4097 = vmatpush.bf16.msra.mxu0 %v4080
        %4098 = vmatpush.bf16.msra.mxu0 %v4079
        %4099 = vmatpush.bf16.msra.mxu0 %v4078
        %4100 = vmatpush.bf16.msra.mxu0 %v4077
        %4101 = vmatmul.bf16.gmra.mxu0 %v4017
        %v4102 = vpop.f32.mrf.mxu0
        %v4103 = vadd.f32 %v4043, %v4102
        %v4104 = vpop.f32.mrf.mxu0
        %v4105 = vadd.f32 %v4043, %v4104
        %4106 = vmatmul.bf16.gmra.mxu0 %v4018
        %v4107 = vpop.f32.mrf.mxu0
        %v4108 = vadd.f32 %v4043, %v4107
        %v4109 = vpop.f32.mrf.mxu0
        %v4110 = vadd.f32 %v4043, %v4109
        %4111 = vmatmul.bf16.gmra.mxu0 %v4019
        %v4112 = vpop.f32.mrf.mxu0
        %v4113 = vadd.f32 %v4043, %v4112
        %v4114 = vpop.f32.mrf.mxu0
        %v4115 = vadd.f32 %v4043, %v4114
        %4116 = vmatmul.bf16.gmra.mxu0 %v4020
        %v4117 = vpop.f32.mrf.mxu0
        %v4118 = vadd.f32 %v4043, %v4117
        %v4119 = vpop.f32.mrf.mxu0
        %v4120 = vadd.f32 %v4043, %v4119
        %4121 = vmatmul.bf16.gmra.mxu0 %v4021
        %v4122 = vpop.f32.mrf.mxu0
        %v4123 = vadd.f32 %v4043, %v4122
        %v4124 = vpop.f32.mrf.mxu0
        %v4125 = vadd.f32 %v4043, %v4124
        %4126 = vmatmul.bf16.gmra.mxu0 %v4022
        %v4127 = vpop.f32.mrf.mxu0
        %v4128 = vadd.f32 %v4043, %v4127
        %v4129 = vpop.f32.mrf.mxu0
        %v4130 = vadd.f32 %v4043, %v4129
        %4131 = vmatmul.bf16.gmra.mxu0 %v4023
        %v4132 = vpop.f32.mrf.mxu0
        %v4133 = vadd.f32 %v4043, %v4132
        %v4134 = vpop.f32.mrf.mxu0
        %v4135 = vadd.f32 %v4043, %v4134
        %4136 = vmatmul.bf16.gmra.mxu0 %v4024
        %v4137 = vpop.f32.mrf.mxu0
        %v4138 = vadd.f32 %v4043, %v4137
        %v4139 = vpop.f32.mrf.mxu0
        %v4140 = vadd.f32 %v4043, %v4139
        %4141 = vdwg.mxu0
        %v4142 = vadd.f32 %v3364, %v4103
        %v4143 = vadd.f32 %v3365, %v4105
        %v4144 = vadd.f32 %v3366, %v4108
        %v4145 = vadd.f32 %v3367, %v4110
        %v4146 = vadd.f32 %v3368, %v4113
        %v4147 = vadd.f32 %v3369, %v4115
        %v4148 = vadd.f32 %v3370, %v4118
        %v4149 = vadd.f32 %v3371, %v4120
        %v4150 = vadd.f32 %v3372, %v4123
        %v4151 = vadd.f32 %v3373, %v4125
        %v4152 = vadd.f32 %v3374, %v4128
        %v4153 = vadd.f32 %v3375, %v4130
        %v4154 = vadd.f32 %v3376, %v4133
        %v4155 = vadd.f32 %v3377, %v4135
        %v4156 = vadd.f32 %v3378, %v4138
        %v4157 = vadd.f32 %v3379, %v4140
        %4158 = vst.msk [vmem:[#allocation2] sm:$0xff] %vm995, %v4142
        %4159 = vst.msk [vmem:[#allocation2 + $0x8] sm:$0xff] %vm995, %v4143
        %4160 = vst.msk [vmem:[#allocation2 + $0x10] sm:$0xff] %vm995, %v4144
        %4161 = vst.msk [vmem:[#allocation2 + $0x18] sm:$0xff] %vm995, %v4145
        %4162 = vst.msk [vmem:[#allocation2 + $0x20] sm:$0xff] %vm995, %v4146
        %4163 = vst.msk [vmem:[#allocation2 + $0x28] sm:$0xff] %vm995, %v4147
        %4164 = vst.msk [vmem:[#allocation2 + $0x30] sm:$0xff] %vm995, %v4148
        %4165 = vst.msk [vmem:[#allocation2 + $0x38] sm:$0xff] %vm995, %v4149
        %4166 = vst.msk [vmem:[#allocation2 + $0x40] sm:$0xff] %vm995, %v4150
        %4167 = vst.msk [vmem:[#allocation2 + $0x48] sm:$0xff] %vm995, %v4151
        %4168 = vst.msk [vmem:[#allocation2 + $0x50] sm:$0xff] %vm995, %v4152
        %4169 = vst.msk [vmem:[#allocation2 + $0x58] sm:$0xff] %vm995, %v4153
        %4170 = vst.msk [vmem:[#allocation2 + $0x60] sm:$0xff] %vm995, %v4154
        %4171 = vst.msk [vmem:[#allocation2 + $0x68] sm:$0xff] %vm995, %v4155
        %4172 = vst.msk [vmem:[#allocation2 + $0x70] sm:$0xff] %vm995, %v4156
        %4173 = vst.msk [vmem:[#allocation2 + $0x78] sm:$0xff] %vm995, %v4157
        %p4174 = scmp.eq.s32.totalorder %s38, 1
        // Predicated region
        $region101: #{vit_forward.1} parent=95 // pred_check
          %p4175 = pneg %p4174
        $region102: #{vit_forward.1} parent=95 // pred_check_branch
          %4177 = sbr.rel (%p4175) target = $region104
        $region103: #{vit_forward.1} parent=95 // pred_region
          %v4179 = vrot.slane %v4146, 7
          %v4182 = vrot.slane %v4150, 6
          %v4185 = vrot.slane %v4154, 5
          %vm4187 = vcmask 1040384
          %v4188 = vsel %vm4187, %v4142, %v4179
          %vm4189 = vcmask 1041408
          %v4190 = vsel %vm4189, %v4188, %v4182
          %vm4191 = vcmask 1042432
          %v4192 = vsel %vm4191, %v4190, %v4185
          %v4193 = vld [vmem:[%s15] sm:$0x1]
          %v4194 = vld [vmem:[%s16] sm:$0x1]
          %vm4195 = vcmask 257024
          %v4196 = vsel %vm4195, %v4192, 0.0
          %4197 = vadd.xlane.f32.xlu0 %v4196
          %v4198 = vpop.xlane.xlu0 %4197
          %v4199 = vmul.f32 %v4198, %v1050
          %v4200 = vsub.f32 %v4192, %v4199
          %v4201 = vmul.f32 %v4200, %v4200
          %v4202 = vsel %vm4195, %v4201, 0.0
          %4203 = vadd.xlane.f32.xlu0 %v4202
          %v4204 = vpop.xlane.xlu0 %4203
          %v4205 = vmul.f32 %v4204, %v1050
          %v4206 = vadd.f32 %v4205, 1e-12
          %v4207 = vrsqrt.pop %v4206
          %v4208 = vmul.f32 %v4207, %v4206
          %v4209 = vmul.f32 %v4208, %v4207
          %v4210 = vmul.f32 0.5, %v4209
          %v4211 = vsub.f32 1.5, %v4210
          %v4212 = vmul.f32 %v4207, %v4211
          %vm4213 = vweird.f32 %v4206
          %vm4214 = vweird.f32 %v4207
          %vm4215 = vmor %vm4213, %vm4214
          %v4216 = vsel %vm4215, %v4207, %v4212
          %v4217 = vmul.f32 %v4200, %v4216
          %v4219 = vperm.slane %v4193, 0
          %v4221 = vmul.f32 %v4217, %v4219
          %v4223 = vperm.slane %v4194, 0
          %v4225 = vadd.f32 %v4221, %v4223
          %v4226 = vpack.c.bf16 %v4225, %v4225
          %v4227 = vld [vmem:[%s17] sm:$0xf]
          %v4228 = vld [vmem:[%s17 + $0x4] sm:$0xf]
          %v4229 = vld [vmem:[%s17 + $0x8] sm:$0xf]
          %v4230 = vld [vmem:[%s17 + $0xc] sm:$0xf]
          %v4231 = vld [vmem:[%s18] sm:$0x1]
          %v4233 = vperm.slane %v4231, 0
          %v4239 = vunpack.c.l.b16 %v4227
          %v4240 = vunpack.c.l.b16 %v4228
          %v4241 = vunpack.c.l.b16 %v4229
          %v4242 = vunpack.c.l.b16 %v4230
          %v4243 = vpack.c.b16 %v4240, %v4239
          %v4244 = vpack.c.b16 %v4242, %v4241
          %v4248 = vsel %vm995, %v4226, 0
          %4250 = vmatpush.bf16.msra.mxu0 0
          %4251 = vmatpush.bf16.msra.mxu0 0
          %4252 = vmatpush.bf16.msra.mxu0 0
          %4253 = vmatpush.bf16.msra.mxu0 0
          %4254 = vmatpush.bf16.msra.mxu0 0
          %4255 = vmatpush.bf16.msra.mxu0 0
          %4256 = vmatpush.bf16.msra.mxu0 %v4244
          %4257 = vmatpush.bf16.msra.mxu0 %v4243
          %4258 = vmatmul.bf16.gmra.mxu0 %v4248
          %v4259 = vpop.f32.mrf.mxu0
          %v4260 = vadd.f32 %v4233, %v4259
          %v4261 = vpop.f32.mrf.mxu0
          %4262 = vdwg.mxu0
          %4263 = vst [vmem:[%s762] sm:$0xf] %v4260
        $region104: #{vit_forward.1} parent=95 // pred_fallthru
          _
        %s4264 = sand.u32 %s517, 1
        %s4265 = scalar_lea.sflag [#allocation4], %s4264
        %s4266 = sand.u32 %s517, 1
        %s4267 = smul.addr %s4266, 4
        %s4268 = scalar_lea.vmem [#allocation3], %s4267
        // Predicated region
        $region105: #{vit_forward.1} parent=95 // pred_check
          %p4269 = pneg %p527
        $region106: #{vit_forward.1} parent=95 // pred_check_branch
          %4271 = sbr.rel (%p4269) target = $region108
        $region107: #{vit_forward.1} parent=95 // pred_region
          %4273 = vsyncadd %s4265, 0
          %s4274 = smul.addr %s37, 4
          %s4275 = scalar_lea.hbm %s19, %s4274
          %s4277 = sshll.u32 %s4268, 4
          %s4278 = int_to_ptr.vmem [resolvable:$true] %s4277
          %s4279 = sshll.u32 %s4275, 4
          %s4280 = int_to_ptr.hbm [resolvable:$true] %s4279
          %4282 = dma.vmem_to_hbm [thread:$0]  %s4278, 64, %s4280, %s4265
        $region108: #{vit_forward.1} parent=95 // pred_fallthru
          _
      $region96: #{vit_forward.1} parent=5 // pred_fallthru
        _
      %p4283 = scmp.le.s32.totalorder 2, %s28
      // Predicated region
      $region109: #{vit_forward.1} parent=5 // pred_check
        %p4284 = pneg %p4283
      $region110: #{vit_forward.1} parent=5 // pred_check_branch
        %4286 = sbr.rel (%p4284) target = $region112
      $region111: #{vit_forward.1} parent=5 // pred_region
        %s4287 = ssub.s32 %s28, 2
        // Predicated region
        $region113: #{vit_forward.1} parent=111 // pred_check
          %p4288 = pneg %p533
        $region114: #{vit_forward.1} parent=111 // pred_check_branch
          %4290 = sbr.rel (%p4288) target = $region116
        $region115: #{vit_forward.1} parent=111 // pred_region
          %s4291 = sand.u32 %s518, 1
          %s4292 = scalar_lea.sflag [#allocation4], %s4291
          %s4293 = sand.u32 %s518, 1
          %s4294 = smul.addr %s4293, 4
          %s4295 = scalar_lea.vmem [#allocation3], %s4294
          %4297 = dma.done %s4292, 64
        $region116: #{vit_forward.1} parent=111 // pred_fallthru
          _
      $region112: #{vit_forward.1} parent=5 // pred_fallthru
        _
    $region6: #{vit_forward.1} parent=1 // loop_footer
      %s32 = sadd.s32 1, %s28
    $region7: #{vit_forward.1} parent=1 // loop_footer_branch
      %27 = sbr.rel target = $region3
    $region8: #{vit_forward.1} parent=1 // loop_exit
      _
    %4298 = vsyncpa [#allocation4], 1
    %s4299 = scalar_lea.sflag [#allocation4], 1
    %4300 = vsyncpa %s4299, 1

</llo_original>
